<compile_context>
chip_gen: v5e
topology: v5e:2x2
jax: 0.10.0
libtpu: 0.0.40
codegen_flags: <defaults>
</compile_context>

<pallas_src>
import math

import jax
import jax.numpy as jnp
from jax import lax
from jax.experimental import pallas as pl
from jax.experimental.pallas import tpu as pltpu


def _round_up(x, m):
    return ((x + m - 1) // m) * m


def _pick_tile(dim, candidates):
    for c in candidates:
        if dim % c == 0:
            return c
    return dim  # unreachable for 256-aligned padded dims; kept as a safe fallback


def _lora_linear_kernel(x_ref, w_ref, bias_ref, a_ref, b_ref, o_ref,
                        acc_ref, mid_ref):
    """One (M, N, K) grid step of the fused LoRA linear.

    x_ref    : (tm, K_pad)     K-resident input row panel (re-DMA'd only when i changes)
    w_ref    : (tn, tk)        frozen base weight tile, PyTorch (out, in) layout
    bias_ref : (1, tn)         frozen base bias tile
    a_ref    : (r_pad, K_pad)  lora_a, fully resident (rank zero-padded to r_pad)
    b_ref    : (tn, r_pad)     lora_b tile, pre-scaled by lora_alpha / rank
    o_ref    : (tm, tn)        output tile
    acc_ref  : (tm, tn) f32    base-matmul accumulator (scratch), bias folded in at k==0
    mid_ref  : (tm, r_pad) f32 LoRA mid-product cache (scratch), reused over all N tiles
    """
    j = pl.program_id(1)
    k = pl.program_id(2)
    k_last = pl.num_programs(2) - 1
    tk = w_ref.shape[1]
    cdims = (((1,), (1,)), ((), ()))  # contract the last dim of both operands

    # Fold the bias into the accumulator init (saves a broadcast+add in finalize).
    @pl.when(k == 0)
    def _init_acc():
        acc_ref[...] = jnp.broadcast_to(
            bias_ref[...].astype(jnp.float32), acc_ref.shape)

    # LoRA mid-product x @ A^T: one full-K dot per i tile (x and A are K-resident),
    # cached in VMEM and reused by every N tile of this i tile.
    @pl.when((j == 0) & (k == 0))
    def _lora_mid():
        mid_ref[...] = lax.dot_general(x_ref[...], a_ref[...], cdims,
                                       preferred_element_type=jnp.float32)

    # Base branch: slice the k-th K chunk out of the resident x panel and contract
    # with W (tn, tk) over K, accumulating in f32.
    k_start = pl.multiple_of(k * tk, tk)
    x_k = x_ref[:, pl.ds(k_start, tk)]
    acc_ref[...] += lax.dot_general(x_k, w_ref[...], cdims,
                                    preferred_element_type=jnp.float32)

    # Finalize on the last K step: second LoRA matmul (scaling pre-folded into B).
    @pl.when(k == k_last)
    def _finalize():
        lora = lax.dot_general(mid_ref[...].astype(b_ref.dtype), b_ref[...],
                               cdims, preferred_element_type=jnp.float32)
        o_ref[...] = (acc_ref[...] + lora).astype(o_ref.dtype)


def prepare_lora_weights(w, b, lora_a, lora_b, *, lora_alpha, rank,
                         r_pad=128, align=256, weight_dtype=None):
    """One-time weight preparation (layout padding, LoRA-scaling fold, rank padding).

    w      : (out_features, in_features)  frozen base weight (PyTorch layout, kept as-is)
    b      : (out_features,)              frozen base bias
    lora_a : (rank, in_features)
    lora_b : (out_features, rank)

    N and K are zero-padded to `align` lanes so the kernel tiles always divide them.
    Set weight_dtype=jnp.bfloat16 for serving-style halved weight HBM traffic
    (accumulation stays f32 in the kernel); default keeps the original dtype.
    """
    scaling = lora_alpha / rank
    n, k = w.shape
    if weight_dtype is not None:
        w = w.astype(weight_dtype)
        b = b.astype(weight_dtype)
        lora_a = lora_a.astype(weight_dtype)
        lora_b = lora_b.astype(weight_dtype)

    r_pad = max(r_pad, _round_up(rank, 128))
    n_pad = _round_up(n, align)
    k_pad = _round_up(k, align)

    w_p = jnp.zeros((n_pad, k_pad), w.dtype).at[:n, :k].set(w)
    bias2d = jnp.zeros((1, n_pad), b.dtype).at[0, :n].set(b)
    a_p = jnp.zeros((r_pad, k_pad), lora_a.dtype).at[:rank, :k].set(lora_a)
    b_scaled = lora_b * jnp.asarray(scaling, lora_b.dtype)
    b_p = jnp.zeros((n_pad, r_pad), lora_b.dtype).at[:n, :rank].set(b_scaled)

    return dict(w=w_p, bias=bias2d, a=a_p, b=b_p,
                out_features=n, in_features=k)


def _estimate_vmem_bytes(tm, tn, tk, k_pad, r_pad, x_item, w_item, out_item):
    """Rough VMEM footprint: double-buffered inputs/outputs + f32 scratch."""
    x_panel = 2 * tm * k_pad * x_item
    w_buf = 2 * tn * tk * w_item
    bias_buf = 2 * tn * w_item
    a_buf = 2 * r_pad * k_pad * w_item
    b_buf = 2 * tn * r_pad * w_item
    o_buf = 2 * tm * tn * out_item
    scratch = tm * tn * 4 + tm * r_pad * 4
    return x_panel + w_buf + bias_buf + a_buf + b_buf + o_buf + scratch


def lora_linear(x, params, *, tm_max=512):
    """Fused LoRA linear forward on pre-prepared weights (see prepare_lora_weights).

    x : (..., in_features);  returns (..., out_features).
    """
    w, bias2d, a_pad, b_pad = params["w"], params["bias"], params["a"], params["b"]
    N, K = params["out_features"], params["in_features"]
    assert x.shape[-1] == K, "input/in_features mismatch"
    N_pad, K_pad = w.shape
    r_pad = a_pad.shape[0]

    orig_shape = x.shape
    x2d = x.reshape(-1, K)
    M = x2d.shape[0]
    if K_pad != K:  # zero columns contribute nothing to the dot products
        x2d = jnp.pad(x2d, ((0, 0), (0, K_pad - K)))

    x_item = x2d.dtype.itemsize
    w_item = w.dtype.itemsize
    # Round the M tile to the dtype sublane packing (8 f32 / 16 bf16 / 32 int8).
    sub = {4: 8, 2: 16, 1: 32}.get(x_item, 8)
    tm = min(tm_max, _round_up(M, sub))
    tn = _pick_tile(N_pad, (512, 256, 128))
    tk = _pick_tile(K_pad, (1024, 512, 256))

    # VMEM budget: shrink tk first (only affects accumulator RMW cadence), then the
    # M tile (x-panel residency), then the N tile -- keeping tm large preserves the
    # W-reuse win, which is what keeps the kernel off the HBM roofline.
    try:
        capacity = int(pltpu.get_tpu_info().vmem_capacity_bytes)
    except Exception:
        capacity = 64 << 20  # conservative (v7x per-core VMEM)
    budget = int(capacity * 0.7)
    while _estimate_vmem_bytes(tm, tn, tk, K_pad, r_pad,
                               x_item, w_item, x_item) > budget:
        if tk > 256:
            tk //= 2
        elif tm > 128:
            tm = max(128, _round_up(tm // 2, sub))
        elif tn > 128:
            tn //= 2
        else:
            break

    M_pad = _round_up(M, tm)
    if M_pad != M:
        x2d = jnp.pad(x2d, ((0, M_pad - M), (0, 0)))

    est = _estimate_vmem_bytes(tm, tn, tk, K_pad, r_pad, x_item, w_item, x_item)
    vmem_limit = int(min(capacity * 0.9, max(est * 1.5, 32 << 20)))

    grid = (M_pad // tm, N_pad // tn, K_pad // tk)

    out2d = pl.pallas_call(
        _lora_linear_kernel,
        out_shape=jax.ShapeDtypeStruct((M_pad, N_pad), x.dtype),
        grid_spec=pltpu.PrefetchScalarGridSpec(
            num_scalar_prefetch=0,
            grid=grid,
            in_specs=[
                # x row panel: K-resident, re-DMA'd only when the i tile changes.
                pl.BlockSpec((tm, K_pad), lambda i, j, k: (i, 0)),
                # W (out, in) tile: the only operand streamed per (j, k) step.
                pl.BlockSpec((tn, tk), lambda i, j, k: (j, k)),
                # bias tile.
                pl.BlockSpec((1, tn), lambda i, j, k: (0, j)),
                # lora_a: fully resident (constant block index -> one DMA per call).
                pl.BlockSpec((r_pad, K_pad), lambda i, j, k: (0, 0)),
                # lora_b (pre-scaled) tile.
                pl.BlockSpec((tn, r_pad), lambda i, j, k: (j, 0)),
            ],
            out_specs=pl.BlockSpec((tm, tn), lambda i, j, k: (i, j)),
            scratch_shapes=[
                pltpu.VMEM((tm, tn), jnp.float32),     # base accumulator (+ bias)
                pltpu.VMEM((tm, r_pad), jnp.float32),  # LoRA mid-product cache
            ],
        ),
        compiler_params=pltpu.CompilerParams(
            # N must be "arbitrary": the LoRA mid-product scratch computed at
            # j == 0 is reused by later N tiles, so j may not be core-sharded.
            dimension_semantics=("parallel", "arbitrary", "arbitrary"),
            vmem_limit_bytes=vmem_limit,
        ),
    )(x2d, w, bias2d, a_pad, b_pad)

    return out2d[:M, :N].reshape(*orig_shape[:-1], N)


def init_params(key, in_features, out_features, rank, dtype=jnp.float32):
    """Deterministic init matching LoraLinear.__init__ semantics."""
    k_w, k_b, k_a = jax.random.split(key, 3)

    # nn.Linear default init: U(-1/sqrt(in), 1/sqrt(in)) for weight and bias.
    bound = 1.0 / math.sqrt(in_features)
    w = jax.random.uniform(k_w, (out_features, in_features), dtype,
                           minval=-bound, maxval=bound)
    b = jax.random.uniform(k_b, (out_features,), dtype,
                           minval=-bound, maxval=bound)

    # kaiming_uniform_(a=sqrt(5)) on (rank, in_features): bound = 1/sqrt(fan_in).
    a_bound = 1.0 / math.sqrt(in_features)
    lora_a = jax.random.uniform(k_a, (rank, in_features), dtype,
                                minval=-a_bound, maxval=a_bound)
    # nn.init.zeros_ on lora_b.
    lora_b = jnp.zeros((out_features, rank), dtype)
    return w, b, lora_a, lora_b


if __name__ == "__main__":
    batch, seq = 2, 72                     # M = 144 -> exercises M rounding
    in_features, out_features = 768, 512   # -> tk = 256 (3 K steps), tn = 512 (1 N step)
    rank, lora_alpha = 8, 16
    scaling = lora_alpha / rank

    key = jax.random.PRNGKey(0)
    k_x, k_p, k_b2 = jax.random.split(key, 3)
    x = jax.random.normal(k_x, (batch, seq, in_features), jnp.float32)
    w, b, lora_a, lora_b = init_params(k_p, in_features, out_features, rank)

    def ref_forward(x, w, b, la, lb):
        x2d = x.reshape(-1, in_features)
        out = (x2d @ w.T + b) + ((x2d @ la.T) @ lb.T) * scaling
        return out.reshape(batch, seq, out_features)

    # Case 1: module-faithful init (lora_b = 0, LoRA branch contributes zero).
    params = prepare_lora_weights(w, b, lora_a, lora_b,
                                  lora_alpha=lora_alpha, rank=rank)
    out = jax.block_until_ready(lora_linear(x, params))
    ref = ref_forward(x, w, b, lora_a, lora_b)
    assert out.shape == (batch, seq, out_features)
    assert jnp.allclose(out, ref, atol=2e-4, rtol=2e-4), \
        float(jnp.max(jnp.abs(out - ref)))

    # Case 2: random lora_b so the fused LoRA branch is numerically exercised.
    lora_b2 = 0.05 * jax.random.normal(k_b2, (out_features, rank), jnp.float32)
    params2 = prepare_lora_weights(w, b, lora_a, lora_b2,
                                   lora_alpha=lora_alpha, rank=rank)
    out2 = jax.block_until_ready(lora_linear(x, params2))
    ref2 = ref_forward(x, w, b, lora_a, lora_b2)
    assert jnp.allclose(out2, ref2, atol=2e-4, rtol=2e-4), \
        float(jnp.max(jnp.abs(out2 - ref2)))

    print("KERNEL_OK")
</pallas_src>

<mosaic_0001>
module attributes {stable_mosaic.version = 11 : i64} {
  func.func @_lora_linear_kernel(%arg0: i32, %arg1: i32, %arg2: i32, %arg3: memref<144x768xf32, #tpu.memory_space<vmem>>, %arg4: memref<512x256xf32, #tpu.memory_space<vmem>>, %arg5: memref<1x512xf32, #tpu.memory_space<vmem>>, %arg6: memref<128x768xf32, #tpu.memory_space<vmem>>, %arg7: memref<512x128xf32, #tpu.memory_space<vmem>>, %arg8: memref<144x512xf32, #tpu.memory_space<vmem>>, %arg9: memref<144x512xf32, #tpu.memory_space<vmem>>, %arg10: memref<144x128xf32, #tpu.memory_space<vmem>>) attributes {dimension_semantics = [#tpu.dimension_semantics<parallel>, #tpu.dimension_semantics<arbitrary>, #tpu.dimension_semantics<arbitrary>], iteration_bounds = array<i64: 1, 1, 3>, scalar_prefetch = 0 : i64, scratch_operands = 2 : i64, tpu.core_type = #tpu.core_type<tc>, window_params = [{transform_indices = @transform_0, window_bounds = array<i64: 144, 768>}, {transform_indices = @transform_1, window_bounds = array<i64: 512, 256>}, {transform_indices = @transform_2, window_bounds = array<i64: 1, 512>}, {pipeline_mode = #tpu.pipeline_mode<synchronous>, transform_indices = @transform_3, window_bounds = array<i64: 128, 768>}, {transform_indices = @transform_4, window_bounds = array<i64: 512, 128>}, {transform_indices = @transform_5, window_bounds = array<i64: 144, 512>}]} {
    %c0_i32 = arith.constant 0 : i32
    %0 = arith.cmpi eq, %arg2, %c0_i32 : i32
    %1 = arith.extui %0 : i1 to i32
    %c0_i32_0 = arith.constant 0 : i32
    %2 = arith.cmpi ne, %1, %c0_i32_0 : i32
    scf.if %2 {
      %c0_11 = arith.constant 0 : index
      %c0_12 = arith.constant 0 : index
      %20 = vector.load %arg5[%c0_11, %c0_12] : memref<1x512xf32, #tpu.memory_space<vmem>>, vector<1x512xf32>
      %21 = vector.shape_cast %20 : vector<1x512xf32> to vector<1x512xf32>
      %22 = vector.broadcast %21 : vector<1x512xf32> to vector<144x512xf32>
      %c0_13 = arith.constant 0 : index
      %c0_14 = arith.constant 0 : index
      %23 = vector.load %arg9[%c0_13, %c0_14] : memref<144x512xf32, #tpu.memory_space<vmem>>, vector<144x512xf32>
      tpu.vector_store %arg9[%c0_13, %c0_14], %22 {strides = array<i32>} : memref<144x512xf32, #tpu.memory_space<vmem>>, vector<144x512xf32>,
    } else {
    }
    %c0_i32_1 = arith.constant 0 : i32
    %3 = arith.cmpi eq, %arg1, %c0_i32_1 : i32
    %c0_i32_2 = arith.constant 0 : i32
    %4 = arith.cmpi eq, %arg2, %c0_i32_2 : i32
    %5 = arith.andi %3, %4 : i1
    %6 = arith.extui %5 : i1 to i32
    %c0_i32_3 = arith.constant 0 : i32
    %7 = arith.cmpi ne, %6, %c0_i32_3 : i32
    scf.if %7 {
      %c0_11 = arith.constant 0 : index
      %c0_12 = arith.constant 0 : index
      %20 = vector.load %arg3[%c0_11, %c0_12] : memref<144x768xf32, #tpu.memory_space<vmem>>, vector<144x768xf32>
      %c0_13 = arith.constant 0 : index
      %c0_14 = arith.constant 0 : index
      %21 = vector.load %arg6[%c0_13, %c0_14] : memref<128x768xf32, #tpu.memory_space<vmem>>, vector<128x768xf32>
      %cst_15 = arith.constant dense<0.000000e+00> : vector<144x128xf32>
      %22 = tpu.matmul %20, %21, %cst_15 {dimension_numbers = #tpu.dot_dimension_numbers<[1], [1], [0], [0], [0, 0, 1, 0], [], []>} : vector<144x768xf32>, vector<128x768xf32>, vector<144x128xf32> -> vector<144x128xf32>
      %c0_16 = arith.constant 0 : index
      %c0_17 = arith.constant 0 : index
      %23 = vector.load %arg10[%c0_16, %c0_17] : memref<144x128xf32, #tpu.memory_space<vmem>>, vector<144x128xf32>
      tpu.vector_store %arg10[%c0_16, %c0_17], %22 {strides = array<i32>} : memref<144x128xf32, #tpu.memory_space<vmem>>, vector<144x128xf32>,
    } else {
    }
    %c256_i32 = arith.constant 256 : i32
    %8 = arith.muli %arg2, %c256_i32 : i32
    %9 = tpu.assume_multiple %8, 256 : i32
    %c0 = arith.constant 0 : index
    %10 = arith.index_cast %9 : i32 to index
    %11 = vector.load %arg3[%c0, %10] : memref<144x768xf32, #tpu.memory_space<vmem>>, vector<144x256xf32>
    %c0_4 = arith.constant 0 : index
    %c0_5 = arith.constant 0 : index
    %12 = vector.load %arg9[%c0_4, %c0_5] : memref<144x512xf32, #tpu.memory_space<vmem>>, vector<144x512xf32>
    %c0_6 = arith.constant 0 : index
    %c0_7 = arith.constant 0 : index
    %13 = vector.load %arg4[%c0_6, %c0_7] : memref<512x256xf32, #tpu.memory_space<vmem>>, vector<512x256xf32>
    %cst = arith.constant dense<0.000000e+00> : vector<144x512xf32>
    %14 = tpu.matmul %11, %13, %cst {dimension_numbers = #tpu.dot_dimension_numbers<[1], [1], [0], [0], [0, 0, 1, 0], [], []>} : vector<144x256xf32>, vector<512x256xf32>, vector<144x512xf32> -> vector<144x512xf32>
    %15 = arith.addf %12, %14 : vector<144x512xf32>
    %c0_8 = arith.constant 0 : index
    %c0_9 = arith.constant 0 : index
    %16 = vector.load %arg9[%c0_8, %c0_9] : memref<144x512xf32, #tpu.memory_space<vmem>>, vector<144x512xf32>
    tpu.vector_store %arg9[%c0_8, %c0_9], %15 {strides = array<i32>} : memref<144x512xf32, #tpu.memory_space<vmem>>, vector<144x512xf32>,
    %c2_i32 = arith.constant 2 : i32
    %17 = arith.cmpi eq, %arg2, %c2_i32 : i32
    %18 = arith.extui %17 : i1 to i32
    %c0_i32_10 = arith.constant 0 : i32
    %19 = arith.cmpi ne, %18, %c0_i32_10 : i32
    scf.if %19 {
      %c0_11 = arith.constant 0 : index
      %c0_12 = arith.constant 0 : index
      %20 = vector.load %arg10[%c0_11, %c0_12] : memref<144x128xf32, #tpu.memory_space<vmem>>, vector<144x128xf32>
      %c0_13 = arith.constant 0 : index
      %c0_14 = arith.constant 0 : index
      %21 = vector.load %arg7[%c0_13, %c0_14] : memref<512x128xf32, #tpu.memory_space<vmem>>, vector<512x128xf32>
      %cst_15 = arith.constant dense<0.000000e+00> : vector<144x512xf32>
      %22 = tpu.matmul %20, %21, %cst_15 {dimension_numbers = #tpu.dot_dimension_numbers<[1], [1], [0], [0], [0, 0, 1, 0], [], []>} : vector<144x128xf32>, vector<512x128xf32>, vector<144x512xf32> -> vector<144x512xf32>
      %c0_16 = arith.constant 0 : index
      %c0_17 = arith.constant 0 : index
      %23 = vector.load %arg9[%c0_16, %c0_17] : memref<144x512xf32, #tpu.memory_space<vmem>>, vector<144x512xf32>
      %24 = arith.addf %23, %22 : vector<144x512xf32>
      %c0_18 = arith.constant 0 : index
      %c0_19 = arith.constant 0 : index
      %25 = vector.load %arg8[%c0_18, %c0_19] : memref<144x512xf32, #tpu.memory_space<vmem>>, vector<144x512xf32>
      tpu.vector_store %arg8[%c0_18, %c0_19], %24 {strides = array<i32>} : memref<144x512xf32, #tpu.memory_space<vmem>>, vector<144x512xf32>,
    } else {
    }
    return
  }
  func.func @transform_0(%arg0: i32, %arg1: i32, %arg2: i32) -> (i32, i32) {
    %c0_i32 = arith.constant 0 : i32
    %c0_i32_0 = arith.constant 0 : i32
    return %arg0, %c0_i32 : i32, i32
  }
  func.func @transform_1(%arg0: i32, %arg1: i32, %arg2: i32) -> (i32, i32) {
    %c0_i32 = arith.constant 0 : i32
    return %arg1, %arg2 : i32, i32
  }
  func.func @transform_2(%arg0: i32, %arg1: i32, %arg2: i32) -> (i32, i32) {
    %c0_i32 = arith.constant 0 : i32
    %c0_i32_0 = arith.constant 0 : i32
    return %c0_i32, %arg1 : i32, i32
  }
  func.func @transform_3(%arg0: i32, %arg1: i32, %arg2: i32) -> (i32, i32) {
    %c0_i32 = arith.constant 0 : i32
    %c0_i32_0 = arith.constant 0 : i32
    %c0_i32_1 = arith.constant 0 : i32
    return %c0_i32, %c0_i32_0 : i32, i32
  }
  func.func @transform_4(%arg0: i32, %arg1: i32, %arg2: i32) -> (i32, i32) {
    %c0_i32 = arith.constant 0 : i32
    %c0_i32_0 = arith.constant 0 : i32
    return %arg1, %c0_i32 : i32, i32
  }
  func.func @transform_5(%arg0: i32, %arg1: i32, %arg2: i32) -> (i32, i32) {
    %c0_i32 = arith.constant 0 : i32
    return %arg0, %arg1 : i32, i32
  }
}

</mosaic_0001>

<llo_original>
// kernel: tpu_custom_call.1
$region0: #{tpu_custom_call.1}
  #allocation0 [shape = 'u32[]', space=smem, size = 0x4, offset = 0x4, fixed_abs, tag = 'smem constant byte address 0x4 - core index']
  #allocation1 [shape = 'u32[72,128]{1,0:T(1,128)}', space=vmem, size = 0x9000, scoped, tag = 'internal scratch']
  #allocation2 [shape = 'f32[144,512]{1,0:T(8,128)}', space=vmem, size = 0x48000, scoped, tag = 'scratch operand']
  #allocation3 [shape = 'f32[144,128]{1,0:T(8,128)}', space=vmem, size = 0x12000, scoped, tag = 'scratch operand']
  %s0 = inlined_call_operand.hbm [shape: f32[144,768], index: 0, kind: input, shape index: {}]
  %s1 = inlined_call_operand.hbm [shape: f32[512,768], index: 1, kind: input, shape index: {}]
  %s2 = inlined_call_operand.hbm [shape: f32[1,512], index: 2, kind: input, shape index: {}]
  %s3 = inlined_call_operand.hbm [shape: f32[128,768], index: 3, kind: input, shape index: {}]
  %s4 = inlined_call_operand.hbm [shape: f32[512,128], index: 4, kind: input, shape index: {}]
  %s5 = inlined_call_operand.hbm [shape: f32[144,512], index: 5, kind: output, shape index: {}]
  %s6 = sld [smem:[#allocation0]]
  $region85: #{tpu_custom_call.1} parent=0
    _
  %s8 = ssub.s32 1, %s6
  %s9 = scalar_select 0, %s8, %s6
  $region1: #{tpu_custom_call.1} parent=0
    #allocation4 [shape = 'u8[442368]{0}', space=vmem, size = 0x6c000, scoped, tag = 'input window, operand 0, single buffered']
    #allocation5 [shape = 's32[2]{0}', space=sflag, size = 0x8, scoped, tag = 'scoped memory for tpu_custom_call.1']
    #allocation6 [shape = 's32[2]{0}', space=sflag, size = 0x8, scoped, tag = 'scoped memory for tpu_custom_call.1']
    #allocation7 [shape = 'u8[1048576]{0}', space=vmem, size = 0x100000, scoped, tag = 'input window, operand 1']
    #allocation8 [shape = 's32[2]{0}', space=sflag, size = 0x8, scoped, tag = 'scoped memory for tpu_custom_call.1']
    #allocation9 [shape = 'u8[2048]{0}', space=vmem, size = 0x800, scoped, tag = 'input window, operand 2, single buffered']
    #allocation10 [shape = 'u8[393216]{0}', space=vmem, size = 0x60000, scoped, tag = 'input window, operand 3, single buffered']
    #allocation11 [shape = 's32[1]{0}', space=sflag, size = 0x4, scoped, tag = 'scoped memory for tpu_custom_call.1']
    #allocation12 [shape = 'u8[262144]{0}', space=vmem, size = 0x40000, scoped, tag = 'input window, operand 4, single buffered']
    #allocation13 [shape = 'u8[294912]{0}', space=vmem, size = 0x48000, scoped, tag = 'output window, operand 0, single buffered']
    %10 = vsyncpa [#allocation5], 0
    %11 = vsyncpa [#allocation8], 0
    %s12 = scalar_lea.sflag [#allocation8], 1
    %13 = vsyncpa %s12, 0
    %14 = vsyncpa [#allocation11], 0
    %15 = vsyncpa [#allocation6], 0
    loop: start=0, step=1, limit=5
    $region2: #{tpu_custom_call.1} parent=1 // loop_pre_header
      _
    $region3: #{tpu_custom_call.1} parent=1 // loop_header
      %s17 = sphi 0, %s21
      %p18 = scmp.ge.s32.totalorder %s17, 5
      %s24 = sphi 0, %s43
      %s25 = sphi 0, %s39
      %s26 = sphi 0, %s35
      %s27 = sphi 0, %s24
      %s28 = sphi 0, %s25
      %s29 = sphi 0, %s26
      %s30 = sphi 0, %s27
      %s31 = sphi 0, %s28
      %s32 = sphi 0, %s29
      %s46 = sphi 0, %s48
      %s49 = sphi 0, %s46
      %s50 = sphi 0, %s49
      %s66 = sphi 0, %s50
      %s74 = sphi 0, %s76
      %s77 = sphi 0, %s74
      %s78 = sphi 0, %s77
      %s94 = sphi 0, %s78
      %s100 = sphi 0, %s102
      %s103 = sphi 0, %s100
      %s104 = sphi 0, %s103
      %s120 = sphi 0, %s104
      %s124 = sphi 0, %s124
      %s126 = sphi 0, %s124
      %s127 = sphi 0, %s126
      %s141 = sphi 0, %s127
      %s147 = sphi 0, %s149
      %s150 = sphi 0, %s147
      %s151 = sphi 0, %s150
      %s167 = sphi 0, %s151
      %s175 = sphi 0, %s177
      %s178 = sphi 0, %s175
      %s179 = sphi 0, %s178
      %s195 = sphi 0, %s179
    $region4: #{tpu_custom_call.1} parent=1 // loop_header_branch
      %20 = sbr.rel (%p18) target = $region8
    $region5: #{tpu_custom_call.1} parent=1 // loop_body
      %s22 = ssub.s32 %s17, 1
      %s23 = ssub.s32 %s17, 2
      %s33 = sadd.s32 1, %s26
      %p34 = scmp.ge.s32.totalorder %s33, 3
      %s35 = scalar_select %p34, 0, %s33
      %s36 = sadd.s32 1, %s25
      %s37 = scalar_select %p34, %s36, %s25
      %p38 = scmp.ge.s32.totalorder %s37, 1
      %s39 = scalar_select %p38, 0, %s37
      %s40 = sadd.s32 1, %s24
      %s41 = scalar_select %p38, %s40, %s24
      %p42 = scmp.ge.s32.totalorder %s41, 1
      %s43 = scalar_select %p42, 0, %s41
      %s44 = ssub.s32 %s24, %s43
      %p45 = scmp.eq.s32.totalorder %s44, 0
      %s47 = sadd.s32 %s46, 1
      %s48 = scalar_select %p45, %s46, %s47
      %p51 = pneg %p45
      %p52 = scmp.eq.s32.totalorder %s17, 2
      %p53 = por %p51, %p52
      %p54 = scmp.ne.s32.totalorder %s46, %s49
      %p55 = scmp.eq.s32.totalorder %s17, 0
      %p56 = por %p54, %p55
      %p57 = scmp.ne.s32.totalorder %s46, %s49
      %p58 = scmp.eq.s32.totalorder %s22, 2
      %p59 = por %p57, %p58
      %p60 = scmp.ne.s32.totalorder %s49, %s50
      %p61 = scmp.eq.s32.totalorder %s22, 0
      %p62 = por %p60, %p61
      %p63 = scmp.ne.s32.totalorder %s49, %s50
      %p64 = scmp.eq.s32.totalorder %s23, 2
      %p65 = por %p63, %p64
      %p67 = scmp.ne.s32.totalorder %s50, %s66
      %p68 = scmp.eq.s32.totalorder %s23, 0
      %p69 = por %p67, %p68
      %s70 = ssub.s32 %s25, %s39
      %s71 = ssub.s32 %s26, %s35
      %s72 = sor.u32 %s70, %s71
      %p73 = scmp.eq.s32.totalorder %s72, 0
      %s75 = sadd.s32 %s74, 1
      %s76 = scalar_select %p73, %s74, %s75
      %p79 = pneg %p73
      %p80 = scmp.eq.s32.totalorder %s17, 2
      %p81 = por %p79, %p80
      %p82 = scmp.ne.s32.totalorder %s74, %s77
      %p83 = scmp.eq.s32.totalorder %s17, 0
      %p84 = por %p82, %p83
      %p85 = scmp.ne.s32.totalorder %s74, %s77
      %p86 = scmp.eq.s32.totalorder %s22, 2
      %p87 = por %p85, %p86
      %p88 = scmp.ne.s32.totalorder %s77, %s78
      %p89 = scmp.eq.s32.totalorder %s22, 0
      %p90 = por %p88, %p89
      %p91 = scmp.ne.s32.totalorder %s77, %s78
      %p92 = scmp.eq.s32.totalorder %s23, 2
      %p93 = por %p91, %p92
      %p95 = scmp.ne.s32.totalorder %s78, %s94
      %p96 = scmp.eq.s32.totalorder %s23, 0
      %p97 = por %p95, %p96
      %s98 = ssub.s32 %s25, %s39
      %p99 = scmp.eq.s32.totalorder %s98, 0
      %s101 = sadd.s32 %s100, 1
      %s102 = scalar_select %p99, %s100, %s101
      %p105 = pneg %p99
      %p106 = scmp.eq.s32.totalorder %s17, 2
      %p107 = por %p105, %p106
      %p108 = scmp.ne.s32.totalorder %s100, %s103
      %p109 = scmp.eq.s32.totalorder %s17, 0
      %p110 = por %p108, %p109
      %p111 = scmp.ne.s32.totalorder %s100, %s103
      %p112 = scmp.eq.s32.totalorder %s22, 2
      %p113 = por %p111, %p112
      %p114 = scmp.ne.s32.totalorder %s103, %s104
      %p115 = scmp.eq.s32.totalorder %s22, 0
      %p116 = por %p114, %p115
      %p117 = scmp.ne.s32.totalorder %s103, %s104
      %p118 = scmp.eq.s32.totalorder %s23, 2
      %p119 = por %p117, %p118
      %p121 = scmp.ne.s32.totalorder %s104, %s120
      %p122 = scmp.eq.s32.totalorder %s23, 0
      %p123 = por %p121, %p122
      %s125 = sadd.s32 %s124, 1
      %p128 = scmp.eq.s32.totalorder %s17, 2
      %p129 = scmp.ne.s32.totalorder %s124, %s126
      %p130 = scmp.eq.s32.totalorder %s17, 0
      %p131 = por %p129, %p130
      %p132 = scmp.ne.s32.totalorder %s124, %s126
      %p133 = scmp.eq.s32.totalorder %s22, 2
      %p134 = por %p132, %p133
      %p135 = scmp.ne.s32.totalorder %s126, %s127
      %p136 = scmp.eq.s32.totalorder %s22, 0
      %p137 = por %p135, %p136
      %p138 = scmp.ne.s32.totalorder %s126, %s127
      %p139 = scmp.eq.s32.totalorder %s23, 2
      %p140 = por %p138, %p139
      %p142 = scmp.ne.s32.totalorder %s127, %s141
      %p143 = scmp.eq.s32.totalorder %s23, 0
      %p144 = por %p142, %p143
      %s145 = ssub.s32 %s25, %s39
      %p146 = scmp.eq.s32.totalorder %s145, 0
      %s148 = sadd.s32 %s147, 1
      %s149 = scalar_select %p146, %s147, %s148
      %p152 = pneg %p146
      %p153 = scmp.eq.s32.totalorder %s17, 2
      %p154 = por %p152, %p153
      %p155 = scmp.ne.s32.totalorder %s147, %s150
      %p156 = scmp.eq.s32.totalorder %s17, 0
      %p157 = por %p155, %p156
      %p158 = scmp.ne.s32.totalorder %s147, %s150
      %p159 = scmp.eq.s32.totalorder %s22, 2
      %p160 = por %p158, %p159
      %p161 = scmp.ne.s32.totalorder %s150, %s151
      %p162 = scmp.eq.s32.totalorder %s22, 0
      %p163 = por %p161, %p162
      %p164 = scmp.ne.s32.totalorder %s150, %s151
      %p165 = scmp.eq.s32.totalorder %s23, 2
      %p166 = por %p164, %p165
      %p168 = scmp.ne.s32.totalorder %s151, %s167
      %p169 = scmp.eq.s32.totalorder %s23, 0
      %p170 = por %p168, %p169
      %s171 = ssub.s32 %s24, %s43
      %s172 = ssub.s32 %s25, %s39
      %s173 = sor.u32 %s171, %s172
      %p174 = scmp.eq.s32.totalorder %s173, 0
      %s176 = sadd.s32 %s175, 1
      %s177 = scalar_select %p174, %s175, %s176
      %p180 = pneg %p174
      %p181 = scmp.eq.s32.totalorder %s17, 2
      %p182 = por %p180, %p181
      %p183 = scmp.ne.s32.totalorder %s175, %s178
      %p184 = scmp.eq.s32.totalorder %s17, 0
      %p185 = por %p183, %p184
      %p186 = scmp.ne.s32.totalorder %s175, %s178
      %p187 = scmp.eq.s32.totalorder %s22, 2
      %p188 = por %p186, %p187
      %p189 = scmp.ne.s32.totalorder %s178, %s179
      %p190 = scmp.eq.s32.totalorder %s22, 0
      %p191 = por %p189, %p190
      %p192 = scmp.ne.s32.totalorder %s178, %s179
      %p193 = scmp.eq.s32.totalorder %s23, 2
      %p194 = por %p192, %p193
      %p196 = scmp.ne.s32.totalorder %s179, %s195
      %p197 = scmp.eq.s32.totalorder %s23, 0
      %p198 = por %p196, %p197
      %p199 = scmp.le.s32.totalorder 1, %s17
      %p200 = scmp.lt.s32.totalorder %s17, 4
      %p201 = pnand %p199, %p200
      %p202 = pneg %p201
      // Predicated region
      $region9: #{tpu_custom_call.1} parent=5 // pred_check
        _
      $region10: #{tpu_custom_call.1} parent=5 // pred_check_branch
        %204 = sbr.rel (%p201) target = $region12
      $region11: #{tpu_custom_call.1} parent=5 // pred_region
        %s205 = ssub.s32 %s17, 1
        // Predicated region
        $region13: #{tpu_custom_call.1} parent=11 // pred_check
          %p206 = pneg %p62
        $region14: #{tpu_custom_call.1} parent=11 // pred_check_branch
          %208 = sbr.rel (%p206) target = $region16
        $region15: #{tpu_custom_call.1} parent=11 // pred_region
          %s209 = smul.u32 18, %s27
          %211 = vsyncadd [#allocation5], 0
          %s212 = smul.addr %s209, 6
          %s213 = smul.addr %s212, 8
          %s214 = scalar_lea.hbm %s0, %s213
          %s215 = sshll.u32 %s214, 4
          %s216 = int_to_ptr.hbm [resolvable:$true] %s215
          %s217 = sshll.u32 [#allocation4], 4
          %s218 = int_to_ptr.vmem [resolvable:$true] %s217
          %223 = dma.hbm_to_vmem [thread:$0]  %s216, 13824, %s218, [#allocation5], 768, 768, 48
        $region16: #{tpu_custom_call.1} parent=11 // pred_fallthru
          _
        // Predicated region
        $region17: #{tpu_custom_call.1} parent=11 // pred_check
          %p224 = pneg %p116
        $region18: #{tpu_custom_call.1} parent=11 // pred_check_branch
          %226 = sbr.rel (%p224) target = $region20
        $region19: #{tpu_custom_call.1} parent=11 // pred_region
          %s227 = smul.u32 4, %s28
          %229 = vsyncadd [#allocation8], 0
          %s230 = scalar_lea.hbm %s2, %s227
          %s232 = sshll.u32 %s230, 4
          %s233 = int_to_ptr.hbm [resolvable:$true] %s232
          %s234 = sshll.u32 [#allocation9], 4
          %s235 = int_to_ptr.vmem [resolvable:$true] %s234
          %237 = dma.hbm_to_vmem [thread:$0]  %s233, 64, %s235, [#allocation8]
        $region20: #{tpu_custom_call.1} parent=11 // pred_fallthru
          _
        // Predicated region
        $region21: #{tpu_custom_call.1} parent=11 // pred_check
          %p238 = pneg %p137
        $region22: #{tpu_custom_call.1} parent=11 // pred_check_branch
          %240 = sbr.rel (%p238) target = $region24
        $region23: #{tpu_custom_call.1} parent=11 // pred_region
          %242 = vsyncadd [#allocation11], 0
          %s243 = sshll.u32 %s3, 4
          %s244 = int_to_ptr.hbm [resolvable:$true] %s243
          %s245 = sshll.u32 [#allocation10], 4
          %s246 = int_to_ptr.vmem [resolvable:$true] %s245
          %251 = dma.hbm_to_vmem [thread:$0]  %s244, 12288, %s246, [#allocation11], 768, 768, 48
        $region24: #{tpu_custom_call.1} parent=11 // pred_fallthru
          _
        // Predicated region
        $region25: #{tpu_custom_call.1} parent=11 // pred_check
          %p252 = pneg %p163
        $region26: #{tpu_custom_call.1} parent=11 // pred_check_branch
          %254 = sbr.rel (%p252) target = $region28
        $region27: #{tpu_custom_call.1} parent=11 // pred_region
          %s255 = smul.u32 64, %s28
          %257 = vsyncadd [#allocation11], 0
          %s258 = smul.addr %s255, 8
          %s259 = scalar_lea.hbm %s4, %s258
          %s260 = sshll.u32 %s259, 4
          %s261 = int_to_ptr.hbm [resolvable:$true] %s260
          %s262 = sshll.u32 [#allocation12], 4
          %s263 = int_to_ptr.vmem [resolvable:$true] %s262
          %268 = dma.hbm_to_vmem [thread:$0]  %s261, 8192, %s263, [#allocation11], 128, 128, 8
        $region28: #{tpu_custom_call.1} parent=11 // pred_fallthru
          _
      $region12: #{tpu_custom_call.1} parent=5 // pred_fallthru
        _
      %p269 = scmp.lt.s32.totalorder %s17, 3
      // Predicated region
      $region29: #{tpu_custom_call.1} parent=5 // pred_check
        %p270 = pneg %p269
      $region30: #{tpu_custom_call.1} parent=5 // pred_check_branch
        %272 = sbr.rel (%p270) target = $region32
      $region31: #{tpu_custom_call.1} parent=5 // pred_region
        // Predicated region
        $region33: #{tpu_custom_call.1} parent=31 // pred_check
          %p273 = pneg %p84
        $region34: #{tpu_custom_call.1} parent=31 // pred_check_branch
          %275 = sbr.rel (%p273) target = $region36
        $region35: #{tpu_custom_call.1} parent=31 // pred_region
          %s276 = sand.u32 %s17, 1
          %s277 = scalar_lea.sflag [#allocation8], %s276
          %s278 = sand.u32 %s74, 1
          %s279 = smul.addr %s278, 1024
          %s280 = scalar_lea.vmem [#allocation7], %s279
          %s281 = smul.u32 64, %s25
          %s282 = smul.u32 2, %s26
          %284 = vsyncadd %s277, 0
          %s285 = smul.addr %s281, 6
          %s286 = sadd.s32 %s282, %s285
          %s287 = smul.addr %s286, 8
          %s288 = scalar_lea.hbm %s1, %s287
          %s289 = sshll.u32 %s288, 4
          %s290 = int_to_ptr.hbm [resolvable:$true] %s289
          %s291 = sshll.u32 %s280, 4
          %s292 = int_to_ptr.vmem [resolvable:$true] %s291
          %297 = dma.hbm_to_vmem [thread:$0]  %s290, 16384, %s292, %s277, 768, 256, 16
        $region36: #{tpu_custom_call.1} parent=31 // pred_fallthru
          _
      $region32: #{tpu_custom_call.1} parent=5 // pred_fallthru
        _
      %p298 = scmp.le.s32.totalorder 1, %s17
      %p299 = scmp.lt.s32.totalorder %s17, 4
      %p300 = pnand %p298, %p299
      %p301 = pneg %p300
      // Predicated region
      $region37: #{tpu_custom_call.1} parent=5 // pred_check
        _
      $region38: #{tpu_custom_call.1} parent=5 // pred_check_branch
        %303 = sbr.rel (%p300) target = $region40
      $region39: #{tpu_custom_call.1} parent=5 // pred_region
        %s304 = ssub.s32 %s17, 1
        // Predicated region
        $region41: #{tpu_custom_call.1} parent=39 // pred_check
          %p305 = pneg %p62
        $region42: #{tpu_custom_call.1} parent=39 // pred_check_branch
          %307 = sbr.rel (%p305) target = $region44
        $region43: #{tpu_custom_call.1} parent=39 // pred_region
          %309 = dma.done [#allocation5], 13824
        $region44: #{tpu_custom_call.1} parent=39 // pred_fallthru
          _
        %s310 = sand.u32 %s22, 1
        %s311 = scalar_lea.sflag [#allocation8], %s310
        %s312 = sand.u32 %s77, 1
        %s313 = smul.addr %s312, 1024
        %s314 = scalar_lea.vmem [#allocation7], %s313
        // Predicated region
        $region45: #{tpu_custom_call.1} parent=39 // pred_check
          %p315 = pneg %p90
        $region46: #{tpu_custom_call.1} parent=39 // pred_check_branch
          %317 = sbr.rel (%p315) target = $region48
        $region47: #{tpu_custom_call.1} parent=39 // pred_region
          %319 = dma.done %s311, 16384
        $region48: #{tpu_custom_call.1} parent=39 // pred_fallthru
          _
        // Predicated region
        $region49: #{tpu_custom_call.1} parent=39 // pred_check
          %p320 = pneg %p116
        $region50: #{tpu_custom_call.1} parent=39 // pred_check_branch
          %322 = sbr.rel (%p320) target = $region52
        $region51: #{tpu_custom_call.1} parent=39 // pred_region
          %324 = dma.done [#allocation8], 64
        $region52: #{tpu_custom_call.1} parent=39 // pred_fallthru
          _
        // Predicated region
        $region53: #{tpu_custom_call.1} parent=39 // pred_check
          %p325 = pneg %p137
        $region54: #{tpu_custom_call.1} parent=39 // pred_check_branch
          %327 = sbr.rel (%p325) target = $region56
        $region55: #{tpu_custom_call.1} parent=39 // pred_region
          %329 = dma.done [#allocation11], 12288
        $region56: #{tpu_custom_call.1} parent=39 // pred_fallthru
          _
        // Predicated region
        $region57: #{tpu_custom_call.1} parent=39 // pred_check
          %p330 = pneg %p163
        $region58: #{tpu_custom_call.1} parent=39 // pred_check_branch
          %332 = sbr.rel (%p330) target = $region60
        $region59: #{tpu_custom_call.1} parent=39 // pred_region
          %334 = dma.done [#allocation11], 8192
        $region60: #{tpu_custom_call.1} parent=39 // pred_fallthru
          _
        %p335 = pneg %p62
        %p336 = pneg %p59
        %s337 = sand.u32 %s22, 1
        %s338 = scalar_lea.sflag [#allocation8], %s337
        %s339 = sand.u32 %s77, 1
        %s340 = smul.addr %s339, 1024
        %s341 = scalar_lea.vmem [#allocation7], %s340
        %p342 = pneg %p90
        %p343 = pneg %p87
        %p344 = pneg %p116
        %p345 = pneg %p113
        %p346 = pneg %p137
        %p347 = pneg %p134
        %p348 = pneg %p163
        %p349 = pneg %p160
        %p350 = pneg %p191
        %p351 = pneg %p188
        %s352 = smul.u32 18, %s27
        %s353 = smul.u32 64, %s28
        %s354 = smul.u32 2, %s29
        %s355 = smul.u32 4, %s28
        %s356 = smul.u32 64, %s28
        %s357 = smul.u32 18, %s27
        %s358 = smul.u32 4, %s28
        %p359 = scmp.eq.s32.totalorder %s29, 0
        // Predicated region
        $region61: #{tpu_custom_call.1} parent=39 // pred_check
          %p360 = pneg %p359
        $region62: #{tpu_custom_call.1} parent=39 // pred_check_branch
          %362 = sbr.rel (%p360) target = $region64
        $region63: #{tpu_custom_call.1} parent=39 // pred_region
          %v363 = vld [vmem:[#allocation9] sm:$0xf]
          %v365 = vperm.slane %v363, 0
          %v366 = vperm.slane %v363, 1
          %v367 = vperm.slane %v363, 2
          %v368 = vperm.slane %v363, 3
          %373 = vst [vmem:[#allocation2] sm:$0xff] %v365
          %374 = vst [vmem:[#allocation2 + $0x8] sm:$0xff] %v366
          %375 = vst [vmem:[#allocation2 + $0x10] sm:$0xff] %v367
          %376 = vst [vmem:[#allocation2 + $0x18] sm:$0xff] %v368
          %377 = vst [vmem:[#allocation2 + $0x20] sm:$0xff] %v365
          %378 = vst [vmem:[#allocation2 + $0x28] sm:$0xff] %v366
          %379 = vst [vmem:[#allocation2 + $0x30] sm:$0xff] %v367
          %380 = vst [vmem:[#allocation2 + $0x38] sm:$0xff] %v368
          %381 = vst [vmem:[#allocation2 + $0x40] sm:$0xff] %v365
          %382 = vst [vmem:[#allocation2 + $0x48] sm:$0xff] %v366
          %383 = vst [vmem:[#allocation2 + $0x50] sm:$0xff] %v367
          %384 = vst [vmem:[#allocation2 + $0x58] sm:$0xff] %v368
          %385 = vst [vmem:[#allocation2 + $0x60] sm:$0xff] %v365
          %386 = vst [vmem:[#allocation2 + $0x68] sm:$0xff] %v366
          %387 = vst [vmem:[#allocation2 + $0x70] sm:$0xff] %v367
          %388 = vst [vmem:[#allocation2 + $0x78] sm:$0xff] %v368
          %389 = vst [vmem:[#allocation2 + $0x80] sm:$0xff] %v365
          %390 = vst [vmem:[#allocation2 + $0x88] sm:$0xff] %v366
          %391 = vst [vmem:[#allocation2 + $0x90] sm:$0xff] %v367
          %392 = vst [vmem:[#allocation2 + $0x98] sm:$0xff] %v368
          %393 = vst [vmem:[#allocation2 + $0xa0] sm:$0xff] %v365
          %394 = vst [vmem:[#allocation2 + $0xa8] sm:$0xff] %v366
          %395 = vst [vmem:[#allocation2 + $0xb0] sm:$0xff] %v367
          %396 = vst [vmem:[#allocation2 + $0xb8] sm:$0xff] %v368
          %397 = vst [vmem:[#allocation2 + $0xc0] sm:$0xff] %v365
          %398 = vst [vmem:[#allocation2 + $0xc8] sm:$0xff] %v366
          %399 = vst [vmem:[#allocation2 + $0xd0] sm:$0xff] %v367
          %400 = vst [vmem:[#allocation2 + $0xd8] sm:$0xff] %v368
          %401 = vst [vmem:[#allocation2 + $0xe0] sm:$0xff] %v365
          %402 = vst [vmem:[#allocation2 + $0xe8] sm:$0xff] %v366
          %403 = vst [vmem:[#allocation2 + $0xf0] sm:$0xff] %v367
          %404 = vst [vmem:[#allocation2 + $0xf8] sm:$0xff] %v368
          %405 = vst [vmem:[#allocation2 + $0x100] sm:$0xff] %v365
          %406 = vst [vmem:[#allocation2 + $0x108] sm:$0xff] %v366
          %407 = vst [vmem:[#allocation2 + $0x110] sm:$0xff] %v367
          %408 = vst [vmem:[#allocation2 + $0x118] sm:$0xff] %v368
          %409 = vst [vmem:[#allocation2 + $0x120] sm:$0xff] %v365
          %410 = vst [vmem:[#allocation2 + $0x128] sm:$0xff] %v366
          %411 = vst [vmem:[#allocation2 + $0x130] sm:$0xff] %v367
          %412 = vst [vmem:[#allocation2 + $0x138] sm:$0xff] %v368
          %413 = vst [vmem:[#allocation2 + $0x140] sm:$0xff] %v365
          %414 = vst [vmem:[#allocation2 + $0x148] sm:$0xff] %v366
          %415 = vst [vmem:[#allocation2 + $0x150] sm:$0xff] %v367
          %416 = vst [vmem:[#allocation2 + $0x158] sm:$0xff] %v368
          %417 = vst [vmem:[#allocation2 + $0x160] sm:$0xff] %v365
          %418 = vst [vmem:[#allocation2 + $0x168] sm:$0xff] %v366
          %419 = vst [vmem:[#allocation2 + $0x170] sm:$0xff] %v367
          %420 = vst [vmem:[#allocation2 + $0x178] sm:$0xff] %v368
          %421 = vst [vmem:[#allocation2 + $0x180] sm:$0xff] %v365
          %422 = vst [vmem:[#allocation2 + $0x188] sm:$0xff] %v366
          %423 = vst [vmem:[#allocation2 + $0x190] sm:$0xff] %v367
          %424 = vst [vmem:[#allocation2 + $0x198] sm:$0xff] %v368
          %425 = vst [vmem:[#allocation2 + $0x1a0] sm:$0xff] %v365
          %426 = vst [vmem:[#allocation2 + $0x1a8] sm:$0xff] %v366
          %427 = vst [vmem:[#allocation2 + $0x1b0] sm:$0xff] %v367
          %428 = vst [vmem:[#allocation2 + $0x1b8] sm:$0xff] %v368
          %429 = vst [vmem:[#allocation2 + $0x1c0] sm:$0xff] %v365
          %430 = vst [vmem:[#allocation2 + $0x1c8] sm:$0xff] %v366
          %431 = vst [vmem:[#allocation2 + $0x1d0] sm:$0xff] %v367
          %432 = vst [vmem:[#allocation2 + $0x1d8] sm:$0xff] %v368
          %433 = vst [vmem:[#allocation2 + $0x1e0] sm:$0xff] %v365
          %434 = vst [vmem:[#allocation2 + $0x1e8] sm:$0xff] %v366
          %435 = vst [vmem:[#allocation2 + $0x1f0] sm:$0xff] %v367
          %436 = vst [vmem:[#allocation2 + $0x1f8] sm:$0xff] %v368
          %437 = vst [vmem:[#allocation2 + $0x200] sm:$0xff] %v365
          %438 = vst [vmem:[#allocation2 + $0x208] sm:$0xff] %v366
          %439 = vst [vmem:[#allocation2 + $0x210] sm:$0xff] %v367
          %440 = vst [vmem:[#allocation2 + $0x218] sm:$0xff] %v368
          %441 = vst [vmem:[#allocation2 + $0x220] sm:$0xff] %v365
          %442 = vst [vmem:[#allocation2 + $0x228] sm:$0xff] %v366
          %443 = vst [vmem:[#allocation2 + $0x230] sm:$0xff] %v367
          %444 = vst [vmem:[#allocation2 + $0x238] sm:$0xff] %v368
        $region64: #{tpu_custom_call.1} parent=39 // pred_fallthru
          _
        %p445 = scmp.eq.s32.totalorder %s28, 0
        %p446 = pnand %p445, %p359
        %p447 = pneg %p446
        // Predicated region
        $region65: #{tpu_custom_call.1} parent=39 // pred_check
          _
        $region66: #{tpu_custom_call.1} parent=39 // pred_check_branch
          %449 = sbr.rel (%p446) target = $region68
        $region67: #{tpu_custom_call.1} parent=39 // pred_region
          %v450 = vld [vmem:[#allocation4] sm:$0xff]
          %v451 = vld [vmem:[#allocation4 + $0x8] sm:$0xff]
          %v452 = vld [vmem:[#allocation4 + $0x10] sm:$0xff]
          %v453 = vld [vmem:[#allocation4 + $0x18] sm:$0xff]
          %v454 = vld [vmem:[#allocation4 + $0x20] sm:$0xff]
          %v455 = vld [vmem:[#allocation4 + $0x28] sm:$0xff]
          %v456 = vld [vmem:[#allocation4 + $0x30] sm:$0xff]
          %v457 = vld [vmem:[#allocation4 + $0x38] sm:$0xff]
          %v458 = vld [vmem:[#allocation4 + $0x40] sm:$0xff]
          %v459 = vld [vmem:[#allocation4 + $0x48] sm:$0xff]
          %v460 = vld [vmem:[#allocation4 + $0x50] sm:$0xff]
          %v461 = vld [vmem:[#allocation4 + $0x58] sm:$0xff]
          %v462 = vld [vmem:[#allocation4 + $0x60] sm:$0xff]
          %v463 = vld [vmem:[#allocation4 + $0x68] sm:$0xff]
          %v464 = vld [vmem:[#allocation4 + $0x70] sm:$0xff]
          %v465 = vld [vmem:[#allocation4 + $0x78] sm:$0xff]
          %v466 = vld [vmem:[#allocation4 + $0x80] sm:$0xff]
          %v467 = vld [vmem:[#allocation4 + $0x88] sm:$0xff]
          %v468 = vld [vmem:[#allocation4 + $0x90] sm:$0xff]
          %v469 = vld [vmem:[#allocation4 + $0x98] sm:$0xff]
          %v470 = vld [vmem:[#allocation4 + $0xa0] sm:$0xff]
          %v471 = vld [vmem:[#allocation4 + $0xa8] sm:$0xff]
          %v472 = vld [vmem:[#allocation4 + $0xb0] sm:$0xff]
          %v473 = vld [vmem:[#allocation4 + $0xb8] sm:$0xff]
          %v474 = vld [vmem:[#allocation4 + $0xc0] sm:$0xff]
          %v475 = vld [vmem:[#allocation4 + $0xc8] sm:$0xff]
          %v476 = vld [vmem:[#allocation4 + $0xd0] sm:$0xff]
          %v477 = vld [vmem:[#allocation4 + $0xd8] sm:$0xff]
          %v478 = vld [vmem:[#allocation4 + $0xe0] sm:$0xff]
          %v479 = vld [vmem:[#allocation4 + $0xe8] sm:$0xff]
          %v480 = vld [vmem:[#allocation4 + $0xf0] sm:$0xff]
          %v481 = vld [vmem:[#allocation4 + $0xf8] sm:$0xff]
          %v482 = vld [vmem:[#allocation4 + $0x100] sm:$0xff]
          %v483 = vld [vmem:[#allocation4 + $0x108] sm:$0xff]
          %v484 = vld [vmem:[#allocation4 + $0x110] sm:$0xff]
          %v485 = vld [vmem:[#allocation4 + $0x118] sm:$0xff]
          %v486 = vld [vmem:[#allocation4 + $0x120] sm:$0xff]
          %v487 = vld [vmem:[#allocation4 + $0x128] sm:$0xff]
          %v488 = vld [vmem:[#allocation4 + $0x130] sm:$0xff]
          %v489 = vld [vmem:[#allocation4 + $0x138] sm:$0xff]
          %v490 = vld [vmem:[#allocation4 + $0x140] sm:$0xff]
          %v491 = vld [vmem:[#allocation4 + $0x148] sm:$0xff]
          %v492 = vld [vmem:[#allocation4 + $0x150] sm:$0xff]
          %v493 = vld [vmem:[#allocation4 + $0x158] sm:$0xff]
          %v494 = vld [vmem:[#allocation4 + $0x160] sm:$0xff]
          %v495 = vld [vmem:[#allocation4 + $0x168] sm:$0xff]
          %v496 = vld [vmem:[#allocation4 + $0x170] sm:$0xff]
          %v497 = vld [vmem:[#allocation4 + $0x178] sm:$0xff]
          %v498 = vld [vmem:[#allocation4 + $0x180] sm:$0xff]
          %v499 = vld [vmem:[#allocation4 + $0x188] sm:$0xff]
          %v500 = vld [vmem:[#allocation4 + $0x190] sm:$0xff]
          %v501 = vld [vmem:[#allocation4 + $0x198] sm:$0xff]
          %v502 = vld [vmem:[#allocation4 + $0x1a0] sm:$0xff]
          %v503 = vld [vmem:[#allocation4 + $0x1a8] sm:$0xff]
          %v504 = vld [vmem:[#allocation4 + $0x1b0] sm:$0xff]
          %v505 = vld [vmem:[#allocation4 + $0x1b8] sm:$0xff]
          %v506 = vld [vmem:[#allocation4 + $0x1c0] sm:$0xff]
          %v507 = vld [vmem:[#allocation4 + $0x1c8] sm:$0xff]
          %v508 = vld [vmem:[#allocation4 + $0x1d0] sm:$0xff]
          %v509 = vld [vmem:[#allocation4 + $0x1d8] sm:$0xff]
          %v510 = vld [vmem:[#allocation4 + $0x1e0] sm:$0xff]
          %v511 = vld [vmem:[#allocation4 + $0x1e8] sm:$0xff]
          %v512 = vld [vmem:[#allocation4 + $0x1f0] sm:$0xff]
          %v513 = vld [vmem:[#allocation4 + $0x1f8] sm:$0xff]
          %v514 = vld [vmem:[#allocation4 + $0x200] sm:$0xff]
          %v515 = vld [vmem:[#allocation4 + $0x208] sm:$0xff]
          %v516 = vld [vmem:[#allocation4 + $0x210] sm:$0xff]
          %v517 = vld [vmem:[#allocation4 + $0x218] sm:$0xff]
          %v518 = vld [vmem:[#allocation4 + $0x220] sm:$0xff]
          %v519 = vld [vmem:[#allocation4 + $0x228] sm:$0xff]
          %v520 = vld [vmem:[#allocation4 + $0x230] sm:$0xff]
          %v521 = vld [vmem:[#allocation4 + $0x238] sm:$0xff]
          %v522 = vld [vmem:[#allocation4 + $0x240] sm:$0xff]
          %v523 = vld [vmem:[#allocation4 + $0x248] sm:$0xff]
          %v524 = vld [vmem:[#allocation4 + $0x250] sm:$0xff]
          %v525 = vld [vmem:[#allocation4 + $0x258] sm:$0xff]
          %v526 = vld [vmem:[#allocation4 + $0x260] sm:$0xff]
          %v527 = vld [vmem:[#allocation4 + $0x268] sm:$0xff]
          %v528 = vld [vmem:[#allocation4 + $0x270] sm:$0xff]
          %v529 = vld [vmem:[#allocation4 + $0x278] sm:$0xff]
          %v530 = vld [vmem:[#allocation4 + $0x280] sm:$0xff]
          %v531 = vld [vmem:[#allocation4 + $0x288] sm:$0xff]
          %v532 = vld [vmem:[#allocation4 + $0x290] sm:$0xff]
          %v533 = vld [vmem:[#allocation4 + $0x298] sm:$0xff]
          %v534 = vld [vmem:[#allocation4 + $0x2a0] sm:$0xff]
          %v535 = vld [vmem:[#allocation4 + $0x2a8] sm:$0xff]
          %v536 = vld [vmem:[#allocation4 + $0x2b0] sm:$0xff]
          %v537 = vld [vmem:[#allocation4 + $0x2b8] sm:$0xff]
          %v538 = vld [vmem:[#allocation4 + $0x2c0] sm:$0xff]
          %v539 = vld [vmem:[#allocation4 + $0x2c8] sm:$0xff]
          %v540 = vld [vmem:[#allocation4 + $0x2d0] sm:$0xff]
          %v541 = vld [vmem:[#allocation4 + $0x2d8] sm:$0xff]
          %v542 = vld [vmem:[#allocation4 + $0x2e0] sm:$0xff]
          %v543 = vld [vmem:[#allocation4 + $0x2e8] sm:$0xff]
          %v544 = vld [vmem:[#allocation4 + $0x2f0] sm:$0xff]
          %v545 = vld [vmem:[#allocation4 + $0x2f8] sm:$0xff]
          %v546 = vld [vmem:[#allocation4 + $0x300] sm:$0xff]
          %v547 = vld [vmem:[#allocation4 + $0x308] sm:$0xff]
          %v548 = vld [vmem:[#allocation4 + $0x310] sm:$0xff]
          %v549 = vld [vmem:[#allocation4 + $0x318] sm:$0xff]
          %v550 = vld [vmem:[#allocation4 + $0x320] sm:$0xff]
          %v551 = vld [vmem:[#allocation4 + $0x328] sm:$0xff]
          %v552 = vld [vmem:[#allocation4 + $0x330] sm:$0xff]
          %v553 = vld [vmem:[#allocation4 + $0x338] sm:$0xff]
          %v554 = vld [vmem:[#allocation4 + $0x340] sm:$0xff]
          %v555 = vld [vmem:[#allocation4 + $0x348] sm:$0xff]
          %v556 = vld [vmem:[#allocation4 + $0x350] sm:$0xff]
          %v557 = vld [vmem:[#allocation4 + $0x358] sm:$0xff]
          %v558 = vld [vmem:[#allocation10] sm:$0xff]
          %v559 = vld [vmem:[#allocation10 + $0x8] sm:$0xff]
          %v560 = vld [vmem:[#allocation10 + $0x10] sm:$0xff]
          %v561 = vld [vmem:[#allocation10 + $0x18] sm:$0xff]
          %v562 = vld [vmem:[#allocation10 + $0x20] sm:$0xff]
          %v563 = vld [vmem:[#allocation10 + $0x28] sm:$0xff]
          %v564 = vld [vmem:[#allocation10 + $0x30] sm:$0xff]
          %v565 = vld [vmem:[#allocation10 + $0x38] sm:$0xff]
          %v566 = vld [vmem:[#allocation10 + $0x40] sm:$0xff]
          %v567 = vld [vmem:[#allocation10 + $0x48] sm:$0xff]
          %v568 = vld [vmem:[#allocation10 + $0x50] sm:$0xff]
          %v569 = vld [vmem:[#allocation10 + $0x58] sm:$0xff]
          %v570 = vld [vmem:[#allocation10 + $0x60] sm:$0xff]
          %v571 = vld [vmem:[#allocation10 + $0x68] sm:$0xff]
          %v572 = vld [vmem:[#allocation10 + $0x70] sm:$0xff]
          %v573 = vld [vmem:[#allocation10 + $0x78] sm:$0xff]
          %v574 = vld [vmem:[#allocation10 + $0x80] sm:$0xff]
          %v575 = vld [vmem:[#allocation10 + $0x88] sm:$0xff]
          %v576 = vld [vmem:[#allocation10 + $0x90] sm:$0xff]
          %v577 = vld [vmem:[#allocation10 + $0x98] sm:$0xff]
          %v578 = vld [vmem:[#allocation10 + $0xa0] sm:$0xff]
          %v579 = vld [vmem:[#allocation10 + $0xa8] sm:$0xff]
          %v580 = vld [vmem:[#allocation10 + $0xb0] sm:$0xff]
          %v581 = vld [vmem:[#allocation10 + $0xb8] sm:$0xff]
          %v582 = vld [vmem:[#allocation10 + $0xc0] sm:$0xff]
          %v583 = vld [vmem:[#allocation10 + $0xc8] sm:$0xff]
          %v584 = vld [vmem:[#allocation10 + $0xd0] sm:$0xff]
          %v585 = vld [vmem:[#allocation10 + $0xd8] sm:$0xff]
          %v586 = vld [vmem:[#allocation10 + $0xe0] sm:$0xff]
          %v587 = vld [vmem:[#allocation10 + $0xe8] sm:$0xff]
          %v588 = vld [vmem:[#allocation10 + $0xf0] sm:$0xff]
          %v589 = vld [vmem:[#allocation10 + $0xf8] sm:$0xff]
          %v590 = vld [vmem:[#allocation10 + $0x100] sm:$0xff]
          %v591 = vld [vmem:[#allocation10 + $0x108] sm:$0xff]
          %v592 = vld [vmem:[#allocation10 + $0x110] sm:$0xff]
          %v593 = vld [vmem:[#allocation10 + $0x118] sm:$0xff]
          %v594 = vld [vmem:[#allocation10 + $0x120] sm:$0xff]
          %v595 = vld [vmem:[#allocation10 + $0x128] sm:$0xff]
          %v596 = vld [vmem:[#allocation10 + $0x130] sm:$0xff]
          %v597 = vld [vmem:[#allocation10 + $0x138] sm:$0xff]
          %v598 = vld [vmem:[#allocation10 + $0x140] sm:$0xff]
          %v599 = vld [vmem:[#allocation10 + $0x148] sm:$0xff]
          %v600 = vld [vmem:[#allocation10 + $0x150] sm:$0xff]
          %v601 = vld [vmem:[#allocation10 + $0x158] sm:$0xff]
          %v602 = vld [vmem:[#allocation10 + $0x160] sm:$0xff]
          %v603 = vld [vmem:[#allocation10 + $0x168] sm:$0xff]
          %v604 = vld [vmem:[#allocation10 + $0x170] sm:$0xff]
          %v605 = vld [vmem:[#allocation10 + $0x178] sm:$0xff]
          %v606 = vld [vmem:[#allocation10 + $0x180] sm:$0xff]
          %v607 = vld [vmem:[#allocation10 + $0x188] sm:$0xff]
          %v608 = vld [vmem:[#allocation10 + $0x190] sm:$0xff]
          %v609 = vld [vmem:[#allocation10 + $0x198] sm:$0xff]
          %v610 = vld [vmem:[#allocation10 + $0x1a0] sm:$0xff]
          %v611 = vld [vmem:[#allocation10 + $0x1a8] sm:$0xff]
          %v612 = vld [vmem:[#allocation10 + $0x1b0] sm:$0xff]
          %v613 = vld [vmem:[#allocation10 + $0x1b8] sm:$0xff]
          %v614 = vld [vmem:[#allocation10 + $0x1c0] sm:$0xff]
          %v615 = vld [vmem:[#allocation10 + $0x1c8] sm:$0xff]
          %v616 = vld [vmem:[#allocation10 + $0x1d0] sm:$0xff]
          %v617 = vld [vmem:[#allocation10 + $0x1d8] sm:$0xff]
          %v618 = vld [vmem:[#allocation10 + $0x1e0] sm:$0xff]
          %v619 = vld [vmem:[#allocation10 + $0x1e8] sm:$0xff]
          %v620 = vld [vmem:[#allocation10 + $0x1f0] sm:$0xff]
          %v621 = vld [vmem:[#allocation10 + $0x1f8] sm:$0xff]
          %v622 = vld [vmem:[#allocation10 + $0x200] sm:$0xff]
          %v623 = vld [vmem:[#allocation10 + $0x208] sm:$0xff]
          %v624 = vld [vmem:[#allocation10 + $0x210] sm:$0xff]
          %v625 = vld [vmem:[#allocation10 + $0x218] sm:$0xff]
          %v626 = vld [vmem:[#allocation10 + $0x220] sm:$0xff]
          %v627 = vld [vmem:[#allocation10 + $0x228] sm:$0xff]
          %v628 = vld [vmem:[#allocation10 + $0x230] sm:$0xff]
          %v629 = vld [vmem:[#allocation10 + $0x238] sm:$0xff]
          %v630 = vld [vmem:[#allocation10 + $0x240] sm:$0xff]
          %v631 = vld [vmem:[#allocation10 + $0x248] sm:$0xff]
          %v632 = vld [vmem:[#allocation10 + $0x250] sm:$0xff]
          %v633 = vld [vmem:[#allocation10 + $0x258] sm:$0xff]
          %v634 = vld [vmem:[#allocation10 + $0x260] sm:$0xff]
          %v635 = vld [vmem:[#allocation10 + $0x268] sm:$0xff]
          %v636 = vld [vmem:[#allocation10 + $0x270] sm:$0xff]
          %v637 = vld [vmem:[#allocation10 + $0x278] sm:$0xff]
          %v638 = vld [vmem:[#allocation10 + $0x280] sm:$0xff]
          %v639 = vld [vmem:[#allocation10 + $0x288] sm:$0xff]
          %v640 = vld [vmem:[#allocation10 + $0x290] sm:$0xff]
          %v641 = vld [vmem:[#allocation10 + $0x298] sm:$0xff]
          %v642 = vld [vmem:[#allocation10 + $0x2a0] sm:$0xff]
          %v643 = vld [vmem:[#allocation10 + $0x2a8] sm:$0xff]
          %v644 = vld [vmem:[#allocation10 + $0x2b0] sm:$0xff]
          %v645 = vld [vmem:[#allocation10 + $0x2b8] sm:$0xff]
          %v646 = vld [vmem:[#allocation10 + $0x2c0] sm:$0xff]
          %v647 = vld [vmem:[#allocation10 + $0x2c8] sm:$0xff]
          %v648 = vld [vmem:[#allocation10 + $0x2d0] sm:$0xff]
          %v649 = vld [vmem:[#allocation10 + $0x2d8] sm:$0xff]
          %v650 = vld [vmem:[#allocation10 + $0x2e0] sm:$0xff]
          %v651 = vld [vmem:[#allocation10 + $0x2e8] sm:$0xff]
          %v652 = vld [vmem:[#allocation10 + $0x2f0] sm:$0xff]
          %v653 = vld [vmem:[#allocation10 + $0x2f8] sm:$0xff]
          %654 = vmatpush.xpose.msra.mxu0 %v648
          %655 = vmatpush.xpose.msra.mxu0 %v642
          %656 = vmatpush.xpose.msra.mxu0 %v636
          %657 = vmatpush.xpose.msra.mxu0 %v630
          %658 = vmatpush.xpose.msra.mxu0 %v624
          %659 = vmatpush.xpose.msra.mxu0 %v618
          %660 = vmatpush.xpose.msra.mxu0 %v612
          %661 = vmatpush.xpose.msra.mxu0 %v606
          %662 = vmatpush.xpose.msra.mxu0 %v600
          %663 = vmatpush.xpose.msra.mxu0 %v594
          %664 = vmatpush.xpose.msra.mxu0 %v588
          %665 = vmatpush.xpose.msra.mxu0 %v582
          %666 = vmatpush.xpose.msra.mxu0 %v576
          %667 = vmatpush.xpose.msra.mxu0 %v570
          %668 = vmatpush.xpose.msra.mxu0 %v564
          %669 = vmatpush.xpose.msra.mxu0 %v558
          %670 = vmatmul.f32.gmra.mxu0 %v450
          %v671 = vpop.f32.mrf.mxu0
          %v672 = vadd.f32 0.0, %v671
          %673 = vmatmul.f32.gmra.mxu0 %v456
          %v674 = vpop.f32.mrf.mxu0
          %v675 = vadd.f32 0.0, %v674
          %676 = vmatmul.f32.gmra.mxu0 %v462
          %v677 = vpop.f32.mrf.mxu0
          %v678 = vadd.f32 0.0, %v677
          %679 = vmatmul.f32.gmra.mxu0 %v468
          %v680 = vpop.f32.mrf.mxu0
          %v681 = vadd.f32 0.0, %v680
          %682 = vmatmul.f32.gmra.mxu0 %v474
          %v683 = vpop.f32.mrf.mxu0
          %v684 = vadd.f32 0.0, %v683
          %685 = vmatmul.f32.gmra.mxu0 %v480
          %v686 = vpop.f32.mrf.mxu0
          %v687 = vadd.f32 0.0, %v686
          %688 = vmatmul.f32.gmra.mxu0 %v486
          %v689 = vpop.f32.mrf.mxu0
          %v690 = vadd.f32 0.0, %v689
          %691 = vmatmul.f32.gmra.mxu0 %v492
          %v692 = vpop.f32.mrf.mxu0
          %v693 = vadd.f32 0.0, %v692
          %694 = vmatmul.f32.gmra.mxu0 %v498
          %v695 = vpop.f32.mrf.mxu0
          %v696 = vadd.f32 0.0, %v695
          %697 = vmatmul.f32.gmra.mxu0 %v504
          %v698 = vpop.f32.mrf.mxu0
          %v699 = vadd.f32 0.0, %v698
          %700 = vmatmul.f32.gmra.mxu0 %v510
          %v701 = vpop.f32.mrf.mxu0
          %v702 = vadd.f32 0.0, %v701
          %703 = vmatmul.f32.gmra.mxu0 %v516
          %v704 = vpop.f32.mrf.mxu0
          %v705 = vadd.f32 0.0, %v704
          %706 = vmatmul.f32.gmra.mxu0 %v522
          %v707 = vpop.f32.mrf.mxu0
          %v708 = vadd.f32 0.0, %v707
          %709 = vmatmul.f32.gmra.mxu0 %v528
          %v710 = vpop.f32.mrf.mxu0
          %v711 = vadd.f32 0.0, %v710
          %712 = vmatmul.f32.gmra.mxu0 %v534
          %v713 = vpop.f32.mrf.mxu0
          %v714 = vadd.f32 0.0, %v713
          %715 = vmatmul.f32.gmra.mxu0 %v540
          %v716 = vpop.f32.mrf.mxu0
          %v717 = vadd.f32 0.0, %v716
          %718 = vmatmul.f32.gmra.mxu0 %v546
          %v719 = vpop.f32.mrf.mxu0
          %v720 = vadd.f32 0.0, %v719
          %721 = vmatmul.f32.gmra.mxu0 %v552
          %v722 = vpop.f32.mrf.mxu0
          %v723 = vadd.f32 0.0, %v722
          %724 = vdwg.mxu0
          %725 = vmatpush.xpose.msra.mxu0 %v649
          %726 = vmatpush.xpose.msra.mxu0 %v643
          %727 = vmatpush.xpose.msra.mxu0 %v637
          %728 = vmatpush.xpose.msra.mxu0 %v631
          %729 = vmatpush.xpose.msra.mxu0 %v625
          %730 = vmatpush.xpose.msra.mxu0 %v619
          %731 = vmatpush.xpose.msra.mxu0 %v613
          %732 = vmatpush.xpose.msra.mxu0 %v607
          %733 = vmatpush.xpose.msra.mxu0 %v601
          %734 = vmatpush.xpose.msra.mxu0 %v595
          %735 = vmatpush.xpose.msra.mxu0 %v589
          %736 = vmatpush.xpose.msra.mxu0 %v583
          %737 = vmatpush.xpose.msra.mxu0 %v577
          %738 = vmatpush.xpose.msra.mxu0 %v571
          %739 = vmatpush.xpose.msra.mxu0 %v565
          %740 = vmatpush.xpose.msra.mxu0 %v559
          %741 = vmatmul.f32.gmra.mxu0 %v451
          %v742 = vpop.f32.mrf.mxu0
          %v743 = vadd.f32 %v672, %v742
          %744 = vmatmul.f32.gmra.mxu0 %v457
          %v745 = vpop.f32.mrf.mxu0
          %v746 = vadd.f32 %v675, %v745
          %747 = vmatmul.f32.gmra.mxu0 %v463
          %v748 = vpop.f32.mrf.mxu0
          %v749 = vadd.f32 %v678, %v748
          %750 = vmatmul.f32.gmra.mxu0 %v469
          %v751 = vpop.f32.mrf.mxu0
          %v752 = vadd.f32 %v681, %v751
          %753 = vmatmul.f32.gmra.mxu0 %v475
          %v754 = vpop.f32.mrf.mxu0
          %v755 = vadd.f32 %v684, %v754
          %756 = vmatmul.f32.gmra.mxu0 %v481
          %v757 = vpop.f32.mrf.mxu0
          %v758 = vadd.f32 %v687, %v757
          %759 = vmatmul.f32.gmra.mxu0 %v487
          %v760 = vpop.f32.mrf.mxu0
          %v761 = vadd.f32 %v690, %v760
          %762 = vmatmul.f32.gmra.mxu0 %v493
          %v763 = vpop.f32.mrf.mxu0
          %v764 = vadd.f32 %v693, %v763
          %765 = vmatmul.f32.gmra.mxu0 %v499
          %v766 = vpop.f32.mrf.mxu0
          %v767 = vadd.f32 %v696, %v766
          %768 = vmatmul.f32.gmra.mxu0 %v505
          %v769 = vpop.f32.mrf.mxu0
          %v770 = vadd.f32 %v699, %v769
          %771 = vmatmul.f32.gmra.mxu0 %v511
          %v772 = vpop.f32.mrf.mxu0
          %v773 = vadd.f32 %v702, %v772
          %774 = vmatmul.f32.gmra.mxu0 %v517
          %v775 = vpop.f32.mrf.mxu0
          %v776 = vadd.f32 %v705, %v775
          %777 = vmatmul.f32.gmra.mxu0 %v523
          %v778 = vpop.f32.mrf.mxu0
          %v779 = vadd.f32 %v708, %v778
          %780 = vmatmul.f32.gmra.mxu0 %v529
          %v781 = vpop.f32.mrf.mxu0
          %v782 = vadd.f32 %v711, %v781
          %783 = vmatmul.f32.gmra.mxu0 %v535
          %v784 = vpop.f32.mrf.mxu0
          %v785 = vadd.f32 %v714, %v784
          %786 = vmatmul.f32.gmra.mxu0 %v541
          %v787 = vpop.f32.mrf.mxu0
          %v788 = vadd.f32 %v717, %v787
          %789 = vmatmul.f32.gmra.mxu0 %v547
          %v790 = vpop.f32.mrf.mxu0
          %v791 = vadd.f32 %v720, %v790
          %792 = vmatmul.f32.gmra.mxu0 %v553
          %v793 = vpop.f32.mrf.mxu0
          %v794 = vadd.f32 %v723, %v793
          %795 = vdwg.mxu0
          %796 = vmatpush.xpose.msra.mxu0 %v650
          %797 = vmatpush.xpose.msra.mxu0 %v644
          %798 = vmatpush.xpose.msra.mxu0 %v638
          %799 = vmatpush.xpose.msra.mxu0 %v632
          %800 = vmatpush.xpose.msra.mxu0 %v626
          %801 = vmatpush.xpose.msra.mxu0 %v620
          %802 = vmatpush.xpose.msra.mxu0 %v614
          %803 = vmatpush.xpose.msra.mxu0 %v608
          %804 = vmatpush.xpose.msra.mxu0 %v602
          %805 = vmatpush.xpose.msra.mxu0 %v596
          %806 = vmatpush.xpose.msra.mxu0 %v590
          %807 = vmatpush.xpose.msra.mxu0 %v584
          %808 = vmatpush.xpose.msra.mxu0 %v578
          %809 = vmatpush.xpose.msra.mxu0 %v572
          %810 = vmatpush.xpose.msra.mxu0 %v566
          %811 = vmatpush.xpose.msra.mxu0 %v560
          %812 = vmatmul.f32.gmra.mxu0 %v452
          %v813 = vpop.f32.mrf.mxu0
          %v814 = vadd.f32 %v743, %v813
          %815 = vmatmul.f32.gmra.mxu0 %v458
          %v816 = vpop.f32.mrf.mxu0
          %v817 = vadd.f32 %v746, %v816
          %818 = vmatmul.f32.gmra.mxu0 %v464
          %v819 = vpop.f32.mrf.mxu0
          %v820 = vadd.f32 %v749, %v819
          %821 = vmatmul.f32.gmra.mxu0 %v470
          %v822 = vpop.f32.mrf.mxu0
          %v823 = vadd.f32 %v752, %v822
          %824 = vmatmul.f32.gmra.mxu0 %v476
          %v825 = vpop.f32.mrf.mxu0
          %v826 = vadd.f32 %v755, %v825
          %827 = vmatmul.f32.gmra.mxu0 %v482
          %v828 = vpop.f32.mrf.mxu0
          %v829 = vadd.f32 %v758, %v828
          %830 = vmatmul.f32.gmra.mxu0 %v488
          %v831 = vpop.f32.mrf.mxu0
          %v832 = vadd.f32 %v761, %v831
          %833 = vmatmul.f32.gmra.mxu0 %v494
          %v834 = vpop.f32.mrf.mxu0
          %v835 = vadd.f32 %v764, %v834
          %836 = vmatmul.f32.gmra.mxu0 %v500
          %v837 = vpop.f32.mrf.mxu0
          %v838 = vadd.f32 %v767, %v837
          %839 = vmatmul.f32.gmra.mxu0 %v506
          %v840 = vpop.f32.mrf.mxu0
          %v841 = vadd.f32 %v770, %v840
          %842 = vmatmul.f32.gmra.mxu0 %v512
          %v843 = vpop.f32.mrf.mxu0
          %v844 = vadd.f32 %v773, %v843
          %845 = vmatmul.f32.gmra.mxu0 %v518
          %v846 = vpop.f32.mrf.mxu0
          %v847 = vadd.f32 %v776, %v846
          %848 = vmatmul.f32.gmra.mxu0 %v524
          %v849 = vpop.f32.mrf.mxu0
          %v850 = vadd.f32 %v779, %v849
          %851 = vmatmul.f32.gmra.mxu0 %v530
          %v852 = vpop.f32.mrf.mxu0
          %v853 = vadd.f32 %v782, %v852
          %854 = vmatmul.f32.gmra.mxu0 %v536
          %v855 = vpop.f32.mrf.mxu0
          %v856 = vadd.f32 %v785, %v855
          %857 = vmatmul.f32.gmra.mxu0 %v542
          %v858 = vpop.f32.mrf.mxu0
          %v859 = vadd.f32 %v788, %v858
          %860 = vmatmul.f32.gmra.mxu0 %v548
          %v861 = vpop.f32.mrf.mxu0
          %v862 = vadd.f32 %v791, %v861
          %863 = vmatmul.f32.gmra.mxu0 %v554
          %v864 = vpop.f32.mrf.mxu0
          %v865 = vadd.f32 %v794, %v864
          %866 = vdwg.mxu0
          %867 = vmatpush.xpose.msra.mxu0 %v651
          %868 = vmatpush.xpose.msra.mxu0 %v645
          %869 = vmatpush.xpose.msra.mxu0 %v639
          %870 = vmatpush.xpose.msra.mxu0 %v633
          %871 = vmatpush.xpose.msra.mxu0 %v627
          %872 = vmatpush.xpose.msra.mxu0 %v621
          %873 = vmatpush.xpose.msra.mxu0 %v615
          %874 = vmatpush.xpose.msra.mxu0 %v609
          %875 = vmatpush.xpose.msra.mxu0 %v603
          %876 = vmatpush.xpose.msra.mxu0 %v597
          %877 = vmatpush.xpose.msra.mxu0 %v591
          %878 = vmatpush.xpose.msra.mxu0 %v585
          %879 = vmatpush.xpose.msra.mxu0 %v579
          %880 = vmatpush.xpose.msra.mxu0 %v573
          %881 = vmatpush.xpose.msra.mxu0 %v567
          %882 = vmatpush.xpose.msra.mxu0 %v561
          %883 = vmatmul.f32.gmra.mxu0 %v453
          %v884 = vpop.f32.mrf.mxu0
          %v885 = vadd.f32 %v814, %v884
          %886 = vmatmul.f32.gmra.mxu0 %v459
          %v887 = vpop.f32.mrf.mxu0
          %v888 = vadd.f32 %v817, %v887
          %889 = vmatmul.f32.gmra.mxu0 %v465
          %v890 = vpop.f32.mrf.mxu0
          %v891 = vadd.f32 %v820, %v890
          %892 = vmatmul.f32.gmra.mxu0 %v471
          %v893 = vpop.f32.mrf.mxu0
          %v894 = vadd.f32 %v823, %v893
          %895 = vmatmul.f32.gmra.mxu0 %v477
          %v896 = vpop.f32.mrf.mxu0
          %v897 = vadd.f32 %v826, %v896
          %898 = vmatmul.f32.gmra.mxu0 %v483
          %v899 = vpop.f32.mrf.mxu0
          %v900 = vadd.f32 %v829, %v899
          %901 = vmatmul.f32.gmra.mxu0 %v489
          %v902 = vpop.f32.mrf.mxu0
          %v903 = vadd.f32 %v832, %v902
          %904 = vmatmul.f32.gmra.mxu0 %v495
          %v905 = vpop.f32.mrf.mxu0
          %v906 = vadd.f32 %v835, %v905
          %907 = vmatmul.f32.gmra.mxu0 %v501
          %v908 = vpop.f32.mrf.mxu0
          %v909 = vadd.f32 %v838, %v908
          %910 = vmatmul.f32.gmra.mxu0 %v507
          %v911 = vpop.f32.mrf.mxu0
          %v912 = vadd.f32 %v841, %v911
          %913 = vmatmul.f32.gmra.mxu0 %v513
          %v914 = vpop.f32.mrf.mxu0
          %v915 = vadd.f32 %v844, %v914
          %916 = vmatmul.f32.gmra.mxu0 %v519
          %v917 = vpop.f32.mrf.mxu0
          %v918 = vadd.f32 %v847, %v917
          %919 = vmatmul.f32.gmra.mxu0 %v525
          %v920 = vpop.f32.mrf.mxu0
          %v921 = vadd.f32 %v850, %v920
          %922 = vmatmul.f32.gmra.mxu0 %v531
          %v923 = vpop.f32.mrf.mxu0
          %v924 = vadd.f32 %v853, %v923
          %925 = vmatmul.f32.gmra.mxu0 %v537
          %v926 = vpop.f32.mrf.mxu0
          %v927 = vadd.f32 %v856, %v926
          %928 = vmatmul.f32.gmra.mxu0 %v543
          %v929 = vpop.f32.mrf.mxu0
          %v930 = vadd.f32 %v859, %v929
          %931 = vmatmul.f32.gmra.mxu0 %v549
          %v932 = vpop.f32.mrf.mxu0
          %v933 = vadd.f32 %v862, %v932
          %934 = vmatmul.f32.gmra.mxu0 %v555
          %v935 = vpop.f32.mrf.mxu0
          %v936 = vadd.f32 %v865, %v935
          %937 = vdwg.mxu0
          %938 = vmatpush.xpose.msra.mxu0 %v652
          %939 = vmatpush.xpose.msra.mxu0 %v646
          %940 = vmatpush.xpose.msra.mxu0 %v640
          %941 = vmatpush.xpose.msra.mxu0 %v634
          %942 = vmatpush.xpose.msra.mxu0 %v628
          %943 = vmatpush.xpose.msra.mxu0 %v622
          %944 = vmatpush.xpose.msra.mxu0 %v616
          %945 = vmatpush.xpose.msra.mxu0 %v610
          %946 = vmatpush.xpose.msra.mxu0 %v604
          %947 = vmatpush.xpose.msra.mxu0 %v598
          %948 = vmatpush.xpose.msra.mxu0 %v592
          %949 = vmatpush.xpose.msra.mxu0 %v586
          %950 = vmatpush.xpose.msra.mxu0 %v580
          %951 = vmatpush.xpose.msra.mxu0 %v574
          %952 = vmatpush.xpose.msra.mxu0 %v568
          %953 = vmatpush.xpose.msra.mxu0 %v562
          %954 = vmatmul.f32.gmra.mxu0 %v454
          %v955 = vpop.f32.mrf.mxu0
          %v956 = vadd.f32 %v885, %v955
          %957 = vmatmul.f32.gmra.mxu0 %v460
          %v958 = vpop.f32.mrf.mxu0
          %v959 = vadd.f32 %v888, %v958
          %960 = vmatmul.f32.gmra.mxu0 %v466
          %v961 = vpop.f32.mrf.mxu0
          %v962 = vadd.f32 %v891, %v961
          %963 = vmatmul.f32.gmra.mxu0 %v472
          %v964 = vpop.f32.mrf.mxu0
          %v965 = vadd.f32 %v894, %v964
          %966 = vmatmul.f32.gmra.mxu0 %v478
          %v967 = vpop.f32.mrf.mxu0
          %v968 = vadd.f32 %v897, %v967
          %969 = vmatmul.f32.gmra.mxu0 %v484
          %v970 = vpop.f32.mrf.mxu0
          %v971 = vadd.f32 %v900, %v970
          %972 = vmatmul.f32.gmra.mxu0 %v490
          %v973 = vpop.f32.mrf.mxu0
          %v974 = vadd.f32 %v903, %v973
          %975 = vmatmul.f32.gmra.mxu0 %v496
          %v976 = vpop.f32.mrf.mxu0
          %v977 = vadd.f32 %v906, %v976
          %978 = vmatmul.f32.gmra.mxu0 %v502
          %v979 = vpop.f32.mrf.mxu0
          %v980 = vadd.f32 %v909, %v979
          %981 = vmatmul.f32.gmra.mxu0 %v508
          %v982 = vpop.f32.mrf.mxu0
          %v983 = vadd.f32 %v912, %v982
          %984 = vmatmul.f32.gmra.mxu0 %v514
          %v985 = vpop.f32.mrf.mxu0
          %v986 = vadd.f32 %v915, %v985
          %987 = vmatmul.f32.gmra.mxu0 %v520
          %v988 = vpop.f32.mrf.mxu0
          %v989 = vadd.f32 %v918, %v988
          %990 = vmatmul.f32.gmra.mxu0 %v526
          %v991 = vpop.f32.mrf.mxu0
          %v992 = vadd.f32 %v921, %v991
          %993 = vmatmul.f32.gmra.mxu0 %v532
          %v994 = vpop.f32.mrf.mxu0
          %v995 = vadd.f32 %v924, %v994
          %996 = vmatmul.f32.gmra.mxu0 %v538
          %v997 = vpop.f32.mrf.mxu0
          %v998 = vadd.f32 %v927, %v997
          %999 = vmatmul.f32.gmra.mxu0 %v544
          %v1000 = vpop.f32.mrf.mxu0
          %v1001 = vadd.f32 %v930, %v1000
          %1002 = vmatmul.f32.gmra.mxu0 %v550
          %v1003 = vpop.f32.mrf.mxu0
          %v1004 = vadd.f32 %v933, %v1003
          %1005 = vmatmul.f32.gmra.mxu0 %v556
          %v1006 = vpop.f32.mrf.mxu0
          %v1007 = vadd.f32 %v936, %v1006
          %1008 = vdwg.mxu0
          %1009 = vmatpush.xpose.msra.mxu0 %v653
          %1010 = vmatpush.xpose.msra.mxu0 %v647
          %1011 = vmatpush.xpose.msra.mxu0 %v641
          %1012 = vmatpush.xpose.msra.mxu0 %v635
          %1013 = vmatpush.xpose.msra.mxu0 %v629
          %1014 = vmatpush.xpose.msra.mxu0 %v623
          %1015 = vmatpush.xpose.msra.mxu0 %v617
          %1016 = vmatpush.xpose.msra.mxu0 %v611
          %1017 = vmatpush.xpose.msra.mxu0 %v605
          %1018 = vmatpush.xpose.msra.mxu0 %v599
          %1019 = vmatpush.xpose.msra.mxu0 %v593
          %1020 = vmatpush.xpose.msra.mxu0 %v587
          %1021 = vmatpush.xpose.msra.mxu0 %v581
          %1022 = vmatpush.xpose.msra.mxu0 %v575
          %1023 = vmatpush.xpose.msra.mxu0 %v569
          %1024 = vmatpush.xpose.msra.mxu0 %v563
          %1025 = vmatmul.f32.gmra.mxu0 %v455
          %v1026 = vpop.f32.mrf.mxu0
          %v1027 = vadd.f32 %v956, %v1026
          %1028 = vmatmul.f32.gmra.mxu0 %v461
          %v1029 = vpop.f32.mrf.mxu0
          %v1030 = vadd.f32 %v959, %v1029
          %1031 = vmatmul.f32.gmra.mxu0 %v467
          %v1032 = vpop.f32.mrf.mxu0
          %v1033 = vadd.f32 %v962, %v1032
          %1034 = vmatmul.f32.gmra.mxu0 %v473
          %v1035 = vpop.f32.mrf.mxu0
          %v1036 = vadd.f32 %v965, %v1035
          %1037 = vmatmul.f32.gmra.mxu0 %v479
          %v1038 = vpop.f32.mrf.mxu0
          %v1039 = vadd.f32 %v968, %v1038
          %1040 = vmatmul.f32.gmra.mxu0 %v485
          %v1041 = vpop.f32.mrf.mxu0
          %v1042 = vadd.f32 %v971, %v1041
          %1043 = vmatmul.f32.gmra.mxu0 %v491
          %v1044 = vpop.f32.mrf.mxu0
          %v1045 = vadd.f32 %v974, %v1044
          %1046 = vmatmul.f32.gmra.mxu0 %v497
          %v1047 = vpop.f32.mrf.mxu0
          %v1048 = vadd.f32 %v977, %v1047
          %1049 = vmatmul.f32.gmra.mxu0 %v503
          %v1050 = vpop.f32.mrf.mxu0
          %v1051 = vadd.f32 %v980, %v1050
          %1052 = vmatmul.f32.gmra.mxu0 %v509
          %v1053 = vpop.f32.mrf.mxu0
          %v1054 = vadd.f32 %v983, %v1053
          %1055 = vmatmul.f32.gmra.mxu0 %v515
          %v1056 = vpop.f32.mrf.mxu0
          %v1057 = vadd.f32 %v986, %v1056
          %1058 = vmatmul.f32.gmra.mxu0 %v521
          %v1059 = vpop.f32.mrf.mxu0
          %v1060 = vadd.f32 %v989, %v1059
          %1061 = vmatmul.f32.gmra.mxu0 %v527
          %v1062 = vpop.f32.mrf.mxu0
          %v1063 = vadd.f32 %v992, %v1062
          %1064 = vmatmul.f32.gmra.mxu0 %v533
          %v1065 = vpop.f32.mrf.mxu0
          %v1066 = vadd.f32 %v995, %v1065
          %1067 = vmatmul.f32.gmra.mxu0 %v539
          %v1068 = vpop.f32.mrf.mxu0
          %v1069 = vadd.f32 %v998, %v1068
          %1070 = vmatmul.f32.gmra.mxu0 %v545
          %v1071 = vpop.f32.mrf.mxu0
          %v1072 = vadd.f32 %v1001, %v1071
          %1073 = vmatmul.f32.gmra.mxu0 %v551
          %v1074 = vpop.f32.mrf.mxu0
          %v1075 = vadd.f32 %v1004, %v1074
          %1076 = vmatmul.f32.gmra.mxu0 %v557
          %v1077 = vpop.f32.mrf.mxu0
          %v1078 = vadd.f32 %v1007, %v1077
          %1079 = vdwg.mxu0
          %1080 = vst [vmem:[#allocation3] sm:$0xff] %v1027
          %1081 = vst [vmem:[#allocation3 + $0x8] sm:$0xff] %v1030
          %1082 = vst [vmem:[#allocation3 + $0x10] sm:$0xff] %v1033
          %1083 = vst [vmem:[#allocation3 + $0x18] sm:$0xff] %v1036
          %1084 = vst [vmem:[#allocation3 + $0x20] sm:$0xff] %v1039
          %1085 = vst [vmem:[#allocation3 + $0x28] sm:$0xff] %v1042
          %1086 = vst [vmem:[#allocation3 + $0x30] sm:$0xff] %v1045
          %1087 = vst [vmem:[#allocation3 + $0x38] sm:$0xff] %v1048
          %1088 = vst [vmem:[#allocation3 + $0x40] sm:$0xff] %v1051
          %1089 = vst [vmem:[#allocation3 + $0x48] sm:$0xff] %v1054
          %1090 = vst [vmem:[#allocation3 + $0x50] sm:$0xff] %v1057
          %1091 = vst [vmem:[#allocation3 + $0x58] sm:$0xff] %v1060
          %1092 = vst [vmem:[#allocation3 + $0x60] sm:$0xff] %v1063
          %1093 = vst [vmem:[#allocation3 + $0x68] sm:$0xff] %v1066
          %1094 = vst [vmem:[#allocation3 + $0x70] sm:$0xff] %v1069
          %1095 = vst [vmem:[#allocation3 + $0x78] sm:$0xff] %v1072
          %1096 = vst [vmem:[#allocation3 + $0x80] sm:$0xff] %v1075
          %1097 = vst [vmem:[#allocation3 + $0x88] sm:$0xff] %v1078
        $region68: #{tpu_custom_call.1} parent=39 // pred_fallthru
          _
        %s1098 = smul.u32 %s29, 256
        %s1099 = sshra.s32 %s1098, 7
        %s1100 = sand.u32 %s1098, 127
        %s1101 = smul.addr %s1099, 8
        %s1102 = scalar_lea.vmem [#allocation4], %s1101
        %v1103 = vld [vmem:[%s1102] sm:$0xff]
        %v1104 = vld [vmem:[%s1102 + $0x8] sm:$0xff]
        %v1105 = vld [vmem:[%s1102 + $0x30] sm:$0xff]
        %v1106 = vld [vmem:[%s1102 + $0x38] sm:$0xff]
        %v1107 = vld [vmem:[%s1102 + $0x60] sm:$0xff]
        %v1108 = vld [vmem:[%s1102 + $0x68] sm:$0xff]
        %v1109 = vld [vmem:[%s1102 + $0x90] sm:$0xff]
        %v1110 = vld [vmem:[%s1102 + $0x98] sm:$0xff]
        %v1111 = vld [vmem:[%s1102 + $0xc0] sm:$0xff]
        %v1112 = vld [vmem:[%s1102 + $0xc8] sm:$0xff]
        %v1113 = vld [vmem:[%s1102 + $0xf0] sm:$0xff]
        %v1114 = vld [vmem:[%s1102 + $0xf8] sm:$0xff]
        %v1115 = vld [vmem:[%s1102 + $0x120] sm:$0xff]
        %v1116 = vld [vmem:[%s1102 + $0x128] sm:$0xff]
        %v1117 = vld [vmem:[%s1102 + $0x150] sm:$0xff]
        %v1118 = vld [vmem:[%s1102 + $0x158] sm:$0xff]
        %v1119 = vld [vmem:[%s1102 + $0x180] sm:$0xff]
        %v1120 = vld [vmem:[%s1102 + $0x188] sm:$0xff]
        %v1121 = vld [vmem:[%s1102 + $0x1b0] sm:$0xff]
        %v1122 = vld [vmem:[%s1102 + $0x1b8] sm:$0xff]
        %v1123 = vld [vmem:[%s1102 + $0x1e0] sm:$0xff]
        %v1124 = vld [vmem:[%s1102 + $0x1e8] sm:$0xff]
        %v1125 = vld [vmem:[%s1102 + $0x210] sm:$0xff]
        %v1126 = vld [vmem:[%s1102 + $0x218] sm:$0xff]
        %v1127 = vld [vmem:[%s1102 + $0x240] sm:$0xff]
        %v1128 = vld [vmem:[%s1102 + $0x248] sm:$0xff]
        %v1129 = vld [vmem:[%s1102 + $0x270] sm:$0xff]
        %v1130 = vld [vmem:[%s1102 + $0x278] sm:$0xff]
        %v1131 = vld [vmem:[%s1102 + $0x2a0] sm:$0xff]
        %v1132 = vld [vmem:[%s1102 + $0x2a8] sm:$0xff]
        %v1133 = vld [vmem:[%s1102 + $0x2d0] sm:$0xff]
        %v1134 = vld [vmem:[%s1102 + $0x2d8] sm:$0xff]
        %v1135 = vld [vmem:[%s1102 + $0x300] sm:$0xff]
        %v1136 = vld [vmem:[%s1102 + $0x308] sm:$0xff]
        %v1137 = vld [vmem:[%s1102 + $0x330] sm:$0xff]
        %v1138 = vld [vmem:[%s1102 + $0x338] sm:$0xff]
        %v1139 = vld [vmem:[#allocation2] sm:$0xff]
        %v1140 = vld [vmem:[#allocation2 + $0x8] sm:$0xff]
        %v1141 = vld [vmem:[#allocation2 + $0x10] sm:$0xff]
        %v1142 = vld [vmem:[#allocation2 + $0x18] sm:$0xff]
        %v1143 = vld [vmem:[#allocation2 + $0x20] sm:$0xff]
        %v1144 = vld [vmem:[#allocation2 + $0x28] sm:$0xff]
        %v1145 = vld [vmem:[#allocation2 + $0x30] sm:$0xff]
        %v1146 = vld [vmem:[#allocation2 + $0x38] sm:$0xff]
        %v1147 = vld [vmem:[#allocation2 + $0x40] sm:$0xff]
        %v1148 = vld [vmem:[#allocation2 + $0x48] sm:$0xff]
        %v1149 = vld [vmem:[#allocation2 + $0x50] sm:$0xff]
        %v1150 = vld [vmem:[#allocation2 + $0x58] sm:$0xff]
        %v1151 = vld [vmem:[#allocation2 + $0x60] sm:$0xff]
        %v1152 = vld [vmem:[#allocation2 + $0x68] sm:$0xff]
        %v1153 = vld [vmem:[#allocation2 + $0x70] sm:$0xff]
        %v1154 = vld [vmem:[#allocation2 + $0x78] sm:$0xff]
        %v1155 = vld [vmem:[#allocation2 + $0x80] sm:$0xff]
        %v1156 = vld [vmem:[#allocation2 + $0x88] sm:$0xff]
        %v1157 = vld [vmem:[#allocation2 + $0x90] sm:$0xff]
        %v1158 = vld [vmem:[#allocation2 + $0x98] sm:$0xff]
        %v1159 = vld [vmem:[#allocation2 + $0xa0] sm:$0xff]
        %v1160 = vld [vmem:[#allocation2 + $0xa8] sm:$0xff]
        %v1161 = vld [vmem:[#allocation2 + $0xb0] sm:$0xff]
        %v1162 = vld [vmem:[#allocation2 + $0xb8] sm:$0xff]
        %v1163 = vld [vmem:[#allocation2 + $0xc0] sm:$0xff]
        %v1164 = vld [vmem:[#allocation2 + $0xc8] sm:$0xff]
        %v1165 = vld [vmem:[#allocation2 + $0xd0] sm:$0xff]
        %v1166 = vld [vmem:[#allocation2 + $0xd8] sm:$0xff]
        %v1167 = vld [vmem:[#allocation2 + $0xe0] sm:$0xff]
        %v1168 = vld [vmem:[#allocation2 + $0xe8] sm:$0xff]
        %v1169 = vld [vmem:[#allocation2 + $0xf0] sm:$0xff]
        %v1170 = vld [vmem:[#allocation2 + $0xf8] sm:$0xff]
        %v1171 = vld [vmem:[#allocation2 + $0x100] sm:$0xff]
        %v1172 = vld [vmem:[#allocation2 + $0x108] sm:$0xff]
        %v1173 = vld [vmem:[#allocation2 + $0x110] sm:$0xff]
        %v1174 = vld [vmem:[#allocation2 + $0x118] sm:$0xff]
        %v1175 = vld [vmem:[#allocation2 + $0x120] sm:$0xff]
        %v1176 = vld [vmem:[#allocation2 + $0x128] sm:$0xff]
        %v1177 = vld [vmem:[#allocation2 + $0x130] sm:$0xff]
        %v1178 = vld [vmem:[#allocation2 + $0x138] sm:$0xff]
        %v1179 = vld [vmem:[#allocation2 + $0x140] sm:$0xff]
        %v1180 = vld [vmem:[#allocation2 + $0x148] sm:$0xff]
        %v1181 = vld [vmem:[#allocation2 + $0x150] sm:$0xff]
        %v1182 = vld [vmem:[#allocation2 + $0x158] sm:$0xff]
        %v1183 = vld [vmem:[#allocation2 + $0x160] sm:$0xff]
        %v1184 = vld [vmem:[#allocation2 + $0x168] sm:$0xff]
        %v1185 = vld [vmem:[#allocation2 + $0x170] sm:$0xff]
        %v1186 = vld [vmem:[#allocation2 + $0x178] sm:$0xff]
        %v1187 = vld [vmem:[#allocation2 + $0x180] sm:$0xff]
        %v1188 = vld [vmem:[#allocation2 + $0x188] sm:$0xff]
        %v1189 = vld [vmem:[#allocation2 + $0x190] sm:$0xff]
        %v1190 = vld [vmem:[#allocation2 + $0x198] sm:$0xff]
        %v1191 = vld [vmem:[#allocation2 + $0x1a0] sm:$0xff]
        %v1192 = vld [vmem:[#allocation2 + $0x1a8] sm:$0xff]
        %v1193 = vld [vmem:[#allocation2 + $0x1b0] sm:$0xff]
        %v1194 = vld [vmem:[#allocation2 + $0x1b8] sm:$0xff]
        %v1195 = vld [vmem:[#allocation2 + $0x1c0] sm:$0xff]
        %v1196 = vld [vmem:[#allocation2 + $0x1c8] sm:$0xff]
        %v1197 = vld [vmem:[#allocation2 + $0x1d0] sm:$0xff]
        %v1198 = vld [vmem:[#allocation2 + $0x1d8] sm:$0xff]
        %v1199 = vld [vmem:[#allocation2 + $0x1e0] sm:$0xff]
        %v1200 = vld [vmem:[#allocation2 + $0x1e8] sm:$0xff]
        %v1201 = vld [vmem:[#allocation2 + $0x1f0] sm:$0xff]
        %v1202 = vld [vmem:[#allocation2 + $0x1f8] sm:$0xff]
        %v1203 = vld [vmem:[#allocation2 + $0x200] sm:$0xff]
        %v1204 = vld [vmem:[#allocation2 + $0x208] sm:$0xff]
        %v1205 = vld [vmem:[#allocation2 + $0x210] sm:$0xff]
        %v1206 = vld [vmem:[#allocation2 + $0x218] sm:$0xff]
        %v1207 = vld [vmem:[#allocation2 + $0x220] sm:$0xff]
        %v1208 = vld [vmem:[#allocation2 + $0x228] sm:$0xff]
        %v1209 = vld [vmem:[#allocation2 + $0x230] sm:$0xff]
        %v1210 = vld [vmem:[#allocation2 + $0x238] sm:$0xff]
        %v1211 = vld [vmem:[%s314] sm:$0xff]
        %v1212 = vld [vmem:[%s314 + $0x8] sm:$0xff]
        %v1213 = vld [vmem:[%s314 + $0x10] sm:$0xff]
        %v1214 = vld [vmem:[%s314 + $0x18] sm:$0xff]
        %v1215 = vld [vmem:[%s314 + $0x20] sm:$0xff]
        %v1216 = vld [vmem:[%s314 + $0x28] sm:$0xff]
        %v1217 = vld [vmem:[%s314 + $0x30] sm:$0xff]
        %v1218 = vld [vmem:[%s314 + $0x38] sm:$0xff]
        %v1219 = vld [vmem:[%s314 + $0x40] sm:$0xff]
        %v1220 = vld [vmem:[%s314 + $0x48] sm:$0xff]
        %v1221 = vld [vmem:[%s314 + $0x50] sm:$0xff]
        %v1222 = vld [vmem:[%s314 + $0x58] sm:$0xff]
        %v1223 = vld [vmem:[%s314 + $0x60] sm:$0xff]
        %v1224 = vld [vmem:[%s314 + $0x68] sm:$0xff]
        %v1225 = vld [vmem:[%s314 + $0x70] sm:$0xff]
        %v1226 = vld [vmem:[%s314 + $0x78] sm:$0xff]
        %v1227 = vld [vmem:[%s314 + $0x80] sm:$0xff]
        %v1228 = vld [vmem:[%s314 + $0x88] sm:$0xff]
        %v1229 = vld [vmem:[%s314 + $0x90] sm:$0xff]
        %v1230 = vld [vmem:[%s314 + $0x98] sm:$0xff]
        %v1231 = vld [vmem:[%s314 + $0xa0] sm:$0xff]
        %v1232 = vld [vmem:[%s314 + $0xa8] sm:$0xff]
        %v1233 = vld [vmem:[%s314 + $0xb0] sm:$0xff]
        %v1234 = vld [vmem:[%s314 + $0xb8] sm:$0xff]
        %v1235 = vld [vmem:[%s314 + $0xc0] sm:$0xff]
        %v1236 = vld [vmem:[%s314 + $0xc8] sm:$0xff]
        %v1237 = vld [vmem:[%s314 + $0xd0] sm:$0xff]
        %v1238 = vld [vmem:[%s314 + $0xd8] sm:$0xff]
        %v1239 = vld [vmem:[%s314 + $0xe0] sm:$0xff]
        %v1240 = vld [vmem:[%s314 + $0xe8] sm:$0xff]
        %v1241 = vld [vmem:[%s314 + $0xf0] sm:$0xff]
        %v1242 = vld [vmem:[%s314 + $0xf8] sm:$0xff]
        %v1243 = vld [vmem:[%s314 + $0x100] sm:$0xff]
        %v1244 = vld [vmem:[%s314 + $0x108] sm:$0xff]
        %v1245 = vld [vmem:[%s314 + $0x110] sm:$0xff]
        %v1246 = vld [vmem:[%s314 + $0x118] sm:$0xff]
        %v1247 = vld [vmem:[%s314 + $0x120] sm:$0xff]
        %v1248 = vld [vmem:[%s314 + $0x128] sm:$0xff]
        %v1249 = vld [vmem:[%s314 + $0x130] sm:$0xff]
        %v1250 = vld [vmem:[%s314 + $0x138] sm:$0xff]
        %v1251 = vld [vmem:[%s314 + $0x140] sm:$0xff]
        %v1252 = vld [vmem:[%s314 + $0x148] sm:$0xff]
        %v1253 = vld [vmem:[%s314 + $0x150] sm:$0xff]
        %v1254 = vld [vmem:[%s314 + $0x158] sm:$0xff]
        %v1255 = vld [vmem:[%s314 + $0x160] sm:$0xff]
        %v1256 = vld [vmem:[%s314 + $0x168] sm:$0xff]
        %v1257 = vld [vmem:[%s314 + $0x170] sm:$0xff]
        %v1258 = vld [vmem:[%s314 + $0x178] sm:$0xff]
        %v1259 = vld [vmem:[%s314 + $0x180] sm:$0xff]
        %v1260 = vld [vmem:[%s314 + $0x188] sm:$0xff]
        %v1261 = vld [vmem:[%s314 + $0x190] sm:$0xff]
        %v1262 = vld [vmem:[%s314 + $0x198] sm:$0xff]
        %v1263 = vld [vmem:[%s314 + $0x1a0] sm:$0xff]
        %v1264 = vld [vmem:[%s314 + $0x1a8] sm:$0xff]
        %v1265 = vld [vmem:[%s314 + $0x1b0] sm:$0xff]
        %v1266 = vld [vmem:[%s314 + $0x1b8] sm:$0xff]
        %v1267 = vld [vmem:[%s314 + $0x1c0] sm:$0xff]
        %v1268 = vld [vmem:[%s314 + $0x1c8] sm:$0xff]
        %v1269 = vld [vmem:[%s314 + $0x1d0] sm:$0xff]
        %v1270 = vld [vmem:[%s314 + $0x1d8] sm:$0xff]
        %v1271 = vld [vmem:[%s314 + $0x1e0] sm:$0xff]
        %v1272 = vld [vmem:[%s314 + $0x1e8] sm:$0xff]
        %v1273 = vld [vmem:[%s314 + $0x1f0] sm:$0xff]
        %v1274 = vld [vmem:[%s314 + $0x1f8] sm:$0xff]
        %v1275 = vld [vmem:[%s314 + $0x200] sm:$0xff]
        %v1276 = vld [vmem:[%s314 + $0x208] sm:$0xff]
        %v1277 = vld [vmem:[%s314 + $0x210] sm:$0xff]
        %v1278 = vld [vmem:[%s314 + $0x218] sm:$0xff]
        %v1279 = vld [vmem:[%s314 + $0x220] sm:$0xff]
        %v1280 = vld [vmem:[%s314 + $0x228] sm:$0xff]
        %v1281 = vld [vmem:[%s314 + $0x230] sm:$0xff]
        %v1282 = vld [vmem:[%s314 + $0x238] sm:$0xff]
        %v1283 = vld [vmem:[%s314 + $0x240] sm:$0xff]
        %v1284 = vld [vmem:[%s314 + $0x248] sm:$0xff]
        %v1285 = vld [vmem:[%s314 + $0x250] sm:$0xff]
        %v1286 = vld [vmem:[%s314 + $0x258] sm:$0xff]
        %v1287 = vld [vmem:[%s314 + $0x260] sm:$0xff]
        %v1288 = vld [vmem:[%s314 + $0x268] sm:$0xff]
        %v1289 = vld [vmem:[%s314 + $0x270] sm:$0xff]
        %v1290 = vld [vmem:[%s314 + $0x278] sm:$0xff]
        %v1291 = vld [vmem:[%s314 + $0x280] sm:$0xff]
        %v1292 = vld [vmem:[%s314 + $0x288] sm:$0xff]
        %v1293 = vld [vmem:[%s314 + $0x290] sm:$0xff]
        %v1294 = vld [vmem:[%s314 + $0x298] sm:$0xff]
        %v1295 = vld [vmem:[%s314 + $0x2a0] sm:$0xff]
        %v1296 = vld [vmem:[%s314 + $0x2a8] sm:$0xff]
        %v1297 = vld [vmem:[%s314 + $0x2b0] sm:$0xff]
        %v1298 = vld [vmem:[%s314 + $0x2b8] sm:$0xff]
        %v1299 = vld [vmem:[%s314 + $0x2c0] sm:$0xff]
        %v1300 = vld [vmem:[%s314 + $0x2c8] sm:$0xff]
        %v1301 = vld [vmem:[%s314 + $0x2d0] sm:$0xff]
        %v1302 = vld [vmem:[%s314 + $0x2d8] sm:$0xff]
        %v1303 = vld [vmem:[%s314 + $0x2e0] sm:$0xff]
        %v1304 = vld [vmem:[%s314 + $0x2e8] sm:$0xff]
        %v1305 = vld [vmem:[%s314 + $0x2f0] sm:$0xff]
        %v1306 = vld [vmem:[%s314 + $0x2f8] sm:$0xff]
        %v1307 = vld [vmem:[%s314 + $0x300] sm:$0xff]
        %v1308 = vld [vmem:[%s314 + $0x308] sm:$0xff]
        %v1309 = vld [vmem:[%s314 + $0x310] sm:$0xff]
        %v1310 = vld [vmem:[%s314 + $0x318] sm:$0xff]
        %v1311 = vld [vmem:[%s314 + $0x320] sm:$0xff]
        %v1312 = vld [vmem:[%s314 + $0x328] sm:$0xff]
        %v1313 = vld [vmem:[%s314 + $0x330] sm:$0xff]
        %v1314 = vld [vmem:[%s314 + $0x338] sm:$0xff]
        %v1315 = vld [vmem:[%s314 + $0x340] sm:$0xff]
        %v1316 = vld [vmem:[%s314 + $0x348] sm:$0xff]
        %v1317 = vld [vmem:[%s314 + $0x350] sm:$0xff]
        %v1318 = vld [vmem:[%s314 + $0x358] sm:$0xff]
        %v1319 = vld [vmem:[%s314 + $0x360] sm:$0xff]
        %v1320 = vld [vmem:[%s314 + $0x368] sm:$0xff]
        %v1321 = vld [vmem:[%s314 + $0x370] sm:$0xff]
        %v1322 = vld [vmem:[%s314 + $0x378] sm:$0xff]
        %v1323 = vld [vmem:[%s314 + $0x380] sm:$0xff]
        %v1324 = vld [vmem:[%s314 + $0x388] sm:$0xff]
        %v1325 = vld [vmem:[%s314 + $0x390] sm:$0xff]
        %v1326 = vld [vmem:[%s314 + $0x398] sm:$0xff]
        %v1327 = vld [vmem:[%s314 + $0x3a0] sm:$0xff]
        %v1328 = vld [vmem:[%s314 + $0x3a8] sm:$0xff]
        %v1329 = vld [vmem:[%s314 + $0x3b0] sm:$0xff]
        %v1330 = vld [vmem:[%s314 + $0x3b8] sm:$0xff]
        %v1331 = vld [vmem:[%s314 + $0x3c0] sm:$0xff]
        %v1332 = vld [vmem:[%s314 + $0x3c8] sm:$0xff]
        %v1333 = vld [vmem:[%s314 + $0x3d0] sm:$0xff]
        %v1334 = vld [vmem:[%s314 + $0x3d8] sm:$0xff]
        %v1335 = vld [vmem:[%s314 + $0x3e0] sm:$0xff]
        %v1336 = vld [vmem:[%s314 + $0x3e8] sm:$0xff]
        %v1337 = vld [vmem:[%s314 + $0x3f0] sm:$0xff]
        %v1338 = vld [vmem:[%s314 + $0x3f8] sm:$0xff]
        %1339 = vmatpush.xpose.msra.mxu0 %v1241
        %1340 = vmatpush.xpose.msra.mxu0 %v1239
        %1341 = vmatpush.xpose.msra.mxu0 %v1237
        %1342 = vmatpush.xpose.msra.mxu0 %v1235
        %1343 = vmatpush.xpose.msra.mxu0 %v1233
        %1344 = vmatpush.xpose.msra.mxu0 %v1231
        %1345 = vmatpush.xpose.msra.mxu0 %v1229
        %1346 = vmatpush.xpose.msra.mxu0 %v1227
        %1347 = vmatpush.xpose.msra.mxu0 %v1225
        %1348 = vmatpush.xpose.msra.mxu0 %v1223
        %1349 = vmatpush.xpose.msra.mxu0 %v1221
        %1350 = vmatpush.xpose.msra.mxu0 %v1219
        %1351 = vmatpush.xpose.msra.mxu0 %v1217
        %1352 = vmatpush.xpose.msra.mxu0 %v1215
        %1353 = vmatpush.xpose.msra.mxu0 %v1213
        %1354 = vmatpush.xpose.msra.mxu0 %v1211
        %1355 = vmatmul.f32.gmra.mxu0 %v1103
        %v1356 = vpop.f32.mrf.mxu0
        %v1357 = vadd.f32 0.0, %v1356
        %1358 = vmatmul.f32.gmra.mxu0 %v1105
        %v1359 = vpop.f32.mrf.mxu0
        %v1360 = vadd.f32 0.0, %v1359
        %1361 = vmatmul.f32.gmra.mxu0 %v1107
        %v1362 = vpop.f32.mrf.mxu0
        %v1363 = vadd.f32 0.0, %v1362
        %1364 = vmatmul.f32.gmra.mxu0 %v1109
        %v1365 = vpop.f32.mrf.mxu0
        %v1366 = vadd.f32 0.0, %v1365
        %1367 = vmatmul.f32.gmra.mxu0 %v1111
        %v1368 = vpop.f32.mrf.mxu0
        %v1369 = vadd.f32 0.0, %v1368
        %1370 = vmatmul.f32.gmra.mxu0 %v1113
        %v1371 = vpop.f32.mrf.mxu0
        %v1372 = vadd.f32 0.0, %v1371
        %1373 = vmatmul.f32.gmra.mxu0 %v1115
        %v1374 = vpop.f32.mrf.mxu0
        %v1375 = vadd.f32 0.0, %v1374
        %1376 = vmatmul.f32.gmra.mxu0 %v1117
        %v1377 = vpop.f32.mrf.mxu0
        %v1378 = vadd.f32 0.0, %v1377
        %1379 = vmatmul.f32.gmra.mxu0 %v1119
        %v1380 = vpop.f32.mrf.mxu0
        %v1381 = vadd.f32 0.0, %v1380
        %1382 = vmatmul.f32.gmra.mxu0 %v1121
        %v1383 = vpop.f32.mrf.mxu0
        %v1384 = vadd.f32 0.0, %v1383
        %1385 = vmatmul.f32.gmra.mxu0 %v1123
        %v1386 = vpop.f32.mrf.mxu0
        %v1387 = vadd.f32 0.0, %v1386
        %1388 = vmatmul.f32.gmra.mxu0 %v1125
        %v1389 = vpop.f32.mrf.mxu0
        %v1390 = vadd.f32 0.0, %v1389
        %1391 = vmatmul.f32.gmra.mxu0 %v1127
        %v1392 = vpop.f32.mrf.mxu0
        %v1393 = vadd.f32 0.0, %v1392
        %1394 = vmatmul.f32.gmra.mxu0 %v1129
        %v1395 = vpop.f32.mrf.mxu0
        %v1396 = vadd.f32 0.0, %v1395
        %1397 = vmatmul.f32.gmra.mxu0 %v1131
        %v1398 = vpop.f32.mrf.mxu0
        %v1399 = vadd.f32 0.0, %v1398
        %1400 = vmatmul.f32.gmra.mxu0 %v1133
        %v1401 = vpop.f32.mrf.mxu0
        %v1402 = vadd.f32 0.0, %v1401
        %1403 = vmatmul.f32.gmra.mxu0 %v1135
        %v1404 = vpop.f32.mrf.mxu0
        %v1405 = vadd.f32 0.0, %v1404
        %1406 = vmatmul.f32.gmra.mxu0 %v1137
        %v1407 = vpop.f32.mrf.mxu0
        %v1408 = vadd.f32 0.0, %v1407
        %1409 = vdwg.mxu0
        %1410 = vmatpush.xpose.msra.mxu0 %v1242
        %1411 = vmatpush.xpose.msra.mxu0 %v1240
        %1412 = vmatpush.xpose.msra.mxu0 %v1238
        %1413 = vmatpush.xpose.msra.mxu0 %v1236
        %1414 = vmatpush.xpose.msra.mxu0 %v1234
        %1415 = vmatpush.xpose.msra.mxu0 %v1232
        %1416 = vmatpush.xpose.msra.mxu0 %v1230
        %1417 = vmatpush.xpose.msra.mxu0 %v1228
        %1418 = vmatpush.xpose.msra.mxu0 %v1226
        %1419 = vmatpush.xpose.msra.mxu0 %v1224
        %1420 = vmatpush.xpose.msra.mxu0 %v1222
        %1421 = vmatpush.xpose.msra.mxu0 %v1220
        %1422 = vmatpush.xpose.msra.mxu0 %v1218
        %1423 = vmatpush.xpose.msra.mxu0 %v1216
        %1424 = vmatpush.xpose.msra.mxu0 %v1214
        %1425 = vmatpush.xpose.msra.mxu0 %v1212
        %1426 = vmatmul.f32.gmra.mxu0 %v1104
        %v1427 = vpop.f32.mrf.mxu0
        %v1428 = vadd.f32 %v1357, %v1427
        %1429 = vmatmul.f32.gmra.mxu0 %v1106
        %v1430 = vpop.f32.mrf.mxu0
        %v1431 = vadd.f32 %v1360, %v1430
        %1432 = vmatmul.f32.gmra.mxu0 %v1108
        %v1433 = vpop.f32.mrf.mxu0
        %v1434 = vadd.f32 %v1363, %v1433
        %1435 = vmatmul.f32.gmra.mxu0 %v1110
        %v1436 = vpop.f32.mrf.mxu0
        %v1437 = vadd.f32 %v1366, %v1436
        %1438 = vmatmul.f32.gmra.mxu0 %v1112
        %v1439 = vpop.f32.mrf.mxu0
        %v1440 = vadd.f32 %v1369, %v1439
        %1441 = vmatmul.f32.gmra.mxu0 %v1114
        %v1442 = vpop.f32.mrf.mxu0
        %v1443 = vadd.f32 %v1372, %v1442
        %1444 = vmatmul.f32.gmra.mxu0 %v1116
        %v1445 = vpop.f32.mrf.mxu0
        %v1446 = vadd.f32 %v1375, %v1445
        %1447 = vmatmul.f32.gmra.mxu0 %v1118
        %v1448 = vpop.f32.mrf.mxu0
        %v1449 = vadd.f32 %v1378, %v1448
        %1450 = vmatmul.f32.gmra.mxu0 %v1120
        %v1451 = vpop.f32.mrf.mxu0
        %v1452 = vadd.f32 %v1381, %v1451
        %1453 = vmatmul.f32.gmra.mxu0 %v1122
        %v1454 = vpop.f32.mrf.mxu0
        %v1455 = vadd.f32 %v1384, %v1454
        %1456 = vmatmul.f32.gmra.mxu0 %v1124
        %v1457 = vpop.f32.mrf.mxu0
        %v1458 = vadd.f32 %v1387, %v1457
        %1459 = vmatmul.f32.gmra.mxu0 %v1126
        %v1460 = vpop.f32.mrf.mxu0
        %v1461 = vadd.f32 %v1390, %v1460
        %1462 = vmatmul.f32.gmra.mxu0 %v1128
        %v1463 = vpop.f32.mrf.mxu0
        %v1464 = vadd.f32 %v1393, %v1463
        %1465 = vmatmul.f32.gmra.mxu0 %v1130
        %v1466 = vpop.f32.mrf.mxu0
        %v1467 = vadd.f32 %v1396, %v1466
        %1468 = vmatmul.f32.gmra.mxu0 %v1132
        %v1469 = vpop.f32.mrf.mxu0
        %v1470 = vadd.f32 %v1399, %v1469
        %1471 = vmatmul.f32.gmra.mxu0 %v1134
        %v1472 = vpop.f32.mrf.mxu0
        %v1473 = vadd.f32 %v1402, %v1472
        %1474 = vmatmul.f32.gmra.mxu0 %v1136
        %v1475 = vpop.f32.mrf.mxu0
        %v1476 = vadd.f32 %v1405, %v1475
        %1477 = vmatmul.f32.gmra.mxu0 %v1138
        %v1478 = vpop.f32.mrf.mxu0
        %v1479 = vadd.f32 %v1408, %v1478
        %1480 = vdwg.mxu0
        %1481 = vmatpush.xpose.msra.mxu0 %v1273
        %1482 = vmatpush.xpose.msra.mxu0 %v1271
        %1483 = vmatpush.xpose.msra.mxu0 %v1269
        %1484 = vmatpush.xpose.msra.mxu0 %v1267
        %1485 = vmatpush.xpose.msra.mxu0 %v1265
        %1486 = vmatpush.xpose.msra.mxu0 %v1263
        %1487 = vmatpush.xpose.msra.mxu0 %v1261
        %1488 = vmatpush.xpose.msra.mxu0 %v1259
        %1489 = vmatpush.xpose.msra.mxu0 %v1257
        %1490 = vmatpush.xpose.msra.mxu0 %v1255
        %1491 = vmatpush.xpose.msra.mxu0 %v1253
        %1492 = vmatpush.xpose.msra.mxu0 %v1251
        %1493 = vmatpush.xpose.msra.mxu0 %v1249
        %1494 = vmatpush.xpose.msra.mxu0 %v1247
        %1495 = vmatpush.xpose.msra.mxu0 %v1245
        %1496 = vmatpush.xpose.msra.mxu0 %v1243
        %1497 = vmatmul.f32.gmra.mxu0 %v1103
        %v1498 = vpop.f32.mrf.mxu0
        %v1499 = vadd.f32 0.0, %v1498
        %1500 = vmatmul.f32.gmra.mxu0 %v1105
        %v1501 = vpop.f32.mrf.mxu0
        %v1502 = vadd.f32 0.0, %v1501
        %1503 = vmatmul.f32.gmra.mxu0 %v1107
        %v1504 = vpop.f32.mrf.mxu0
        %v1505 = vadd.f32 0.0, %v1504
        %1506 = vmatmul.f32.gmra.mxu0 %v1109
        %v1507 = vpop.f32.mrf.mxu0
        %v1508 = vadd.f32 0.0, %v1507
        %1509 = vmatmul.f32.gmra.mxu0 %v1111
        %v1510 = vpop.f32.mrf.mxu0
        %v1511 = vadd.f32 0.0, %v1510
        %1512 = vmatmul.f32.gmra.mxu0 %v1113
        %v1513 = vpop.f32.mrf.mxu0
        %v1514 = vadd.f32 0.0, %v1513
        %1515 = vmatmul.f32.gmra.mxu0 %v1115
        %v1516 = vpop.f32.mrf.mxu0
        %v1517 = vadd.f32 0.0, %v1516
        %1518 = vmatmul.f32.gmra.mxu0 %v1117
        %v1519 = vpop.f32.mrf.mxu0
        %v1520 = vadd.f32 0.0, %v1519
        %1521 = vmatmul.f32.gmra.mxu0 %v1119
        %v1522 = vpop.f32.mrf.mxu0
        %v1523 = vadd.f32 0.0, %v1522
        %1524 = vmatmul.f32.gmra.mxu0 %v1121
        %v1525 = vpop.f32.mrf.mxu0
        %v1526 = vadd.f32 0.0, %v1525
        %1527 = vmatmul.f32.gmra.mxu0 %v1123
        %v1528 = vpop.f32.mrf.mxu0
        %v1529 = vadd.f32 0.0, %v1528
        %1530 = vmatmul.f32.gmra.mxu0 %v1125
        %v1531 = vpop.f32.mrf.mxu0
        %v1532 = vadd.f32 0.0, %v1531
        %1533 = vmatmul.f32.gmra.mxu0 %v1127
        %v1534 = vpop.f32.mrf.mxu0
        %v1535 = vadd.f32 0.0, %v1534
        %1536 = vmatmul.f32.gmra.mxu0 %v1129
        %v1537 = vpop.f32.mrf.mxu0
        %v1538 = vadd.f32 0.0, %v1537
        %1539 = vmatmul.f32.gmra.mxu0 %v1131
        %v1540 = vpop.f32.mrf.mxu0
        %v1541 = vadd.f32 0.0, %v1540
        %1542 = vmatmul.f32.gmra.mxu0 %v1133
        %v1543 = vpop.f32.mrf.mxu0
        %v1544 = vadd.f32 0.0, %v1543
        %1545 = vmatmul.f32.gmra.mxu0 %v1135
        %v1546 = vpop.f32.mrf.mxu0
        %v1547 = vadd.f32 0.0, %v1546
        %1548 = vmatmul.f32.gmra.mxu0 %v1137
        %v1549 = vpop.f32.mrf.mxu0
        %v1550 = vadd.f32 0.0, %v1549
        %1551 = vdwg.mxu0
        %1552 = vmatpush.xpose.msra.mxu0 %v1274
        %1553 = vmatpush.xpose.msra.mxu0 %v1272
        %1554 = vmatpush.xpose.msra.mxu0 %v1270
        %1555 = vmatpush.xpose.msra.mxu0 %v1268
        %1556 = vmatpush.xpose.msra.mxu0 %v1266
        %1557 = vmatpush.xpose.msra.mxu0 %v1264
        %1558 = vmatpush.xpose.msra.mxu0 %v1262
        %1559 = vmatpush.xpose.msra.mxu0 %v1260
        %1560 = vmatpush.xpose.msra.mxu0 %v1258
        %1561 = vmatpush.xpose.msra.mxu0 %v1256
        %1562 = vmatpush.xpose.msra.mxu0 %v1254
        %1563 = vmatpush.xpose.msra.mxu0 %v1252
        %1564 = vmatpush.xpose.msra.mxu0 %v1250
        %1565 = vmatpush.xpose.msra.mxu0 %v1248
        %1566 = vmatpush.xpose.msra.mxu0 %v1246
        %1567 = vmatpush.xpose.msra.mxu0 %v1244
        %1568 = vmatmul.f32.gmra.mxu0 %v1104
        %v1569 = vpop.f32.mrf.mxu0
        %v1570 = vadd.f32 %v1499, %v1569
        %1571 = vmatmul.f32.gmra.mxu0 %v1106
        %v1572 = vpop.f32.mrf.mxu0
        %v1573 = vadd.f32 %v1502, %v1572
        %1574 = vmatmul.f32.gmra.mxu0 %v1108
        %v1575 = vpop.f32.mrf.mxu0
        %v1576 = vadd.f32 %v1505, %v1575
        %1577 = vmatmul.f32.gmra.mxu0 %v1110
        %v1578 = vpop.f32.mrf.mxu0
        %v1579 = vadd.f32 %v1508, %v1578
        %1580 = vmatmul.f32.gmra.mxu0 %v1112
        %v1581 = vpop.f32.mrf.mxu0
        %v1582 = vadd.f32 %v1511, %v1581
        %1583 = vmatmul.f32.gmra.mxu0 %v1114
        %v1584 = vpop.f32.mrf.mxu0
        %v1585 = vadd.f32 %v1514, %v1584
        %1586 = vmatmul.f32.gmra.mxu0 %v1116
        %v1587 = vpop.f32.mrf.mxu0
        %v1588 = vadd.f32 %v1517, %v1587
        %1589 = vmatmul.f32.gmra.mxu0 %v1118
        %v1590 = vpop.f32.mrf.mxu0
        %v1591 = vadd.f32 %v1520, %v1590
        %1592 = vmatmul.f32.gmra.mxu0 %v1120
        %v1593 = vpop.f32.mrf.mxu0
        %v1594 = vadd.f32 %v1523, %v1593
        %1595 = vmatmul.f32.gmra.mxu0 %v1122
        %v1596 = vpop.f32.mrf.mxu0
        %v1597 = vadd.f32 %v1526, %v1596
        %1598 = vmatmul.f32.gmra.mxu0 %v1124
        %v1599 = vpop.f32.mrf.mxu0
        %v1600 = vadd.f32 %v1529, %v1599
        %1601 = vmatmul.f32.gmra.mxu0 %v1126
        %v1602 = vpop.f32.mrf.mxu0
        %v1603 = vadd.f32 %v1532, %v1602
        %1604 = vmatmul.f32.gmra.mxu0 %v1128
        %v1605 = vpop.f32.mrf.mxu0
        %v1606 = vadd.f32 %v1535, %v1605
        %1607 = vmatmul.f32.gmra.mxu0 %v1130
        %v1608 = vpop.f32.mrf.mxu0
        %v1609 = vadd.f32 %v1538, %v1608
        %1610 = vmatmul.f32.gmra.mxu0 %v1132
        %v1611 = vpop.f32.mrf.mxu0
        %v1612 = vadd.f32 %v1541, %v1611
        %1613 = vmatmul.f32.gmra.mxu0 %v1134
        %v1614 = vpop.f32.mrf.mxu0
        %v1615 = vadd.f32 %v1544, %v1614
        %1616 = vmatmul.f32.gmra.mxu0 %v1136
        %v1617 = vpop.f32.mrf.mxu0
        %v1618 = vadd.f32 %v1547, %v1617
        %1619 = vmatmul.f32.gmra.mxu0 %v1138
        %v1620 = vpop.f32.mrf.mxu0
        %v1621 = vadd.f32 %v1550, %v1620
        %1622 = vdwg.mxu0
        %1623 = vmatpush.xpose.msra.mxu0 %v1305
        %1624 = vmatpush.xpose.msra.mxu0 %v1303
        %1625 = vmatpush.xpose.msra.mxu0 %v1301
        %1626 = vmatpush.xpose.msra.mxu0 %v1299
        %1627 = vmatpush.xpose.msra.mxu0 %v1297
        %1628 = vmatpush.xpose.msra.mxu0 %v1295
        %1629 = vmatpush.xpose.msra.mxu0 %v1293
        %1630 = vmatpush.xpose.msra.mxu0 %v1291
        %1631 = vmatpush.xpose.msra.mxu0 %v1289
        %1632 = vmatpush.xpose.msra.mxu0 %v1287
        %1633 = vmatpush.xpose.msra.mxu0 %v1285
        %1634 = vmatpush.xpose.msra.mxu0 %v1283
        %1635 = vmatpush.xpose.msra.mxu0 %v1281
        %1636 = vmatpush.xpose.msra.mxu0 %v1279
        %1637 = vmatpush.xpose.msra.mxu0 %v1277
        %1638 = vmatpush.xpose.msra.mxu0 %v1275
        %1639 = vmatmul.f32.gmra.mxu0 %v1103
        %v1640 = vpop.f32.mrf.mxu0
        %v1641 = vadd.f32 0.0, %v1640
        %1642 = vmatmul.f32.gmra.mxu0 %v1105
        %v1643 = vpop.f32.mrf.mxu0
        %v1644 = vadd.f32 0.0, %v1643
        %1645 = vmatmul.f32.gmra.mxu0 %v1107
        %v1646 = vpop.f32.mrf.mxu0
        %v1647 = vadd.f32 0.0, %v1646
        %1648 = vmatmul.f32.gmra.mxu0 %v1109
        %v1649 = vpop.f32.mrf.mxu0
        %v1650 = vadd.f32 0.0, %v1649
        %1651 = vmatmul.f32.gmra.mxu0 %v1111
        %v1652 = vpop.f32.mrf.mxu0
        %v1653 = vadd.f32 0.0, %v1652
        %1654 = vmatmul.f32.gmra.mxu0 %v1113
        %v1655 = vpop.f32.mrf.mxu0
        %v1656 = vadd.f32 0.0, %v1655
        %1657 = vmatmul.f32.gmra.mxu0 %v1115
        %v1658 = vpop.f32.mrf.mxu0
        %v1659 = vadd.f32 0.0, %v1658
        %1660 = vmatmul.f32.gmra.mxu0 %v1117
        %v1661 = vpop.f32.mrf.mxu0
        %v1662 = vadd.f32 0.0, %v1661
        %1663 = vmatmul.f32.gmra.mxu0 %v1119
        %v1664 = vpop.f32.mrf.mxu0
        %v1665 = vadd.f32 0.0, %v1664
        %1666 = vmatmul.f32.gmra.mxu0 %v1121
        %v1667 = vpop.f32.mrf.mxu0
        %v1668 = vadd.f32 0.0, %v1667
        %1669 = vmatmul.f32.gmra.mxu0 %v1123
        %v1670 = vpop.f32.mrf.mxu0
        %v1671 = vadd.f32 0.0, %v1670
        %1672 = vmatmul.f32.gmra.mxu0 %v1125
        %v1673 = vpop.f32.mrf.mxu0
        %v1674 = vadd.f32 0.0, %v1673
        %1675 = vmatmul.f32.gmra.mxu0 %v1127
        %v1676 = vpop.f32.mrf.mxu0
        %v1677 = vadd.f32 0.0, %v1676
        %1678 = vmatmul.f32.gmra.mxu0 %v1129
        %v1679 = vpop.f32.mrf.mxu0
        %v1680 = vadd.f32 0.0, %v1679
        %1681 = vmatmul.f32.gmra.mxu0 %v1131
        %v1682 = vpop.f32.mrf.mxu0
        %v1683 = vadd.f32 0.0, %v1682
        %1684 = vmatmul.f32.gmra.mxu0 %v1133
        %v1685 = vpop.f32.mrf.mxu0
        %v1686 = vadd.f32 0.0, %v1685
        %1687 = vmatmul.f32.gmra.mxu0 %v1135
        %v1688 = vpop.f32.mrf.mxu0
        %v1689 = vadd.f32 0.0, %v1688
        %1690 = vmatmul.f32.gmra.mxu0 %v1137
        %v1691 = vpop.f32.mrf.mxu0
        %v1692 = vadd.f32 0.0, %v1691
        %1693 = vdwg.mxu0
        %1694 = vmatpush.xpose.msra.mxu0 %v1306
        %1695 = vmatpush.xpose.msra.mxu0 %v1304
        %1696 = vmatpush.xpose.msra.mxu0 %v1302
        %1697 = vmatpush.xpose.msra.mxu0 %v1300
        %1698 = vmatpush.xpose.msra.mxu0 %v1298
        %1699 = vmatpush.xpose.msra.mxu0 %v1296
        %1700 = vmatpush.xpose.msra.mxu0 %v1294
        %1701 = vmatpush.xpose.msra.mxu0 %v1292
        %1702 = vmatpush.xpose.msra.mxu0 %v1290
        %1703 = vmatpush.xpose.msra.mxu0 %v1288
        %1704 = vmatpush.xpose.msra.mxu0 %v1286
        %1705 = vmatpush.xpose.msra.mxu0 %v1284
        %1706 = vmatpush.xpose.msra.mxu0 %v1282
        %1707 = vmatpush.xpose.msra.mxu0 %v1280
        %1708 = vmatpush.xpose.msra.mxu0 %v1278
        %1709 = vmatpush.xpose.msra.mxu0 %v1276
        %1710 = vmatmul.f32.gmra.mxu0 %v1104
        %v1711 = vpop.f32.mrf.mxu0
        %v1712 = vadd.f32 %v1641, %v1711
        %1713 = vmatmul.f32.gmra.mxu0 %v1106
        %v1714 = vpop.f32.mrf.mxu0
        %v1715 = vadd.f32 %v1644, %v1714
        %1716 = vmatmul.f32.gmra.mxu0 %v1108
        %v1717 = vpop.f32.mrf.mxu0
        %v1718 = vadd.f32 %v1647, %v1717
        %1719 = vmatmul.f32.gmra.mxu0 %v1110
        %v1720 = vpop.f32.mrf.mxu0
        %v1721 = vadd.f32 %v1650, %v1720
        %1722 = vmatmul.f32.gmra.mxu0 %v1112
        %v1723 = vpop.f32.mrf.mxu0
        %v1724 = vadd.f32 %v1653, %v1723
        %1725 = vmatmul.f32.gmra.mxu0 %v1114
        %v1726 = vpop.f32.mrf.mxu0
        %v1727 = vadd.f32 %v1656, %v1726
        %1728 = vmatmul.f32.gmra.mxu0 %v1116
        %v1729 = vpop.f32.mrf.mxu0
        %v1730 = vadd.f32 %v1659, %v1729
        %1731 = vmatmul.f32.gmra.mxu0 %v1118
        %v1732 = vpop.f32.mrf.mxu0
        %v1733 = vadd.f32 %v1662, %v1732
        %1734 = vmatmul.f32.gmra.mxu0 %v1120
        %v1735 = vpop.f32.mrf.mxu0
        %v1736 = vadd.f32 %v1665, %v1735
        %1737 = vmatmul.f32.gmra.mxu0 %v1122
        %v1738 = vpop.f32.mrf.mxu0
        %v1739 = vadd.f32 %v1668, %v1738
        %1740 = vmatmul.f32.gmra.mxu0 %v1124
        %v1741 = vpop.f32.mrf.mxu0
        %v1742 = vadd.f32 %v1671, %v1741
        %1743 = vmatmul.f32.gmra.mxu0 %v1126
        %v1744 = vpop.f32.mrf.mxu0
        %v1745 = vadd.f32 %v1674, %v1744
        %1746 = vmatmul.f32.gmra.mxu0 %v1128
        %v1747 = vpop.f32.mrf.mxu0
        %v1748 = vadd.f32 %v1677, %v1747
        %1749 = vmatmul.f32.gmra.mxu0 %v1130
        %v1750 = vpop.f32.mrf.mxu0
        %v1751 = vadd.f32 %v1680, %v1750
        %1752 = vmatmul.f32.gmra.mxu0 %v1132
        %v1753 = vpop.f32.mrf.mxu0
        %v1754 = vadd.f32 %v1683, %v1753
        %1755 = vmatmul.f32.gmra.mxu0 %v1134
        %v1756 = vpop.f32.mrf.mxu0
        %v1757 = vadd.f32 %v1686, %v1756
        %1758 = vmatmul.f32.gmra.mxu0 %v1136
        %v1759 = vpop.f32.mrf.mxu0
        %v1760 = vadd.f32 %v1689, %v1759
        %1761 = vmatmul.f32.gmra.mxu0 %v1138
        %v1762 = vpop.f32.mrf.mxu0
        %v1763 = vadd.f32 %v1692, %v1762
        %1764 = vdwg.mxu0
        %1765 = vmatpush.xpose.msra.mxu0 %v1337
        %1766 = vmatpush.xpose.msra.mxu0 %v1335
        %1767 = vmatpush.xpose.msra.mxu0 %v1333
        %1768 = vmatpush.xpose.msra.mxu0 %v1331
        %1769 = vmatpush.xpose.msra.mxu0 %v1329
        %1770 = vmatpush.xpose.msra.mxu0 %v1327
        %1771 = vmatpush.xpose.msra.mxu0 %v1325
        %1772 = vmatpush.xpose.msra.mxu0 %v1323
        %1773 = vmatpush.xpose.msra.mxu0 %v1321
        %1774 = vmatpush.xpose.msra.mxu0 %v1319
        %1775 = vmatpush.xpose.msra.mxu0 %v1317
        %1776 = vmatpush.xpose.msra.mxu0 %v1315
        %1777 = vmatpush.xpose.msra.mxu0 %v1313
        %1778 = vmatpush.xpose.msra.mxu0 %v1311
        %1779 = vmatpush.xpose.msra.mxu0 %v1309
        %1780 = vmatpush.xpose.msra.mxu0 %v1307
        %1781 = vmatmul.f32.gmra.mxu0 %v1103
        %v1782 = vpop.f32.mrf.mxu0
        %v1783 = vadd.f32 0.0, %v1782
        %1784 = vmatmul.f32.gmra.mxu0 %v1105
        %v1785 = vpop.f32.mrf.mxu0
        %v1786 = vadd.f32 0.0, %v1785
        %1787 = vmatmul.f32.gmra.mxu0 %v1107
        %v1788 = vpop.f32.mrf.mxu0
        %v1789 = vadd.f32 0.0, %v1788
        %1790 = vmatmul.f32.gmra.mxu0 %v1109
        %v1791 = vpop.f32.mrf.mxu0
        %v1792 = vadd.f32 0.0, %v1791
        %1793 = vmatmul.f32.gmra.mxu0 %v1111
        %v1794 = vpop.f32.mrf.mxu0
        %v1795 = vadd.f32 0.0, %v1794
        %1796 = vmatmul.f32.gmra.mxu0 %v1113
        %v1797 = vpop.f32.mrf.mxu0
        %v1798 = vadd.f32 0.0, %v1797
        %1799 = vmatmul.f32.gmra.mxu0 %v1115
        %v1800 = vpop.f32.mrf.mxu0
        %v1801 = vadd.f32 0.0, %v1800
        %1802 = vmatmul.f32.gmra.mxu0 %v1117
        %v1803 = vpop.f32.mrf.mxu0
        %v1804 = vadd.f32 0.0, %v1803
        %1805 = vmatmul.f32.gmra.mxu0 %v1119
        %v1806 = vpop.f32.mrf.mxu0
        %v1807 = vadd.f32 0.0, %v1806
        %1808 = vmatmul.f32.gmra.mxu0 %v1121
        %v1809 = vpop.f32.mrf.mxu0
        %v1810 = vadd.f32 0.0, %v1809
        %1811 = vmatmul.f32.gmra.mxu0 %v1123
        %v1812 = vpop.f32.mrf.mxu0
        %v1813 = vadd.f32 0.0, %v1812
        %1814 = vmatmul.f32.gmra.mxu0 %v1125
        %v1815 = vpop.f32.mrf.mxu0
        %v1816 = vadd.f32 0.0, %v1815
        %1817 = vmatmul.f32.gmra.mxu0 %v1127
        %v1818 = vpop.f32.mrf.mxu0
        %v1819 = vadd.f32 0.0, %v1818
        %1820 = vmatmul.f32.gmra.mxu0 %v1129
        %v1821 = vpop.f32.mrf.mxu0
        %v1822 = vadd.f32 0.0, %v1821
        %1823 = vmatmul.f32.gmra.mxu0 %v1131
        %v1824 = vpop.f32.mrf.mxu0
        %v1825 = vadd.f32 0.0, %v1824
        %1826 = vmatmul.f32.gmra.mxu0 %v1133
        %v1827 = vpop.f32.mrf.mxu0
        %v1828 = vadd.f32 0.0, %v1827
        %1829 = vmatmul.f32.gmra.mxu0 %v1135
        %v1830 = vpop.f32.mrf.mxu0
        %v1831 = vadd.f32 0.0, %v1830
        %1832 = vmatmul.f32.gmra.mxu0 %v1137
        %v1833 = vpop.f32.mrf.mxu0
        %v1834 = vadd.f32 0.0, %v1833
        %1835 = vdwg.mxu0
        %1836 = vmatpush.xpose.msra.mxu0 %v1338
        %1837 = vmatpush.xpose.msra.mxu0 %v1336
        %1838 = vmatpush.xpose.msra.mxu0 %v1334
        %1839 = vmatpush.xpose.msra.mxu0 %v1332
        %1840 = vmatpush.xpose.msra.mxu0 %v1330
        %1841 = vmatpush.xpose.msra.mxu0 %v1328
        %1842 = vmatpush.xpose.msra.mxu0 %v1326
        %1843 = vmatpush.xpose.msra.mxu0 %v1324
        %1844 = vmatpush.xpose.msra.mxu0 %v1322
        %1845 = vmatpush.xpose.msra.mxu0 %v1320
        %1846 = vmatpush.xpose.msra.mxu0 %v1318
        %1847 = vmatpush.xpose.msra.mxu0 %v1316
        %1848 = vmatpush.xpose.msra.mxu0 %v1314
        %1849 = vmatpush.xpose.msra.mxu0 %v1312
        %1850 = vmatpush.xpose.msra.mxu0 %v1310
        %1851 = vmatpush.xpose.msra.mxu0 %v1308
        %1852 = vmatmul.f32.gmra.mxu0 %v1104
        %v1853 = vpop.f32.mrf.mxu0
        %v1854 = vadd.f32 %v1783, %v1853
        %1855 = vmatmul.f32.gmra.mxu0 %v1106
        %v1856 = vpop.f32.mrf.mxu0
        %v1857 = vadd.f32 %v1786, %v1856
        %1858 = vmatmul.f32.gmra.mxu0 %v1108
        %v1859 = vpop.f32.mrf.mxu0
        %v1860 = vadd.f32 %v1789, %v1859
        %1861 = vmatmul.f32.gmra.mxu0 %v1110
        %v1862 = vpop.f32.mrf.mxu0
        %v1863 = vadd.f32 %v1792, %v1862
        %1864 = vmatmul.f32.gmra.mxu0 %v1112
        %v1865 = vpop.f32.mrf.mxu0
        %v1866 = vadd.f32 %v1795, %v1865
        %1867 = vmatmul.f32.gmra.mxu0 %v1114
        %v1868 = vpop.f32.mrf.mxu0
        %v1869 = vadd.f32 %v1798, %v1868
        %1870 = vmatmul.f32.gmra.mxu0 %v1116
        %v1871 = vpop.f32.mrf.mxu0
        %v1872 = vadd.f32 %v1801, %v1871
        %1873 = vmatmul.f32.gmra.mxu0 %v1118
        %v1874 = vpop.f32.mrf.mxu0
        %v1875 = vadd.f32 %v1804, %v1874
        %1876 = vmatmul.f32.gmra.mxu0 %v1120
        %v1877 = vpop.f32.mrf.mxu0
        %v1878 = vadd.f32 %v1807, %v1877
        %1879 = vmatmul.f32.gmra.mxu0 %v1122
        %v1880 = vpop.f32.mrf.mxu0
        %v1881 = vadd.f32 %v1810, %v1880
        %1882 = vmatmul.f32.gmra.mxu0 %v1124
        %v1883 = vpop.f32.mrf.mxu0
        %v1884 = vadd.f32 %v1813, %v1883
        %1885 = vmatmul.f32.gmra.mxu0 %v1126
        %v1886 = vpop.f32.mrf.mxu0
        %v1887 = vadd.f32 %v1816, %v1886
        %1888 = vmatmul.f32.gmra.mxu0 %v1128
        %v1889 = vpop.f32.mrf.mxu0
        %v1890 = vadd.f32 %v1819, %v1889
        %1891 = vmatmul.f32.gmra.mxu0 %v1130
        %v1892 = vpop.f32.mrf.mxu0
        %v1893 = vadd.f32 %v1822, %v1892
        %1894 = vmatmul.f32.gmra.mxu0 %v1132
        %v1895 = vpop.f32.mrf.mxu0
        %v1896 = vadd.f32 %v1825, %v1895
        %1897 = vmatmul.f32.gmra.mxu0 %v1134
        %v1898 = vpop.f32.mrf.mxu0
        %v1899 = vadd.f32 %v1828, %v1898
        %1900 = vmatmul.f32.gmra.mxu0 %v1136
        %v1901 = vpop.f32.mrf.mxu0
        %v1902 = vadd.f32 %v1831, %v1901
        %1903 = vmatmul.f32.gmra.mxu0 %v1138
        %v1904 = vpop.f32.mrf.mxu0
        %v1905 = vadd.f32 %v1834, %v1904
        %1906 = vdwg.mxu0
        %v1907 = vadd.f32 %v1139, %v1428
        %v1908 = vadd.f32 %v1140, %v1570
        %v1909 = vadd.f32 %v1141, %v1712
        %v1910 = vadd.f32 %v1142, %v1854
        %v1911 = vadd.f32 %v1143, %v1431
        %v1912 = vadd.f32 %v1144, %v1573
        %v1913 = vadd.f32 %v1145, %v1715
        %v1914 = vadd.f32 %v1146, %v1857
        %v1915 = vadd.f32 %v1147, %v1434
        %v1916 = vadd.f32 %v1148, %v1576
        %v1917 = vadd.f32 %v1149, %v1718
        %v1918 = vadd.f32 %v1150, %v1860
        %v1919 = vadd.f32 %v1151, %v1437
        %v1920 = vadd.f32 %v1152, %v1579
        %v1921 = vadd.f32 %v1153, %v1721
        %v1922 = vadd.f32 %v1154, %v1863
        %v1923 = vadd.f32 %v1155, %v1440
        %v1924 = vadd.f32 %v1156, %v1582
        %v1925 = vadd.f32 %v1157, %v1724
        %v1926 = vadd.f32 %v1158, %v1866
        %v1927 = vadd.f32 %v1159, %v1443
        %v1928 = vadd.f32 %v1160, %v1585
        %v1929 = vadd.f32 %v1161, %v1727
        %v1930 = vadd.f32 %v1162, %v1869
        %v1931 = vadd.f32 %v1163, %v1446
        %v1932 = vadd.f32 %v1164, %v1588
        %v1933 = vadd.f32 %v1165, %v1730
        %v1934 = vadd.f32 %v1166, %v1872
        %v1935 = vadd.f32 %v1167, %v1449
        %v1936 = vadd.f32 %v1168, %v1591
        %v1937 = vadd.f32 %v1169, %v1733
        %v1938 = vadd.f32 %v1170, %v1875
        %v1939 = vadd.f32 %v1171, %v1452
        %v1940 = vadd.f32 %v1172, %v1594
        %v1941 = vadd.f32 %v1173, %v1736
        %v1942 = vadd.f32 %v1174, %v1878
        %v1943 = vadd.f32 %v1175, %v1455
        %v1944 = vadd.f32 %v1176, %v1597
        %v1945 = vadd.f32 %v1177, %v1739
        %v1946 = vadd.f32 %v1178, %v1881
        %v1947 = vadd.f32 %v1179, %v1458
        %v1948 = vadd.f32 %v1180, %v1600
        %v1949 = vadd.f32 %v1181, %v1742
        %v1950 = vadd.f32 %v1182, %v1884
        %v1951 = vadd.f32 %v1183, %v1461
        %v1952 = vadd.f32 %v1184, %v1603
        %v1953 = vadd.f32 %v1185, %v1745
        %v1954 = vadd.f32 %v1186, %v1887
        %v1955 = vadd.f32 %v1187, %v1464
        %v1956 = vadd.f32 %v1188, %v1606
        %v1957 = vadd.f32 %v1189, %v1748
        %v1958 = vadd.f32 %v1190, %v1890
        %v1959 = vadd.f32 %v1191, %v1467
        %v1960 = vadd.f32 %v1192, %v1609
        %v1961 = vadd.f32 %v1193, %v1751
        %v1962 = vadd.f32 %v1194, %v1893
        %v1963 = vadd.f32 %v1195, %v1470
        %v1964 = vadd.f32 %v1196, %v1612
        %v1965 = vadd.f32 %v1197, %v1754
        %v1966 = vadd.f32 %v1198, %v1896
        %v1967 = vadd.f32 %v1199, %v1473
        %v1968 = vadd.f32 %v1200, %v1615
        %v1969 = vadd.f32 %v1201, %v1757
        %v1970 = vadd.f32 %v1202, %v1899
        %v1971 = vadd.f32 %v1203, %v1476
        %v1972 = vadd.f32 %v1204, %v1618
        %v1973 = vadd.f32 %v1205, %v1760
        %v1974 = vadd.f32 %v1206, %v1902
        %v1975 = vadd.f32 %v1207, %v1479
        %v1976 = vadd.f32 %v1208, %v1621
        %v1977 = vadd.f32 %v1209, %v1763
        %v1978 = vadd.f32 %v1210, %v1905
        %1979 = vst [vmem:[#allocation2] sm:$0xff] %v1907
        %1980 = vst [vmem:[#allocation2 + $0x8] sm:$0xff] %v1908
        %1981 = vst [vmem:[#allocation2 + $0x10] sm:$0xff] %v1909
        %1982 = vst [vmem:[#allocation2 + $0x18] sm:$0xff] %v1910
        %1983 = vst [vmem:[#allocation2 + $0x20] sm:$0xff] %v1911
        %1984 = vst [vmem:[#allocation2 + $0x28] sm:$0xff] %v1912
        %1985 = vst [vmem:[#allocation2 + $0x30] sm:$0xff] %v1913
        %1986 = vst [vmem:[#allocation2 + $0x38] sm:$0xff] %v1914
        %1987 = vst [vmem:[#allocation2 + $0x40] sm:$0xff] %v1915
        %1988 = vst [vmem:[#allocation2 + $0x48] sm:$0xff] %v1916
        %1989 = vst [vmem:[#allocation2 + $0x50] sm:$0xff] %v1917
        %1990 = vst [vmem:[#allocation2 + $0x58] sm:$0xff] %v1918
        %1991 = vst [vmem:[#allocation2 + $0x60] sm:$0xff] %v1919
        %1992 = vst [vmem:[#allocation2 + $0x68] sm:$0xff] %v1920
        %1993 = vst [vmem:[#allocation2 + $0x70] sm:$0xff] %v1921
        %1994 = vst [vmem:[#allocation2 + $0x78] sm:$0xff] %v1922
        %1995 = vst [vmem:[#allocation2 + $0x80] sm:$0xff] %v1923
        %1996 = vst [vmem:[#allocation2 + $0x88] sm:$0xff] %v1924
        %1997 = vst [vmem:[#allocation2 + $0x90] sm:$0xff] %v1925
        %1998 = vst [vmem:[#allocation2 + $0x98] sm:$0xff] %v1926
        %1999 = vst [vmem:[#allocation2 + $0xa0] sm:$0xff] %v1927
        %2000 = vst [vmem:[#allocation2 + $0xa8] sm:$0xff] %v1928
        %2001 = vst [vmem:[#allocation2 + $0xb0] sm:$0xff] %v1929
        %2002 = vst [vmem:[#allocation2 + $0xb8] sm:$0xff] %v1930
        %2003 = vst [vmem:[#allocation2 + $0xc0] sm:$0xff] %v1931
        %2004 = vst [vmem:[#allocation2 + $0xc8] sm:$0xff] %v1932
        %2005 = vst [vmem:[#allocation2 + $0xd0] sm:$0xff] %v1933
        %2006 = vst [vmem:[#allocation2 + $0xd8] sm:$0xff] %v1934
        %2007 = vst [vmem:[#allocation2 + $0xe0] sm:$0xff] %v1935
        %2008 = vst [vmem:[#allocation2 + $0xe8] sm:$0xff] %v1936
        %2009 = vst [vmem:[#allocation2 + $0xf0] sm:$0xff] %v1937
        %2010 = vst [vmem:[#allocation2 + $0xf8] sm:$0xff] %v1938
        %2011 = vst [vmem:[#allocation2 + $0x100] sm:$0xff] %v1939
        %2012 = vst [vmem:[#allocation2 + $0x108] sm:$0xff] %v1940
        %2013 = vst [vmem:[#allocation2 + $0x110] sm:$0xff] %v1941
        %2014 = vst [vmem:[#allocation2 + $0x118] sm:$0xff] %v1942
        %2015 = vst [vmem:[#allocation2 + $0x120] sm:$0xff] %v1943
        %2016 = vst [vmem:[#allocation2 + $0x128] sm:$0xff] %v1944
        %2017 = vst [vmem:[#allocation2 + $0x130] sm:$0xff] %v1945
        %2018 = vst [vmem:[#allocation2 + $0x138] sm:$0xff] %v1946
        %2019 = vst [vmem:[#allocation2 + $0x140] sm:$0xff] %v1947
        %2020 = vst [vmem:[#allocation2 + $0x148] sm:$0xff] %v1948
        %2021 = vst [vmem:[#allocation2 + $0x150] sm:$0xff] %v1949
        %2022 = vst [vmem:[#allocation2 + $0x158] sm:$0xff] %v1950
        %2023 = vst [vmem:[#allocation2 + $0x160] sm:$0xff] %v1951
        %2024 = vst [vmem:[#allocation2 + $0x168] sm:$0xff] %v1952
        %2025 = vst [vmem:[#allocation2 + $0x170] sm:$0xff] %v1953
        %2026 = vst [vmem:[#allocation2 + $0x178] sm:$0xff] %v1954
        %2027 = vst [vmem:[#allocation2 + $0x180] sm:$0xff] %v1955
        %2028 = vst [vmem:[#allocation2 + $0x188] sm:$0xff] %v1956
        %2029 = vst [vmem:[#allocation2 + $0x190] sm:$0xff] %v1957
        %2030 = vst [vmem:[#allocation2 + $0x198] sm:$0xff] %v1958
        %2031 = vst [vmem:[#allocation2 + $0x1a0] sm:$0xff] %v1959
        %2032 = vst [vmem:[#allocation2 + $0x1a8] sm:$0xff] %v1960
        %2033 = vst [vmem:[#allocation2 + $0x1b0] sm:$0xff] %v1961
        %2034 = vst [vmem:[#allocation2 + $0x1b8] sm:$0xff] %v1962
        %2035 = vst [vmem:[#allocation2 + $0x1c0] sm:$0xff] %v1963
        %2036 = vst [vmem:[#allocation2 + $0x1c8] sm:$0xff] %v1964
        %2037 = vst [vmem:[#allocation2 + $0x1d0] sm:$0xff] %v1965
        %2038 = vst [vmem:[#allocation2 + $0x1d8] sm:$0xff] %v1966
        %2039 = vst [vmem:[#allocation2 + $0x1e0] sm:$0xff] %v1967
        %2040 = vst [vmem:[#allocation2 + $0x1e8] sm:$0xff] %v1968
        %2041 = vst [vmem:[#allocation2 + $0x1f0] sm:$0xff] %v1969
        %2042 = vst [vmem:[#allocation2 + $0x1f8] sm:$0xff] %v1970
        %2043 = vst [vmem:[#allocation2 + $0x200] sm:$0xff] %v1971
        %2044 = vst [vmem:[#allocation2 + $0x208] sm:$0xff] %v1972
        %2045 = vst [vmem:[#allocation2 + $0x210] sm:$0xff] %v1973
        %2046 = vst [vmem:[#allocation2 + $0x218] sm:$0xff] %v1974
        %2047 = vst [vmem:[#allocation2 + $0x220] sm:$0xff] %v1975
        %2048 = vst [vmem:[#allocation2 + $0x228] sm:$0xff] %v1976
        %2049 = vst [vmem:[#allocation2 + $0x230] sm:$0xff] %v1977
        %2050 = vst [vmem:[#allocation2 + $0x238] sm:$0xff] %v1978
        %p2051 = scmp.eq.s32.totalorder %s29, 2
        // Predicated region
        $region69: #{tpu_custom_call.1} parent=39 // pred_check
          %p2052 = pneg %p2051
        $region70: #{tpu_custom_call.1} parent=39 // pred_check_branch
          %2054 = sbr.rel (%p2052) target = $region72
        $region71: #{tpu_custom_call.1} parent=39 // pred_region
          %v2055 = vld [vmem:[#allocation3] sm:$0xff]
          %v2056 = vld [vmem:[#allocation3 + $0x8] sm:$0xff]
          %v2057 = vld [vmem:[#allocation3 + $0x10] sm:$0xff]
          %v2058 = vld [vmem:[#allocation3 + $0x18] sm:$0xff]
          %v2059 = vld [vmem:[#allocation3 + $0x20] sm:$0xff]
          %v2060 = vld [vmem:[#allocation3 + $0x28] sm:$0xff]
          %v2061 = vld [vmem:[#allocation3 + $0x30] sm:$0xff]
          %v2062 = vld [vmem:[#allocation3 + $0x38] sm:$0xff]
          %v2063 = vld [vmem:[#allocation3 + $0x40] sm:$0xff]
          %v2064 = vld [vmem:[#allocation3 + $0x48] sm:$0xff]
          %v2065 = vld [vmem:[#allocation3 + $0x50] sm:$0xff]
          %v2066 = vld [vmem:[#allocation3 + $0x58] sm:$0xff]
          %v2067 = vld [vmem:[#allocation3 + $0x60] sm:$0xff]
          %v2068 = vld [vmem:[#allocation3 + $0x68] sm:$0xff]
          %v2069 = vld [vmem:[#allocation3 + $0x70] sm:$0xff]
          %v2070 = vld [vmem:[#allocation3 + $0x78] sm:$0xff]
          %v2071 = vld [vmem:[#allocation3 + $0x80] sm:$0xff]
          %v2072 = vld [vmem:[#allocation3 + $0x88] sm:$0xff]
          %v2073 = vld [vmem:[#allocation12] sm:$0xff]
          %v2074 = vld [vmem:[#allocation12 + $0x8] sm:$0xff]
          %v2075 = vld [vmem:[#allocation12 + $0x10] sm:$0xff]
          %v2076 = vld [vmem:[#allocation12 + $0x18] sm:$0xff]
          %v2077 = vld [vmem:[#allocation12 + $0x20] sm:$0xff]
          %v2078 = vld [vmem:[#allocation12 + $0x28] sm:$0xff]
          %v2079 = vld [vmem:[#allocation12 + $0x30] sm:$0xff]
          %v2080 = vld [vmem:[#allocation12 + $0x38] sm:$0xff]
          %v2081 = vld [vmem:[#allocation12 + $0x40] sm:$0xff]
          %v2082 = vld [vmem:[#allocation12 + $0x48] sm:$0xff]
          %v2083 = vld [vmem:[#allocation12 + $0x50] sm:$0xff]
          %v2084 = vld [vmem:[#allocation12 + $0x58] sm:$0xff]
          %v2085 = vld [vmem:[#allocation12 + $0x60] sm:$0xff]
          %v2086 = vld [vmem:[#allocation12 + $0x68] sm:$0xff]
          %v2087 = vld [vmem:[#allocation12 + $0x70] sm:$0xff]
          %v2088 = vld [vmem:[#allocation12 + $0x78] sm:$0xff]
          %v2089 = vld [vmem:[#allocation12 + $0x80] sm:$0xff]
          %v2090 = vld [vmem:[#allocation12 + $0x88] sm:$0xff]
          %v2091 = vld [vmem:[#allocation12 + $0x90] sm:$0xff]
          %v2092 = vld [vmem:[#allocation12 + $0x98] sm:$0xff]
          %v2093 = vld [vmem:[#allocation12 + $0xa0] sm:$0xff]
          %v2094 = vld [vmem:[#allocation12 + $0xa8] sm:$0xff]
          %v2095 = vld [vmem:[#allocation12 + $0xb0] sm:$0xff]
          %v2096 = vld [vmem:[#allocation12 + $0xb8] sm:$0xff]
          %v2097 = vld [vmem:[#allocation12 + $0xc0] sm:$0xff]
          %v2098 = vld [vmem:[#allocation12 + $0xc8] sm:$0xff]
          %v2099 = vld [vmem:[#allocation12 + $0xd0] sm:$0xff]
          %v2100 = vld [vmem:[#allocation12 + $0xd8] sm:$0xff]
          %v2101 = vld [vmem:[#allocation12 + $0xe0] sm:$0xff]
          %v2102 = vld [vmem:[#allocation12 + $0xe8] sm:$0xff]
          %v2103 = vld [vmem:[#allocation12 + $0xf0] sm:$0xff]
          %v2104 = vld [vmem:[#allocation12 + $0xf8] sm:$0xff]
          %v2105 = vld [vmem:[#allocation12 + $0x100] sm:$0xff]
          %v2106 = vld [vmem:[#allocation12 + $0x108] sm:$0xff]
          %v2107 = vld [vmem:[#allocation12 + $0x110] sm:$0xff]
          %v2108 = vld [vmem:[#allocation12 + $0x118] sm:$0xff]
          %v2109 = vld [vmem:[#allocation12 + $0x120] sm:$0xff]
          %v2110 = vld [vmem:[#allocation12 + $0x128] sm:$0xff]
          %v2111 = vld [vmem:[#allocation12 + $0x130] sm:$0xff]
          %v2112 = vld [vmem:[#allocation12 + $0x138] sm:$0xff]
          %v2113 = vld [vmem:[#allocation12 + $0x140] sm:$0xff]
          %v2114 = vld [vmem:[#allocation12 + $0x148] sm:$0xff]
          %v2115 = vld [vmem:[#allocation12 + $0x150] sm:$0xff]
          %v2116 = vld [vmem:[#allocation12 + $0x158] sm:$0xff]
          %v2117 = vld [vmem:[#allocation12 + $0x160] sm:$0xff]
          %v2118 = vld [vmem:[#allocation12 + $0x168] sm:$0xff]
          %v2119 = vld [vmem:[#allocation12 + $0x170] sm:$0xff]
          %v2120 = vld [vmem:[#allocation12 + $0x178] sm:$0xff]
          %v2121 = vld [vmem:[#allocation12 + $0x180] sm:$0xff]
          %v2122 = vld [vmem:[#allocation12 + $0x188] sm:$0xff]
          %v2123 = vld [vmem:[#allocation12 + $0x190] sm:$0xff]
          %v2124 = vld [vmem:[#allocation12 + $0x198] sm:$0xff]
          %v2125 = vld [vmem:[#allocation12 + $0x1a0] sm:$0xff]
          %v2126 = vld [vmem:[#allocation12 + $0x1a8] sm:$0xff]
          %v2127 = vld [vmem:[#allocation12 + $0x1b0] sm:$0xff]
          %v2128 = vld [vmem:[#allocation12 + $0x1b8] sm:$0xff]
          %v2129 = vld [vmem:[#allocation12 + $0x1c0] sm:$0xff]
          %v2130 = vld [vmem:[#allocation12 + $0x1c8] sm:$0xff]
          %v2131 = vld [vmem:[#allocation12 + $0x1d0] sm:$0xff]
          %v2132 = vld [vmem:[#allocation12 + $0x1d8] sm:$0xff]
          %v2133 = vld [vmem:[#allocation12 + $0x1e0] sm:$0xff]
          %v2134 = vld [vmem:[#allocation12 + $0x1e8] sm:$0xff]
          %v2135 = vld [vmem:[#allocation12 + $0x1f0] sm:$0xff]
          %v2136 = vld [vmem:[#allocation12 + $0x1f8] sm:$0xff]
          %2137 = vmatpush.xpose.msra.mxu0 %v2088
          %2138 = vmatpush.xpose.msra.mxu0 %v2087
          %2139 = vmatpush.xpose.msra.mxu0 %v2086
          %2140 = vmatpush.xpose.msra.mxu0 %v2085
          %2141 = vmatpush.xpose.msra.mxu0 %v2084
          %2142 = vmatpush.xpose.msra.mxu0 %v2083
          %2143 = vmatpush.xpose.msra.mxu0 %v2082
          %2144 = vmatpush.xpose.msra.mxu0 %v2081
          %2145 = vmatpush.xpose.msra.mxu0 %v2080
          %2146 = vmatpush.xpose.msra.mxu0 %v2079
          %2147 = vmatpush.xpose.msra.mxu0 %v2078
          %2148 = vmatpush.xpose.msra.mxu0 %v2077
          %2149 = vmatpush.xpose.msra.mxu0 %v2076
          %2150 = vmatpush.xpose.msra.mxu0 %v2075
          %2151 = vmatpush.xpose.msra.mxu0 %v2074
          %2152 = vmatpush.xpose.msra.mxu0 %v2073
          %2153 = vmatmul.f32.gmra.mxu0 %v2055
          %v2154 = vpop.f32.mrf.mxu0
          %v2155 = vadd.f32 0.0, %v2154
          %2156 = vmatmul.f32.gmra.mxu0 %v2056
          %v2157 = vpop.f32.mrf.mxu0
          %v2158 = vadd.f32 0.0, %v2157
          %2159 = vmatmul.f32.gmra.mxu0 %v2057
          %v2160 = vpop.f32.mrf.mxu0
          %v2161 = vadd.f32 0.0, %v2160
          %2162 = vmatmul.f32.gmra.mxu0 %v2058
          %v2163 = vpop.f32.mrf.mxu0
          %v2164 = vadd.f32 0.0, %v2163
          %2165 = vmatmul.f32.gmra.mxu0 %v2059
          %v2166 = vpop.f32.mrf.mxu0
          %v2167 = vadd.f32 0.0, %v2166
          %2168 = vmatmul.f32.gmra.mxu0 %v2060
          %v2169 = vpop.f32.mrf.mxu0
          %v2170 = vadd.f32 0.0, %v2169
          %2171 = vmatmul.f32.gmra.mxu0 %v2061
          %v2172 = vpop.f32.mrf.mxu0
          %v2173 = vadd.f32 0.0, %v2172
          %2174 = vmatmul.f32.gmra.mxu0 %v2062
          %v2175 = vpop.f32.mrf.mxu0
          %v2176 = vadd.f32 0.0, %v2175
          %2177 = vmatmul.f32.gmra.mxu0 %v2063
          %v2178 = vpop.f32.mrf.mxu0
          %v2179 = vadd.f32 0.0, %v2178
          %2180 = vmatmul.f32.gmra.mxu0 %v2064
          %v2181 = vpop.f32.mrf.mxu0
          %v2182 = vadd.f32 0.0, %v2181
          %2183 = vmatmul.f32.gmra.mxu0 %v2065
          %v2184 = vpop.f32.mrf.mxu0
          %v2185 = vadd.f32 0.0, %v2184
          %2186 = vmatmul.f32.gmra.mxu0 %v2066
          %v2187 = vpop.f32.mrf.mxu0
          %v2188 = vadd.f32 0.0, %v2187
          %2189 = vmatmul.f32.gmra.mxu0 %v2067
          %v2190 = vpop.f32.mrf.mxu0
          %v2191 = vadd.f32 0.0, %v2190
          %2192 = vmatmul.f32.gmra.mxu0 %v2068
          %v2193 = vpop.f32.mrf.mxu0
          %v2194 = vadd.f32 0.0, %v2193
          %2195 = vmatmul.f32.gmra.mxu0 %v2069
          %v2196 = vpop.f32.mrf.mxu0
          %v2197 = vadd.f32 0.0, %v2196
          %2198 = vmatmul.f32.gmra.mxu0 %v2070
          %v2199 = vpop.f32.mrf.mxu0
          %v2200 = vadd.f32 0.0, %v2199
          %2201 = vmatmul.f32.gmra.mxu0 %v2071
          %v2202 = vpop.f32.mrf.mxu0
          %v2203 = vadd.f32 0.0, %v2202
          %2204 = vmatmul.f32.gmra.mxu0 %v2072
          %v2205 = vpop.f32.mrf.mxu0
          %v2206 = vadd.f32 0.0, %v2205
          %2207 = vdwg.mxu0
          %2208 = vmatpush.xpose.msra.mxu0 %v2104
          %2209 = vmatpush.xpose.msra.mxu0 %v2103
          %2210 = vmatpush.xpose.msra.mxu0 %v2102
          %2211 = vmatpush.xpose.msra.mxu0 %v2101
          %2212 = vmatpush.xpose.msra.mxu0 %v2100
          %2213 = vmatpush.xpose.msra.mxu0 %v2099
          %2214 = vmatpush.xpose.msra.mxu0 %v2098
          %2215 = vmatpush.xpose.msra.mxu0 %v2097
          %2216 = vmatpush.xpose.msra.mxu0 %v2096
          %2217 = vmatpush.xpose.msra.mxu0 %v2095
          %2218 = vmatpush.xpose.msra.mxu0 %v2094
          %2219 = vmatpush.xpose.msra.mxu0 %v2093
          %2220 = vmatpush.xpose.msra.mxu0 %v2092
          %2221 = vmatpush.xpose.msra.mxu0 %v2091
          %2222 = vmatpush.xpose.msra.mxu0 %v2090
          %2223 = vmatpush.xpose.msra.mxu0 %v2089
          %2224 = vmatmul.f32.gmra.mxu0 %v2055
          %v2225 = vpop.f32.mrf.mxu0
          %v2226 = vadd.f32 0.0, %v2225
          %2227 = vmatmul.f32.gmra.mxu0 %v2056
          %v2228 = vpop.f32.mrf.mxu0
          %v2229 = vadd.f32 0.0, %v2228
          %2230 = vmatmul.f32.gmra.mxu0 %v2057
          %v2231 = vpop.f32.mrf.mxu0
          %v2232 = vadd.f32 0.0, %v2231
          %2233 = vmatmul.f32.gmra.mxu0 %v2058
          %v2234 = vpop.f32.mrf.mxu0
          %v2235 = vadd.f32 0.0, %v2234
          %2236 = vmatmul.f32.gmra.mxu0 %v2059
          %v2237 = vpop.f32.mrf.mxu0
          %v2238 = vadd.f32 0.0, %v2237
          %2239 = vmatmul.f32.gmra.mxu0 %v2060
          %v2240 = vpop.f32.mrf.mxu0
          %v2241 = vadd.f32 0.0, %v2240
          %2242 = vmatmul.f32.gmra.mxu0 %v2061
          %v2243 = vpop.f32.mrf.mxu0
          %v2244 = vadd.f32 0.0, %v2243
          %2245 = vmatmul.f32.gmra.mxu0 %v2062
          %v2246 = vpop.f32.mrf.mxu0
          %v2247 = vadd.f32 0.0, %v2246
          %2248 = vmatmul.f32.gmra.mxu0 %v2063
          %v2249 = vpop.f32.mrf.mxu0
          %v2250 = vadd.f32 0.0, %v2249
          %2251 = vmatmul.f32.gmra.mxu0 %v2064
          %v2252 = vpop.f32.mrf.mxu0
          %v2253 = vadd.f32 0.0, %v2252
          %2254 = vmatmul.f32.gmra.mxu0 %v2065
          %v2255 = vpop.f32.mrf.mxu0
          %v2256 = vadd.f32 0.0, %v2255
          %2257 = vmatmul.f32.gmra.mxu0 %v2066
          %v2258 = vpop.f32.mrf.mxu0
          %v2259 = vadd.f32 0.0, %v2258
          %2260 = vmatmul.f32.gmra.mxu0 %v2067
          %v2261 = vpop.f32.mrf.mxu0
          %v2262 = vadd.f32 0.0, %v2261
          %2263 = vmatmul.f32.gmra.mxu0 %v2068
          %v2264 = vpop.f32.mrf.mxu0
          %v2265 = vadd.f32 0.0, %v2264
          %2266 = vmatmul.f32.gmra.mxu0 %v2069
          %v2267 = vpop.f32.mrf.mxu0
          %v2268 = vadd.f32 0.0, %v2267
          %2269 = vmatmul.f32.gmra.mxu0 %v2070
          %v2270 = vpop.f32.mrf.mxu0
          %v2271 = vadd.f32 0.0, %v2270
          %2272 = vmatmul.f32.gmra.mxu0 %v2071
          %v2273 = vpop.f32.mrf.mxu0
          %v2274 = vadd.f32 0.0, %v2273
          %2275 = vmatmul.f32.gmra.mxu0 %v2072
          %v2276 = vpop.f32.mrf.mxu0
          %v2277 = vadd.f32 0.0, %v2276
          %2278 = vdwg.mxu0
          %2279 = vmatpush.xpose.msra.mxu0 %v2120
          %2280 = vmatpush.xpose.msra.mxu0 %v2119
          %2281 = vmatpush.xpose.msra.mxu0 %v2118
          %2282 = vmatpush.xpose.msra.mxu0 %v2117
          %2283 = vmatpush.xpose.msra.mxu0 %v2116
          %2284 = vmatpush.xpose.msra.mxu0 %v2115
          %2285 = vmatpush.xpose.msra.mxu0 %v2114
          %2286 = vmatpush.xpose.msra.mxu0 %v2113
          %2287 = vmatpush.xpose.msra.mxu0 %v2112
          %2288 = vmatpush.xpose.msra.mxu0 %v2111
          %2289 = vmatpush.xpose.msra.mxu0 %v2110
          %2290 = vmatpush.xpose.msra.mxu0 %v2109
          %2291 = vmatpush.xpose.msra.mxu0 %v2108
          %2292 = vmatpush.xpose.msra.mxu0 %v2107
          %2293 = vmatpush.xpose.msra.mxu0 %v2106
          %2294 = vmatpush.xpose.msra.mxu0 %v2105
          %2295 = vmatmul.f32.gmra.mxu0 %v2055
          %v2296 = vpop.f32.mrf.mxu0
          %v2297 = vadd.f32 0.0, %v2296
          %2298 = vmatmul.f32.gmra.mxu0 %v2056
          %v2299 = vpop.f32.mrf.mxu0
          %v2300 = vadd.f32 0.0, %v2299
          %2301 = vmatmul.f32.gmra.mxu0 %v2057
          %v2302 = vpop.f32.mrf.mxu0
          %v2303 = vadd.f32 0.0, %v2302
          %2304 = vmatmul.f32.gmra.mxu0 %v2058
          %v2305 = vpop.f32.mrf.mxu0
          %v2306 = vadd.f32 0.0, %v2305
          %2307 = vmatmul.f32.gmra.mxu0 %v2059
          %v2308 = vpop.f32.mrf.mxu0
          %v2309 = vadd.f32 0.0, %v2308
          %2310 = vmatmul.f32.gmra.mxu0 %v2060
          %v2311 = vpop.f32.mrf.mxu0
          %v2312 = vadd.f32 0.0, %v2311
          %2313 = vmatmul.f32.gmra.mxu0 %v2061
          %v2314 = vpop.f32.mrf.mxu0
          %v2315 = vadd.f32 0.0, %v2314
          %2316 = vmatmul.f32.gmra.mxu0 %v2062
          %v2317 = vpop.f32.mrf.mxu0
          %v2318 = vadd.f32 0.0, %v2317
          %2319 = vmatmul.f32.gmra.mxu0 %v2063
          %v2320 = vpop.f32.mrf.mxu0
          %v2321 = vadd.f32 0.0, %v2320
          %2322 = vmatmul.f32.gmra.mxu0 %v2064
          %v2323 = vpop.f32.mrf.mxu0
          %v2324 = vadd.f32 0.0, %v2323
          %2325 = vmatmul.f32.gmra.mxu0 %v2065
          %v2326 = vpop.f32.mrf.mxu0
          %v2327 = vadd.f32 0.0, %v2326
          %2328 = vmatmul.f32.gmra.mxu0 %v2066
          %v2329 = vpop.f32.mrf.mxu0
          %v2330 = vadd.f32 0.0, %v2329
          %2331 = vmatmul.f32.gmra.mxu0 %v2067
          %v2332 = vpop.f32.mrf.mxu0
          %v2333 = vadd.f32 0.0, %v2332
          %2334 = vmatmul.f32.gmra.mxu0 %v2068
          %v2335 = vpop.f32.mrf.mxu0
          %v2336 = vadd.f32 0.0, %v2335
          %2337 = vmatmul.f32.gmra.mxu0 %v2069
          %v2338 = vpop.f32.mrf.mxu0
          %v2339 = vadd.f32 0.0, %v2338
          %2340 = vmatmul.f32.gmra.mxu0 %v2070
          %v2341 = vpop.f32.mrf.mxu0
          %v2342 = vadd.f32 0.0, %v2341
          %2343 = vmatmul.f32.gmra.mxu0 %v2071
          %v2344 = vpop.f32.mrf.mxu0
          %v2345 = vadd.f32 0.0, %v2344
          %2346 = vmatmul.f32.gmra.mxu0 %v2072
          %v2347 = vpop.f32.mrf.mxu0
          %v2348 = vadd.f32 0.0, %v2347
          %2349 = vdwg.mxu0
          %2350 = vmatpush.xpose.msra.mxu0 %v2136
          %2351 = vmatpush.xpose.msra.mxu0 %v2135
          %2352 = vmatpush.xpose.msra.mxu0 %v2134
          %2353 = vmatpush.xpose.msra.mxu0 %v2133
          %2354 = vmatpush.xpose.msra.mxu0 %v2132
          %2355 = vmatpush.xpose.msra.mxu0 %v2131
          %2356 = vmatpush.xpose.msra.mxu0 %v2130
          %2357 = vmatpush.xpose.msra.mxu0 %v2129
          %2358 = vmatpush.xpose.msra.mxu0 %v2128
          %2359 = vmatpush.xpose.msra.mxu0 %v2127
          %2360 = vmatpush.xpose.msra.mxu0 %v2126
          %2361 = vmatpush.xpose.msra.mxu0 %v2125
          %2362 = vmatpush.xpose.msra.mxu0 %v2124
          %2363 = vmatpush.xpose.msra.mxu0 %v2123
          %2364 = vmatpush.xpose.msra.mxu0 %v2122
          %2365 = vmatpush.xpose.msra.mxu0 %v2121
          %2366 = vmatmul.f32.gmra.mxu0 %v2055
          %v2367 = vpop.f32.mrf.mxu0
          %v2368 = vadd.f32 0.0, %v2367
          %2369 = vmatmul.f32.gmra.mxu0 %v2056
          %v2370 = vpop.f32.mrf.mxu0
          %v2371 = vadd.f32 0.0, %v2370
          %2372 = vmatmul.f32.gmra.mxu0 %v2057
          %v2373 = vpop.f32.mrf.mxu0
          %v2374 = vadd.f32 0.0, %v2373
          %2375 = vmatmul.f32.gmra.mxu0 %v2058
          %v2376 = vpop.f32.mrf.mxu0
          %v2377 = vadd.f32 0.0, %v2376
          %2378 = vmatmul.f32.gmra.mxu0 %v2059
          %v2379 = vpop.f32.mrf.mxu0
          %v2380 = vadd.f32 0.0, %v2379
          %2381 = vmatmul.f32.gmra.mxu0 %v2060
          %v2382 = vpop.f32.mrf.mxu0
          %v2383 = vadd.f32 0.0, %v2382
          %2384 = vmatmul.f32.gmra.mxu0 %v2061
          %v2385 = vpop.f32.mrf.mxu0
          %v2386 = vadd.f32 0.0, %v2385
          %2387 = vmatmul.f32.gmra.mxu0 %v2062
          %v2388 = vpop.f32.mrf.mxu0
          %v2389 = vadd.f32 0.0, %v2388
          %2390 = vmatmul.f32.gmra.mxu0 %v2063
          %v2391 = vpop.f32.mrf.mxu0
          %v2392 = vadd.f32 0.0, %v2391
          %2393 = vmatmul.f32.gmra.mxu0 %v2064
          %v2394 = vpop.f32.mrf.mxu0
          %v2395 = vadd.f32 0.0, %v2394
          %2396 = vmatmul.f32.gmra.mxu0 %v2065
          %v2397 = vpop.f32.mrf.mxu0
          %v2398 = vadd.f32 0.0, %v2397
          %2399 = vmatmul.f32.gmra.mxu0 %v2066
          %v2400 = vpop.f32.mrf.mxu0
          %v2401 = vadd.f32 0.0, %v2400
          %2402 = vmatmul.f32.gmra.mxu0 %v2067
          %v2403 = vpop.f32.mrf.mxu0
          %v2404 = vadd.f32 0.0, %v2403
          %2405 = vmatmul.f32.gmra.mxu0 %v2068
          %v2406 = vpop.f32.mrf.mxu0
          %v2407 = vadd.f32 0.0, %v2406
          %2408 = vmatmul.f32.gmra.mxu0 %v2069
          %v2409 = vpop.f32.mrf.mxu0
          %v2410 = vadd.f32 0.0, %v2409
          %2411 = vmatmul.f32.gmra.mxu0 %v2070
          %v2412 = vpop.f32.mrf.mxu0
          %v2413 = vadd.f32 0.0, %v2412
          %2414 = vmatmul.f32.gmra.mxu0 %v2071
          %v2415 = vpop.f32.mrf.mxu0
          %v2416 = vadd.f32 0.0, %v2415
          %2417 = vmatmul.f32.gmra.mxu0 %v2072
          %v2418 = vpop.f32.mrf.mxu0
          %v2419 = vadd.f32 0.0, %v2418
          %2420 = vdwg.mxu0
          %v2421 = vld [vmem:[#allocation2] sm:$0xff]
          %v2422 = vld [vmem:[#allocation2 + $0x8] sm:$0xff]
          %v2423 = vld [vmem:[#allocation2 + $0x10] sm:$0xff]
          %v2424 = vld [vmem:[#allocation2 + $0x18] sm:$0xff]
          %v2425 = vld [vmem:[#allocation2 + $0x20] sm:$0xff]
          %v2426 = vld [vmem:[#allocation2 + $0x28] sm:$0xff]
          %v2427 = vld [vmem:[#allocation2 + $0x30] sm:$0xff]
          %v2428 = vld [vmem:[#allocation2 + $0x38] sm:$0xff]
          %v2429 = vld [vmem:[#allocation2 + $0x40] sm:$0xff]
          %v2430 = vld [vmem:[#allocation2 + $0x48] sm:$0xff]
          %v2431 = vld [vmem:[#allocation2 + $0x50] sm:$0xff]
          %v2432 = vld [vmem:[#allocation2 + $0x58] sm:$0xff]
          %v2433 = vld [vmem:[#allocation2 + $0x60] sm:$0xff]
          %v2434 = vld [vmem:[#allocation2 + $0x68] sm:$0xff]
          %v2435 = vld [vmem:[#allocation2 + $0x70] sm:$0xff]
          %v2436 = vld [vmem:[#allocation2 + $0x78] sm:$0xff]
          %v2437 = vld [vmem:[#allocation2 + $0x80] sm:$0xff]
          %v2438 = vld [vmem:[#allocation2 + $0x88] sm:$0xff]
          %v2439 = vld [vmem:[#allocation2 + $0x90] sm:$0xff]
          %v2440 = vld [vmem:[#allocation2 + $0x98] sm:$0xff]
          %v2441 = vld [vmem:[#allocation2 + $0xa0] sm:$0xff]
          %v2442 = vld [vmem:[#allocation2 + $0xa8] sm:$0xff]
          %v2443 = vld [vmem:[#allocation2 + $0xb0] sm:$0xff]
          %v2444 = vld [vmem:[#allocation2 + $0xb8] sm:$0xff]
          %v2445 = vld [vmem:[#allocation2 + $0xc0] sm:$0xff]
          %v2446 = vld [vmem:[#allocation2 + $0xc8] sm:$0xff]
          %v2447 = vld [vmem:[#allocation2 + $0xd0] sm:$0xff]
          %v2448 = vld [vmem:[#allocation2 + $0xd8] sm:$0xff]
          %v2449 = vld [vmem:[#allocation2 + $0xe0] sm:$0xff]
          %v2450 = vld [vmem:[#allocation2 + $0xe8] sm:$0xff]
          %v2451 = vld [vmem:[#allocation2 + $0xf0] sm:$0xff]
          %v2452 = vld [vmem:[#allocation2 + $0xf8] sm:$0xff]
          %v2453 = vld [vmem:[#allocation2 + $0x100] sm:$0xff]
          %v2454 = vld [vmem:[#allocation2 + $0x108] sm:$0xff]
          %v2455 = vld [vmem:[#allocation2 + $0x110] sm:$0xff]
          %v2456 = vld [vmem:[#allocation2 + $0x118] sm:$0xff]
          %v2457 = vld [vmem:[#allocation2 + $0x120] sm:$0xff]
          %v2458 = vld [vmem:[#allocation2 + $0x128] sm:$0xff]
          %v2459 = vld [vmem:[#allocation2 + $0x130] sm:$0xff]
          %v2460 = vld [vmem:[#allocation2 + $0x138] sm:$0xff]
          %v2461 = vld [vmem:[#allocation2 + $0x140] sm:$0xff]
          %v2462 = vld [vmem:[#allocation2 + $0x148] sm:$0xff]
          %v2463 = vld [vmem:[#allocation2 + $0x150] sm:$0xff]
          %v2464 = vld [vmem:[#allocation2 + $0x158] sm:$0xff]
          %v2465 = vld [vmem:[#allocation2 + $0x160] sm:$0xff]
          %v2466 = vld [vmem:[#allocation2 + $0x168] sm:$0xff]
          %v2467 = vld [vmem:[#allocation2 + $0x170] sm:$0xff]
          %v2468 = vld [vmem:[#allocation2 + $0x178] sm:$0xff]
          %v2469 = vld [vmem:[#allocation2 + $0x180] sm:$0xff]
          %v2470 = vld [vmem:[#allocation2 + $0x188] sm:$0xff]
          %v2471 = vld [vmem:[#allocation2 + $0x190] sm:$0xff]
          %v2472 = vld [vmem:[#allocation2 + $0x198] sm:$0xff]
          %v2473 = vld [vmem:[#allocation2 + $0x1a0] sm:$0xff]
          %v2474 = vld [vmem:[#allocation2 + $0x1a8] sm:$0xff]
          %v2475 = vld [vmem:[#allocation2 + $0x1b0] sm:$0xff]
          %v2476 = vld [vmem:[#allocation2 + $0x1b8] sm:$0xff]
          %v2477 = vld [vmem:[#allocation2 + $0x1c0] sm:$0xff]
          %v2478 = vld [vmem:[#allocation2 + $0x1c8] sm:$0xff]
          %v2479 = vld [vmem:[#allocation2 + $0x1d0] sm:$0xff]
          %v2480 = vld [vmem:[#allocation2 + $0x1d8] sm:$0xff]
          %v2481 = vld [vmem:[#allocation2 + $0x1e0] sm:$0xff]
          %v2482 = vld [vmem:[#allocation2 + $0x1e8] sm:$0xff]
          %v2483 = vld [vmem:[#allocation2 + $0x1f0] sm:$0xff]
          %v2484 = vld [vmem:[#allocation2 + $0x1f8] sm:$0xff]
          %v2485 = vld [vmem:[#allocation2 + $0x200] sm:$0xff]
          %v2486 = vld [vmem:[#allocation2 + $0x208] sm:$0xff]
          %v2487 = vld [vmem:[#allocation2 + $0x210] sm:$0xff]
          %v2488 = vld [vmem:[#allocation2 + $0x218] sm:$0xff]
          %v2489 = vld [vmem:[#allocation2 + $0x220] sm:$0xff]
          %v2490 = vld [vmem:[#allocation2 + $0x228] sm:$0xff]
          %v2491 = vld [vmem:[#allocation2 + $0x230] sm:$0xff]
          %v2492 = vld [vmem:[#allocation2 + $0x238] sm:$0xff]
          %v2493 = vadd.f32 %v2421, %v2155
          %v2494 = vadd.f32 %v2422, %v2226
          %v2495 = vadd.f32 %v2423, %v2297
          %v2496 = vadd.f32 %v2424, %v2368
          %v2497 = vadd.f32 %v2425, %v2158
          %v2498 = vadd.f32 %v2426, %v2229
          %v2499 = vadd.f32 %v2427, %v2300
          %v2500 = vadd.f32 %v2428, %v2371
          %v2501 = vadd.f32 %v2429, %v2161
          %v2502 = vadd.f32 %v2430, %v2232
          %v2503 = vadd.f32 %v2431, %v2303
          %v2504 = vadd.f32 %v2432, %v2374
          %v2505 = vadd.f32 %v2433, %v2164
          %v2506 = vadd.f32 %v2434, %v2235
          %v2507 = vadd.f32 %v2435, %v2306
          %v2508 = vadd.f32 %v2436, %v2377
          %v2509 = vadd.f32 %v2437, %v2167
          %v2510 = vadd.f32 %v2438, %v2238
          %v2511 = vadd.f32 %v2439, %v2309
          %v2512 = vadd.f32 %v2440, %v2380
          %v2513 = vadd.f32 %v2441, %v2170
          %v2514 = vadd.f32 %v2442, %v2241
          %v2515 = vadd.f32 %v2443, %v2312
          %v2516 = vadd.f32 %v2444, %v2383
          %v2517 = vadd.f32 %v2445, %v2173
          %v2518 = vadd.f32 %v2446, %v2244
          %v2519 = vadd.f32 %v2447, %v2315
          %v2520 = vadd.f32 %v2448, %v2386
          %v2521 = vadd.f32 %v2449, %v2176
          %v2522 = vadd.f32 %v2450, %v2247
          %v2523 = vadd.f32 %v2451, %v2318
          %v2524 = vadd.f32 %v2452, %v2389
          %v2525 = vadd.f32 %v2453, %v2179
          %v2526 = vadd.f32 %v2454, %v2250
          %v2527 = vadd.f32 %v2455, %v2321
          %v2528 = vadd.f32 %v2456, %v2392
          %v2529 = vadd.f32 %v2457, %v2182
          %v2530 = vadd.f32 %v2458, %v2253
          %v2531 = vadd.f32 %v2459, %v2324
          %v2532 = vadd.f32 %v2460, %v2395
          %v2533 = vadd.f32 %v2461, %v2185
          %v2534 = vadd.f32 %v2462, %v2256
          %v2535 = vadd.f32 %v2463, %v2327
          %v2536 = vadd.f32 %v2464, %v2398
          %v2537 = vadd.f32 %v2465, %v2188
          %v2538 = vadd.f32 %v2466, %v2259
          %v2539 = vadd.f32 %v2467, %v2330
          %v2540 = vadd.f32 %v2468, %v2401
          %v2541 = vadd.f32 %v2469, %v2191
          %v2542 = vadd.f32 %v2470, %v2262
          %v2543 = vadd.f32 %v2471, %v2333
          %v2544 = vadd.f32 %v2472, %v2404
          %v2545 = vadd.f32 %v2473, %v2194
          %v2546 = vadd.f32 %v2474, %v2265
          %v2547 = vadd.f32 %v2475, %v2336
          %v2548 = vadd.f32 %v2476, %v2407
          %v2549 = vadd.f32 %v2477, %v2197
          %v2550 = vadd.f32 %v2478, %v2268
          %v2551 = vadd.f32 %v2479, %v2339
          %v2552 = vadd.f32 %v2480, %v2410
          %v2553 = vadd.f32 %v2481, %v2200
          %v2554 = vadd.f32 %v2482, %v2271
          %v2555 = vadd.f32 %v2483, %v2342
          %v2556 = vadd.f32 %v2484, %v2413
          %v2557 = vadd.f32 %v2485, %v2203
          %v2558 = vadd.f32 %v2486, %v2274
          %v2559 = vadd.f32 %v2487, %v2345
          %v2560 = vadd.f32 %v2488, %v2416
          %v2561 = vadd.f32 %v2489, %v2206
          %v2562 = vadd.f32 %v2490, %v2277
          %v2563 = vadd.f32 %v2491, %v2348
          %v2564 = vadd.f32 %v2492, %v2419
          %2565 = vst [vmem:[#allocation13] sm:$0xff] %v2493
          %2566 = vst [vmem:[#allocation13 + $0x8] sm:$0xff] %v2494
          %2567 = vst [vmem:[#allocation13 + $0x10] sm:$0xff] %v2495
          %2568 = vst [vmem:[#allocation13 + $0x18] sm:$0xff] %v2496
          %2569 = vst [vmem:[#allocation13 + $0x20] sm:$0xff] %v2497
          %2570 = vst [vmem:[#allocation13 + $0x28] sm:$0xff] %v2498
          %2571 = vst [vmem:[#allocation13 + $0x30] sm:$0xff] %v2499
          %2572 = vst [vmem:[#allocation13 + $0x38] sm:$0xff] %v2500
          %2573 = vst [vmem:[#allocation13 + $0x40] sm:$0xff] %v2501
          %2574 = vst [vmem:[#allocation13 + $0x48] sm:$0xff] %v2502
          %2575 = vst [vmem:[#allocation13 + $0x50] sm:$0xff] %v2503
          %2576 = vst [vmem:[#allocation13 + $0x58] sm:$0xff] %v2504
          %2577 = vst [vmem:[#allocation13 + $0x60] sm:$0xff] %v2505
          %2578 = vst [vmem:[#allocation13 + $0x68] sm:$0xff] %v2506
          %2579 = vst [vmem:[#allocation13 + $0x70] sm:$0xff] %v2507
          %2580 = vst [vmem:[#allocation13 + $0x78] sm:$0xff] %v2508
          %2581 = vst [vmem:[#allocation13 + $0x80] sm:$0xff] %v2509
          %2582 = vst [vmem:[#allocation13 + $0x88] sm:$0xff] %v2510
          %2583 = vst [vmem:[#allocation13 + $0x90] sm:$0xff] %v2511
          %2584 = vst [vmem:[#allocation13 + $0x98] sm:$0xff] %v2512
          %2585 = vst [vmem:[#allocation13 + $0xa0] sm:$0xff] %v2513
          %2586 = vst [vmem:[#allocation13 + $0xa8] sm:$0xff] %v2514
          %2587 = vst [vmem:[#allocation13 + $0xb0] sm:$0xff] %v2515
          %2588 = vst [vmem:[#allocation13 + $0xb8] sm:$0xff] %v2516
          %2589 = vst [vmem:[#allocation13 + $0xc0] sm:$0xff] %v2517
          %2590 = vst [vmem:[#allocation13 + $0xc8] sm:$0xff] %v2518
          %2591 = vst [vmem:[#allocation13 + $0xd0] sm:$0xff] %v2519
          %2592 = vst [vmem:[#allocation13 + $0xd8] sm:$0xff] %v2520
          %2593 = vst [vmem:[#allocation13 + $0xe0] sm:$0xff] %v2521
          %2594 = vst [vmem:[#allocation13 + $0xe8] sm:$0xff] %v2522
          %2595 = vst [vmem:[#allocation13 + $0xf0] sm:$0xff] %v2523
          %2596 = vst [vmem:[#allocation13 + $0xf8] sm:$0xff] %v2524
          %2597 = vst [vmem:[#allocation13 + $0x100] sm:$0xff] %v2525
          %2598 = vst [vmem:[#allocation13 + $0x108] sm:$0xff] %v2526
          %2599 = vst [vmem:[#allocation13 + $0x110] sm:$0xff] %v2527
          %2600 = vst [vmem:[#allocation13 + $0x118] sm:$0xff] %v2528
          %2601 = vst [vmem:[#allocation13 + $0x120] sm:$0xff] %v2529
          %2602 = vst [vmem:[#allocation13 + $0x128] sm:$0xff] %v2530
          %2603 = vst [vmem:[#allocation13 + $0x130] sm:$0xff] %v2531
          %2604 = vst [vmem:[#allocation13 + $0x138] sm:$0xff] %v2532
          %2605 = vst [vmem:[#allocation13 + $0x140] sm:$0xff] %v2533
          %2606 = vst [vmem:[#allocation13 + $0x148] sm:$0xff] %v2534
          %2607 = vst [vmem:[#allocation13 + $0x150] sm:$0xff] %v2535
          %2608 = vst [vmem:[#allocation13 + $0x158] sm:$0xff] %v2536
          %2609 = vst [vmem:[#allocation13 + $0x160] sm:$0xff] %v2537
          %2610 = vst [vmem:[#allocation13 + $0x168] sm:$0xff] %v2538
          %2611 = vst [vmem:[#allocation13 + $0x170] sm:$0xff] %v2539
          %2612 = vst [vmem:[#allocation13 + $0x178] sm:$0xff] %v2540
          %2613 = vst [vmem:[#allocation13 + $0x180] sm:$0xff] %v2541
          %2614 = vst [vmem:[#allocation13 + $0x188] sm:$0xff] %v2542
          %2615 = vst [vmem:[#allocation13 + $0x190] sm:$0xff] %v2543
          %2616 = vst [vmem:[#allocation13 + $0x198] sm:$0xff] %v2544
          %2617 = vst [vmem:[#allocation13 + $0x1a0] sm:$0xff] %v2545
          %2618 = vst [vmem:[#allocation13 + $0x1a8] sm:$0xff] %v2546
          %2619 = vst [vmem:[#allocation13 + $0x1b0] sm:$0xff] %v2547
          %2620 = vst [vmem:[#allocation13 + $0x1b8] sm:$0xff] %v2548
          %2621 = vst [vmem:[#allocation13 + $0x1c0] sm:$0xff] %v2549
          %2622 = vst [vmem:[#allocation13 + $0x1c8] sm:$0xff] %v2550
          %2623 = vst [vmem:[#allocation13 + $0x1d0] sm:$0xff] %v2551
          %2624 = vst [vmem:[#allocation13 + $0x1d8] sm:$0xff] %v2552
          %2625 = vst [vmem:[#allocation13 + $0x1e0] sm:$0xff] %v2553
          %2626 = vst [vmem:[#allocation13 + $0x1e8] sm:$0xff] %v2554
          %2627 = vst [vmem:[#allocation13 + $0x1f0] sm:$0xff] %v2555
          %2628 = vst [vmem:[#allocation13 + $0x1f8] sm:$0xff] %v2556
          %2629 = vst [vmem:[#allocation13 + $0x200] sm:$0xff] %v2557
          %2630 = vst [vmem:[#allocation13 + $0x208] sm:$0xff] %v2558
          %2631 = vst [vmem:[#allocation13 + $0x210] sm:$0xff] %v2559
          %2632 = vst [vmem:[#allocation13 + $0x218] sm:$0xff] %v2560
          %2633 = vst [vmem:[#allocation13 + $0x220] sm:$0xff] %v2561
          %2634 = vst [vmem:[#allocation13 + $0x228] sm:$0xff] %v2562
          %2635 = vst [vmem:[#allocation13 + $0x230] sm:$0xff] %v2563
          %2636 = vst [vmem:[#allocation13 + $0x238] sm:$0xff] %v2564
        $region72: #{tpu_custom_call.1} parent=39 // pred_fallthru
          _
        // Predicated region
        $region73: #{tpu_custom_call.1} parent=39 // pred_check
          %p2637 = pneg %p188
        $region74: #{tpu_custom_call.1} parent=39 // pred_check_branch
          %2639 = sbr.rel (%p2637) target = $region76
        $region75: #{tpu_custom_call.1} parent=39 // pred_region
          %s2640 = smul.u32 18, %s27
          %s2641 = smul.u32 4, %s28
          %2643 = vsyncadd [#allocation6], 0
          %s2644 = smul.addr %s2640, 4
          %s2645 = sadd.s32 %s2641, %s2644
          %s2646 = smul.addr %s2645, 8
          %s2647 = scalar_lea.hbm %s5, %s2646
          %s2648 = sshll.u32 [#allocation13], 4
          %s2649 = int_to_ptr.vmem [resolvable:$true] %s2648
          %s2650 = sshll.u32 %s2647, 4
          %s2651 = int_to_ptr.hbm [resolvable:$true] %s2650
          %2656 = dma.vmem_to_hbm [thread:$0]  %s2649, 9216, %s2651, [#allocation6], 512, 512, 32
        $region76: #{tpu_custom_call.1} parent=39 // pred_fallthru
          _
        // Predicated region
        $region77: #{tpu_custom_call.1} parent=39 // pred_check
          %p2657 = pneg %p188
        $region78: #{tpu_custom_call.1} parent=39 // pred_check_branch
          %2659 = sbr.rel (%p2657) target = $region80
        $region79: #{tpu_custom_call.1} parent=39 // pred_region
          %2661 = dma.done [#allocation6], 9216
        $region80: #{tpu_custom_call.1} parent=39 // pred_fallthru
          _
      $region40: #{tpu_custom_call.1} parent=5 // pred_fallthru
        _
      %p2662 = scmp.le.s32.totalorder 2, %s17
      // Predicated region
      $region81: #{tpu_custom_call.1} parent=5 // pred_check
        %p2663 = pneg %p2662
      $region82: #{tpu_custom_call.1} parent=5 // pred_check_branch
        %2665 = sbr.rel (%p2663) target = $region84
      $region83: #{tpu_custom_call.1} parent=5 // pred_region
        %s2666 = ssub.s32 %s17, 2
      $region84: #{tpu_custom_call.1} parent=5 // pred_fallthru
        _
    $region6: #{tpu_custom_call.1} parent=1 // loop_footer
      %s21 = sadd.s32 1, %s17
    $region7: #{tpu_custom_call.1} parent=1 // loop_footer_branch
      %16 = sbr.rel target = $region3
    $region8: #{tpu_custom_call.1} parent=1 // loop_exit
      _
    %2667 = vsyncpa [#allocation5], 1
    %s2668 = scalar_lea.sflag [#allocation5], 1
    %2669 = vsyncpa %s2668, 1
    %2670 = vsyncpa [#allocation8], 1
    %s2671 = scalar_lea.sflag [#allocation8], 1
    %2672 = vsyncpa %s2671, 1
    %2673 = vsyncpa [#allocation11], 1
    %2674 = vsyncpa [#allocation6], 1
    %s2675 = scalar_lea.sflag [#allocation6], 1
    %2676 = vsyncpa %s2675, 1

</llo_original>
